<compile_context>
chip_gen: v5e
topology: v5e:2x2
jax: 0.10.0
libtpu: 0.0.40
codegen_flags: <defaults>
</compile_context>

<pallas_src>
import functools

import jax
import jax.numpy as jnp
import numpy as np
from jax.experimental import pallas as pl
from jax.experimental.pallas import tpu as pltpu


def _round_up(x, m):
    return ((x + m - 1) // m) * m


def _num_tensorcores():
    """Best-effort TensorCore count (v7x has 2 per chip); defaults to 1."""
    try:
        info = pltpu.get_tpu_info()
    except Exception:
        return 1
    for attr in ("num_cores", "core_count", "num_tensorcores", "tensorcore_count"):
        v = getattr(info, attr, None)
        try:
            v = int(v)
        except (TypeError, ValueError):
            continue
        if v > 0:
            return v
    return 1


def _herglotz_kernel(x_ref, w_ref, b_ref, o_ref, *, m, m_pad):
    # x_ref: (TN, D)        current tile of input points
    # w_ref: (D, 2*m_pad)   folded weights  [B_re | -B_im]
    # b_ref: (1, 2*m_pad)   folded bias     [omega0*b_re | -omega0*b_im]
    # o_ref: (TN, m)        unpadded output tile
    z = jnp.dot(x_ref[...], w_ref[...], preferred_element_type=jnp.float32)
    z = z + b_ref[...]
    re = z[:, :m_pad]        # Re(z);   128-lane-aligned static split
    im = z[:, m_pad:]        # -Im(z)   (sign folded in the wrapper)
    psi = jnp.exp(im) * jnp.cos(re)
    if m == m_pad:
        o_ref[...] = psi             # fully lane-dense store
    else:
        o_ref[...] = psi[:, :m]      # first m lanes only (masked vst, no pad bytes)


def regular_herglotz_pe(x, a_real, a_imag, w_real, w_imag, b_real, b_imag,
                        omega0=1.0, tile_n=1024):
    """x: (N, D) float. a_real/a_imag: (M, D). w/b: (M,). Returns (N, M) f32."""
    x = jnp.asarray(x, jnp.float32)
    N, D = x.shape
    M = a_real.shape[0]
    omega0 = jnp.float32(omega0)

    ar_t = jnp.asarray(a_real, jnp.float32).T            # (D, M)
    ai_t = jnp.asarray(a_imag, jnp.float32).T            # (D, M)
    wr = jnp.asarray(w_real, jnp.float32)                # (M,)
    wi = jnp.asarray(w_imag, jnp.float32)
    br = jnp.asarray(b_real, jnp.float32)
    bi = jnp.asarray(b_imag, jnp.float32)

    # Fold w, bias, omega0 (and the exp-argument negate) into the atoms:
    #   re = x @ B_re     + omega0*b_re      -> cos(re)
    #   im = x @ (-B_im)  + (-omega0*b_im)   -> exp(im) == exp(-Im(z))
    B_re = omega0 * (ar_t * wr - ai_t * wi)              # (D, M)
    B_im_neg = -omega0 * (ar_t * wi + ai_t * wr)         # (D, M)
    c_re = omega0 * br                                   # (M,)
    c_im_neg = -omega0 * bi

    # Pad the atom dim of the WEIGHTS ONLY (not the output) to a multiple of
    # 128 so the in-kernel re/im split is lane-aligned.  Padded columns are
    # zero and never stored.
    m_pad = _round_up(M, 128)
    if m_pad != M:
        padw = ((0, 0), (0, m_pad - M))
        B_re = jnp.pad(B_re, padw)
        B_im_neg = jnp.pad(B_im_neg, padw)
        c_re = jnp.pad(c_re, (0, m_pad - M))
        c_im_neg = jnp.pad(c_im_neg, (0, m_pad - M))

    W = jnp.concatenate([B_re, B_im_neg], axis=1)                   # (D, 2*m_pad)
    bias = jnp.concatenate([c_re, c_im_neg]).reshape(1, 2 * m_pad)  # (1, 2*m_pad)

    # Row tiling: no padding of x; Pallas masks the ragged last block.  Clamp
    # the tile to the (8-rounded) problem size, and only force multiple grid
    # steps on multi-TensorCore parts (v7x) so both cores get work.
    tile_n_eff = min(_round_up(max(tile_n, 8), 8), _round_up(N, 8))
    n_cores = _num_tensorcores()
    if n_cores > 1:
        tile_n_eff = min(tile_n_eff, max(8, _round_up(pl.cdiv(N, n_cores), 8)))
    grid = (pl.cdiv(N, tile_n_eff),)

    # VMEM budget (f32 bytes): double-buffered x / out tiles, resident W and
    # bias (counted once), z intermediate plus exp/cos temporaries (once),
    # plus headroom.  Capped at 64 MiB so the same config fits v7x.
    vmem_bytes = 4 * (2 * tile_n_eff * D
                      + 2 * tile_n_eff * M
                      + D * 2 * m_pad + 2 * m_pad
                      + 3 * tile_n_eff * 2 * m_pad)
    vmem_limit = int(min(vmem_bytes + (4 << 20), 64 << 20))

    kernel = functools.partial(_herglotz_kernel, m=M, m_pad=m_pad)

    return pl.pallas_call(
        kernel,
        out_shape=jax.ShapeDtypeStruct((N, M), jnp.float32),
        grid_spec=pltpu.PrefetchScalarGridSpec(
            num_scalar_prefetch=0,
            grid=grid,
            in_specs=[
                pl.BlockSpec((tile_n_eff, D), lambda i: (i, 0)),     # x tile
                pl.BlockSpec((D, 2 * m_pad), lambda i: (0, 0)),      # folded W
                pl.BlockSpec((1, 2 * m_pad), lambda i: (0, 0)),      # folded bias
            ],
            out_specs=pl.BlockSpec((tile_n_eff, M), lambda i: (i, 0)),
        ),
        compiler_params=pltpu.CompilerParams(
            dimension_semantics=("parallel",),
            vmem_limit_bytes=vmem_limit),
    )(x, W, bias)


def _make_herglotz_atoms(key, num_atoms, input_dim):
    """Deterministic re-implementation of _generate_herglotz_vector."""
    keys = jax.random.split(key, num_atoms)

    def one(k):
        k1, k2 = jax.random.split(k)
        a_r = jax.random.normal(k1, (input_dim,), dtype=jnp.float32)
        a_r = a_r / (jnp.sqrt(2.0) * jnp.linalg.norm(a_r))
        a_i = jax.random.normal(k2, (input_dim,), dtype=jnp.float32)
        a_i = a_i - 2.0 * jnp.dot(a_i, a_r) * a_r
        a_i = a_i / (jnp.sqrt(2.0) * jnp.linalg.norm(a_i))
        return a_r, a_i

    a_real, a_imag = jax.vmap(one)(keys)
    return a_real, a_imag   # each (num_atoms, input_dim)


def _reference(x, a_real, a_imag, w_real, w_imag, b_real, b_imag, omega0):
    xr = x @ a_real.T
    xi = x @ a_imag.T
    re = omega0 * (w_real * xr - w_imag * xi + b_real)
    im = omega0 * (w_real * xi + w_imag * xr + b_imag)
    return jnp.exp(-im) * jnp.cos(re)


if __name__ == "__main__":
    num_atoms = 64     # M (< 128: exercises the unpadded / masked-store path)
    input_dim = 3      # D (module requires >= 2)
    N = 200            # not a multiple of the small test tile below
    omega0 = 1.5

    root = jax.random.PRNGKey(0)
    k_atoms, k_w, k_b, k_x = jax.random.split(root, 4)

    # Parameters / buffers (mirrors module __init__ shapes; biases are given
    # small nonzero values here so the folded-bias path is actually tested).
    a_real, a_imag = _make_herglotz_atoms(k_atoms, num_atoms, input_dim)
    kw1, kw2 = jax.random.split(k_w)
    kb1, kb2 = jax.random.split(k_b)
    bound = 1.0 / input_dim
    w_real = jax.random.uniform(kw1, (num_atoms,), jnp.float32, -bound, bound)
    w_imag = jax.random.uniform(kw2, (num_atoms,), jnp.float32, -bound, bound)
    b_real = jax.random.uniform(kb1, (num_atoms,), jnp.float32, -0.1, 0.1)
    b_imag = jax.random.uniform(kb2, (num_atoms,), jnp.float32, -0.1, 0.1)

    # Input points x in R^{input_dim}.
    x = jax.random.normal(k_x, (N, input_dim), dtype=jnp.float32)

    ref = _reference(x, a_real, a_imag, w_real, w_imag, b_real, b_imag, omega0)

    # Default (production) tiling: single grid step for this small N.
    out = jax.block_until_ready(
        regular_herglotz_pe(x, a_real, a_imag, w_real, w_imag,
                            b_real, b_imag, omega0=omega0))
    np.testing.assert_allclose(np.asarray(out), np.asarray(ref),
                               rtol=1e-5, atol=1e-5)

    # Small tile: 2 grid steps with a ragged last row-block (rows 128..199),
    # verifying that out-of-range rows are masked on write.
    out2 = jax.block_until_ready(
        regular_herglotz_pe(x, a_real, a_imag, w_real, w_imag,
                            b_real, b_imag, omega0=omega0, tile_n=128))
    np.testing.assert_allclose(np.asarray(out2), np.asarray(ref),
                               rtol=1e-5, atol=1e-5)

    print("KERNEL_OK")
</pallas_src>

<mosaic_0001>
module attributes {stable_mosaic.version = 11 : i64} {
  func.func @_herglotz_kernel(%arg0: i32, %arg1: memref<200x3xf32, #tpu.memory_space<vmem>>, %arg2: memref<3x256xf32, #tpu.memory_space<vmem>>, %arg3: memref<1x256xf32, #tpu.memory_space<vmem>>, %arg4: memref<200x64xf32, #tpu.memory_space<vmem>>) attributes {dimension_semantics = [#tpu.dimension_semantics<parallel>], iteration_bounds = array<i64: 1>, scalar_prefetch = 0 : i64, scratch_operands = 0 : i64, tpu.core_type = #tpu.core_type<tc>, window_params = [{transform_indices = @transform_0, window_bounds = array<i64: 200, 3>}, {pipeline_mode = #tpu.pipeline_mode<synchronous>, transform_indices = @transform_1, window_bounds = array<i64: 3, 256>}, {pipeline_mode = #tpu.pipeline_mode<synchronous>, transform_indices = @transform_2, window_bounds = array<i64: 1, 256>}, {transform_indices = @transform_3, window_bounds = array<i64: 200, 64>}]} {
    %c0 = arith.constant 0 : index
    %c0_0 = arith.constant 0 : index
    %0 = vector.load %arg1[%c0, %c0_0] : memref<200x3xf32, #tpu.memory_space<vmem>>, vector<200x3xf32>
    %c0_1 = arith.constant 0 : index
    %c0_2 = arith.constant 0 : index
    %1 = vector.load %arg2[%c0_1, %c0_2] : memref<3x256xf32, #tpu.memory_space<vmem>>, vector<3x256xf32>
    %cst = arith.constant dense<0.000000e+00> : vector<200x256xf32>
    %2 = tpu.matmul %0, %1, %cst {dimension_numbers = #tpu.dot_dimension_numbers<[1], [0], [0], [1], [0, 0, 1, 1], [], []>} : vector<200x3xf32>, vector<3x256xf32>, vector<200x256xf32> -> vector<200x256xf32>
    %c0_3 = arith.constant 0 : index
    %c0_4 = arith.constant 0 : index
    %3 = vector.load %arg3[%c0_3, %c0_4] : memref<1x256xf32, #tpu.memory_space<vmem>>, vector<1x256xf32>
    %4 = vector.broadcast %3 : vector<1x256xf32> to vector<200x256xf32>
    %5 = arith.addf %2, %4 : vector<200x256xf32>
    %6 = vector.extract_strided_slice %5 {offsets = [0, 0], sizes = [200, 128], strides = [1, 1]} : vector<200x256xf32> to vector<200x128xf32>
    %7 = vector.extract_strided_slice %5 {offsets = [0, 128], sizes = [200, 128], strides = [1, 1]} : vector<200x256xf32> to vector<200x128xf32>
    %8 = math.exp %7 : vector<200x128xf32>
    %9 = math.cos %6 : vector<200x128xf32>
    %10 = arith.mulf %8, %9 : vector<200x128xf32>
    %11 = vector.extract_strided_slice %10 {offsets = [0, 0], sizes = [200, 64], strides = [1, 1]} : vector<200x128xf32> to vector<200x64xf32>
    %c0_5 = arith.constant 0 : index
    %c0_6 = arith.constant 0 : index
    %12 = vector.load %arg4[%c0_5, %c0_6] : memref<200x64xf32, #tpu.memory_space<vmem>>, vector<200x64xf32>
    tpu.vector_store %arg4[%c0_5, %c0_6], %11 {strides = array<i32>} : memref<200x64xf32, #tpu.memory_space<vmem>>, vector<200x64xf32>,
    return
  }
  func.func @transform_0(%arg0: i32) -> (i32, i32) {
    %c0_i32 = arith.constant 0 : i32
    %c0_i32_0 = arith.constant 0 : i32
    return %arg0, %c0_i32 : i32, i32
  }
  func.func @transform_1(%arg0: i32) -> (i32, i32) {
    %c0_i32 = arith.constant 0 : i32
    %c0_i32_0 = arith.constant 0 : i32
    %c0_i32_1 = arith.constant 0 : i32
    return %c0_i32, %c0_i32_0 : i32, i32
  }
  func.func @transform_2(%arg0: i32) -> (i32, i32) {
    %c0_i32 = arith.constant 0 : i32
    %c0_i32_0 = arith.constant 0 : i32
    %c0_i32_1 = arith.constant 0 : i32
    return %c0_i32, %c0_i32_0 : i32, i32
  }
  func.func @transform_3(%arg0: i32) -> (i32, i32) {
    %c0_i32 = arith.constant 0 : i32
    %c0_i32_0 = arith.constant 0 : i32
    return %arg0, %c0_i32 : i32, i32
  }
}

</mosaic_0001>

<llo_original>
// kernel: tpu_custom_call.1
$region0: #{tpu_custom_call.1}
  #allocation0 [shape = 'u32[]', space=smem, size = 0x4, offset = 0x4, fixed_abs, tag = 'smem constant byte address 0x4 - core index']
  #allocation1 [shape = 'u32[72,128]{1,0:T(1,128)}', space=vmem, size = 0x9000, scoped, tag = 'internal scratch']
  %s0 = inlined_call_operand.vmem [shape: f32[200,3], index: 0, kind: input, shape index: {}]
  %s1 = inlined_call_operand.vmem [shape: f32[3,256], index: 1, kind: input, shape index: {}]
  %s2 = inlined_call_operand.vmem [shape: f32[1,256], index: 2, kind: input, shape index: {}]
  %s3 = inlined_call_operand.vmem [shape: f32[200,64], index: 3, kind: output, shape index: {}]
  %s4 = sld [smem:[#allocation0]]
  $region22: #{tpu_custom_call.1} parent=0
    _
  %s6 = ssub.s32 1, %s4
  %s7 = scalar_select 0, %s6, %s4
  // Predicated region
  $region2: #{tpu_custom_call.1} parent=0 // pred_check
    _
  $region3: #{tpu_custom_call.1} parent=0 // pred_check_branch
    %9 = sbr.rel (0) target = $region5
  $region4: #{tpu_custom_call.1} parent=0 // pred_region
    _
  $region5: #{tpu_custom_call.1} parent=0 // pred_fallthru
    _
  // Predicated region
  $region6: #{tpu_custom_call.1} parent=0 // pred_check
    _
  $region7: #{tpu_custom_call.1} parent=0 // pred_check_branch
    %11 = sbr.rel (0) target = $region9
  $region8: #{tpu_custom_call.1} parent=0 // pred_region
    _
  $region9: #{tpu_custom_call.1} parent=0 // pred_fallthru
    _
  // Predicated region
  $region10: #{tpu_custom_call.1} parent=0 // pred_check
    _
  $region11: #{tpu_custom_call.1} parent=0 // pred_check_branch
    %13 = sbr.rel (0) target = $region13
  $region12: #{tpu_custom_call.1} parent=0 // pred_region
    _
  $region13: #{tpu_custom_call.1} parent=0 // pred_fallthru
    _
  %v14 = vld [vmem:[%s0] sm:$0xff]
  %v15 = vld [vmem:[%s0 + $0x8] sm:$0xff]
  %v16 = vld [vmem:[%s0 + $0x10] sm:$0xff]
  %v17 = vld [vmem:[%s0 + $0x18] sm:$0xff]
  %v18 = vld [vmem:[%s0 + $0x20] sm:$0xff]
  %v19 = vld [vmem:[%s0 + $0x28] sm:$0xff]
  %v20 = vld [vmem:[%s0 + $0x30] sm:$0xff]
  %v21 = vld [vmem:[%s0 + $0x38] sm:$0xff]
  %v22 = vld [vmem:[%s0 + $0x40] sm:$0xff]
  %v23 = vld [vmem:[%s0 + $0x48] sm:$0xff]
  %v24 = vld [vmem:[%s0 + $0x50] sm:$0xff]
  %v25 = vld [vmem:[%s0 + $0x58] sm:$0xff]
  %v26 = vld [vmem:[%s0 + $0x60] sm:$0xff]
  %v27 = vld [vmem:[%s0 + $0x68] sm:$0xff]
  %v28 = vld [vmem:[%s0 + $0x70] sm:$0xff]
  %v29 = vld [vmem:[%s0 + $0x78] sm:$0xff]
  %v30 = vld [vmem:[%s0 + $0x80] sm:$0xff]
  %v31 = vld [vmem:[%s0 + $0x88] sm:$0xff]
  %v32 = vld [vmem:[%s0 + $0x90] sm:$0xff]
  %v33 = vld [vmem:[%s0 + $0x98] sm:$0xff]
  %v34 = vld [vmem:[%s0 + $0xa0] sm:$0xff]
  %v35 = vld [vmem:[%s0 + $0xa8] sm:$0xff]
  %v36 = vld [vmem:[%s0 + $0xb0] sm:$0xff]
  %v37 = vld [vmem:[%s0 + $0xb8] sm:$0xff]
  %v38 = vld [vmem:[%s0 + $0xc0] sm:$0xff]
  %v39 = vld [vmem:[%s1] sm:$0x77]
  %v40 = vld [vmem:[%s2] sm:$0x3]
  %v42 = vperm.slane %v40, 0
  %v43 = vperm.slane %v40, 1
  %47 = vst [vmem:[#allocation1] ss:$2 sm:$0xff] %v39
  %v48 = vld.sshfl [vmem:[#allocation1] sm:$0xff pattern:$0x75316420]
  %v49 = vld.sshfl [vmem:[#allocation1 + $0x8] sm:$0xff pattern:$0x75316420]
  %vm50 = vcmask 23552
  %v52 = vsel %vm50, %v14, 0
  %v55 = vsel %vm50, %v15, 0
  %v58 = vsel %vm50, %v16, 0
  %v61 = vsel %vm50, %v17, 0
  %v64 = vsel %vm50, %v18, 0
  %v67 = vsel %vm50, %v19, 0
  %v70 = vsel %vm50, %v20, 0
  %v73 = vsel %vm50, %v21, 0
  %v76 = vsel %vm50, %v22, 0
  %v79 = vsel %vm50, %v23, 0
  %v82 = vsel %vm50, %v24, 0
  %v85 = vsel %vm50, %v25, 0
  %v88 = vsel %vm50, %v26, 0
  %v91 = vsel %vm50, %v27, 0
  %v94 = vsel %vm50, %v28, 0
  %v97 = vsel %vm50, %v29, 0
  %v100 = vsel %vm50, %v30, 0
  %v103 = vsel %vm50, %v31, 0
  %v106 = vsel %vm50, %v32, 0
  %v109 = vsel %vm50, %v33, 0
  %v112 = vsel %vm50, %v34, 0
  %v115 = vsel %vm50, %v35, 0
  %v118 = vsel %vm50, %v36, 0
  %v121 = vsel %vm50, %v37, 0
  %v124 = vsel %vm50, %v38, 0
  %vm126 = vcmask 1042432
  %v127 = vsel %vm126, %v48, 0
  %v129 = vsel %vm126, %v49, 0
  %131 = vmatpush.msra.mxu0 0.0
  %132 = vmatpush.msra.mxu0 0.0
  %133 = vmatpush.msra.mxu0 0.0
  %134 = vmatpush.msra.mxu0 0.0
  %135 = vmatpush.msra.mxu0 0.0
  %136 = vmatpush.msra.mxu0 0.0
  %137 = vmatpush.msra.mxu0 0.0
  %138 = vmatpush.msra.mxu0 0.0
  %139 = vmatpush.msra.mxu0 0.0
  %140 = vmatpush.msra.mxu0 0.0
  %141 = vmatpush.msra.mxu0 0.0
  %142 = vmatpush.msra.mxu0 0.0
  %143 = vmatpush.msra.mxu0 0.0
  %144 = vmatpush.msra.mxu0 0.0
  %145 = vmatpush.msra.mxu0 0.0
  %146 = vmatpush.msra.mxu0 %v127
  %147 = vmatmul.f32.gmra.mxu0 %v52
  %v148 = vpop.f32.mrf.mxu0
  %v149 = vadd.f32 %v42, %v148
  %150 = vmatmul.f32.gmra.mxu0 %v55
  %v151 = vpop.f32.mrf.mxu0
  %v152 = vadd.f32 %v42, %v151
  %153 = vmatmul.f32.gmra.mxu0 %v58
  %v154 = vpop.f32.mrf.mxu0
  %v155 = vadd.f32 %v42, %v154
  %156 = vmatmul.f32.gmra.mxu0 %v61
  %v157 = vpop.f32.mrf.mxu0
  %v158 = vadd.f32 %v42, %v157
  %159 = vmatmul.f32.gmra.mxu0 %v64
  %v160 = vpop.f32.mrf.mxu0
  %v161 = vadd.f32 %v42, %v160
  %162 = vmatmul.f32.gmra.mxu0 %v67
  %v163 = vpop.f32.mrf.mxu0
  %v164 = vadd.f32 %v42, %v163
  %165 = vmatmul.f32.gmra.mxu0 %v70
  %v166 = vpop.f32.mrf.mxu0
  %v167 = vadd.f32 %v42, %v166
  %168 = vmatmul.f32.gmra.mxu0 %v73
  %v169 = vpop.f32.mrf.mxu0
  %v170 = vadd.f32 %v42, %v169
  %171 = vmatmul.f32.gmra.mxu0 %v76
  %v172 = vpop.f32.mrf.mxu0
  %v173 = vadd.f32 %v42, %v172
  %174 = vmatmul.f32.gmra.mxu0 %v79
  %v175 = vpop.f32.mrf.mxu0
  %v176 = vadd.f32 %v42, %v175
  %177 = vmatmul.f32.gmra.mxu0 %v82
  %v178 = vpop.f32.mrf.mxu0
  %v179 = vadd.f32 %v42, %v178
  %180 = vmatmul.f32.gmra.mxu0 %v85
  %v181 = vpop.f32.mrf.mxu0
  %v182 = vadd.f32 %v42, %v181
  %183 = vmatmul.f32.gmra.mxu0 %v88
  %v184 = vpop.f32.mrf.mxu0
  %v185 = vadd.f32 %v42, %v184
  %186 = vmatmul.f32.gmra.mxu0 %v91
  %v187 = vpop.f32.mrf.mxu0
  %v188 = vadd.f32 %v42, %v187
  %189 = vmatmul.f32.gmra.mxu0 %v94
  %v190 = vpop.f32.mrf.mxu0
  %v191 = vadd.f32 %v42, %v190
  %192 = vmatmul.f32.gmra.mxu0 %v97
  %v193 = vpop.f32.mrf.mxu0
  %v194 = vadd.f32 %v42, %v193
  %195 = vmatmul.f32.gmra.mxu0 %v100
  %v196 = vpop.f32.mrf.mxu0
  %v197 = vadd.f32 %v42, %v196
  %198 = vmatmul.f32.gmra.mxu0 %v103
  %v199 = vpop.f32.mrf.mxu0
  %v200 = vadd.f32 %v42, %v199
  %201 = vmatmul.f32.gmra.mxu0 %v106
  %v202 = vpop.f32.mrf.mxu0
  %v203 = vadd.f32 %v42, %v202
  %204 = vmatmul.f32.gmra.mxu0 %v109
  %v205 = vpop.f32.mrf.mxu0
  %v206 = vadd.f32 %v42, %v205
  %207 = vmatmul.f32.gmra.mxu0 %v112
  %v208 = vpop.f32.mrf.mxu0
  %v209 = vadd.f32 %v42, %v208
  %210 = vmatmul.f32.gmra.mxu0 %v115
  %v211 = vpop.f32.mrf.mxu0
  %v212 = vadd.f32 %v42, %v211
  %213 = vmatmul.f32.gmra.mxu0 %v118
  %v214 = vpop.f32.mrf.mxu0
  %v215 = vadd.f32 %v42, %v214
  %216 = vmatmul.f32.gmra.mxu0 %v121
  %v217 = vpop.f32.mrf.mxu0
  %v218 = vadd.f32 %v42, %v217
  %219 = vmatmul.f32.gmra.mxu0 %v124
  %v220 = vpop.f32.mrf.mxu0
  %v221 = vadd.f32 %v42, %v220
  %222 = vdwg.mxu0
  %223 = vmatpush.msra.mxu0 0.0
  %224 = vmatpush.msra.mxu0 0.0
  %225 = vmatpush.msra.mxu0 0.0
  %226 = vmatpush.msra.mxu0 0.0
  %227 = vmatpush.msra.mxu0 0.0
  %228 = vmatpush.msra.mxu0 0.0
  %229 = vmatpush.msra.mxu0 0.0
  %230 = vmatpush.msra.mxu0 0.0
  %231 = vmatpush.msra.mxu0 0.0
  %232 = vmatpush.msra.mxu0 0.0
  %233 = vmatpush.msra.mxu0 0.0
  %234 = vmatpush.msra.mxu0 0.0
  %235 = vmatpush.msra.mxu0 0.0
  %236 = vmatpush.msra.mxu0 0.0
  %237 = vmatpush.msra.mxu0 0.0
  %238 = vmatpush.msra.mxu0 %v129
  %239 = vmatmul.f32.gmra.mxu0 %v52
  %v240 = vpop.f32.mrf.mxu0
  %v241 = vadd.f32 %v43, %v240
  %242 = vmatmul.f32.gmra.mxu0 %v55
  %v243 = vpop.f32.mrf.mxu0
  %v244 = vadd.f32 %v43, %v243
  %245 = vmatmul.f32.gmra.mxu0 %v58
  %v246 = vpop.f32.mrf.mxu0
  %v247 = vadd.f32 %v43, %v246
  %248 = vmatmul.f32.gmra.mxu0 %v61
  %v249 = vpop.f32.mrf.mxu0
  %v250 = vadd.f32 %v43, %v249
  %251 = vmatmul.f32.gmra.mxu0 %v64
  %v252 = vpop.f32.mrf.mxu0
  %v253 = vadd.f32 %v43, %v252
  %254 = vmatmul.f32.gmra.mxu0 %v67
  %v255 = vpop.f32.mrf.mxu0
  %v256 = vadd.f32 %v43, %v255
  %257 = vmatmul.f32.gmra.mxu0 %v70
  %v258 = vpop.f32.mrf.mxu0
  %v259 = vadd.f32 %v43, %v258
  %260 = vmatmul.f32.gmra.mxu0 %v73
  %v261 = vpop.f32.mrf.mxu0
  %v262 = vadd.f32 %v43, %v261
  %263 = vmatmul.f32.gmra.mxu0 %v76
  %v264 = vpop.f32.mrf.mxu0
  %v265 = vadd.f32 %v43, %v264
  %266 = vmatmul.f32.gmra.mxu0 %v79
  %v267 = vpop.f32.mrf.mxu0
  %v268 = vadd.f32 %v43, %v267
  %269 = vmatmul.f32.gmra.mxu0 %v82
  %v270 = vpop.f32.mrf.mxu0
  %v271 = vadd.f32 %v43, %v270
  %272 = vmatmul.f32.gmra.mxu0 %v85
  %v273 = vpop.f32.mrf.mxu0
  %v274 = vadd.f32 %v43, %v273
  %275 = vmatmul.f32.gmra.mxu0 %v88
  %v276 = vpop.f32.mrf.mxu0
  %v277 = vadd.f32 %v43, %v276
  %278 = vmatmul.f32.gmra.mxu0 %v91
  %v279 = vpop.f32.mrf.mxu0
  %v280 = vadd.f32 %v43, %v279
  %281 = vmatmul.f32.gmra.mxu0 %v94
  %v282 = vpop.f32.mrf.mxu0
  %v283 = vadd.f32 %v43, %v282
  %284 = vmatmul.f32.gmra.mxu0 %v97
  %v285 = vpop.f32.mrf.mxu0
  %v286 = vadd.f32 %v43, %v285
  %287 = vmatmul.f32.gmra.mxu0 %v100
  %v288 = vpop.f32.mrf.mxu0
  %v289 = vadd.f32 %v43, %v288
  %290 = vmatmul.f32.gmra.mxu0 %v103
  %v291 = vpop.f32.mrf.mxu0
  %v292 = vadd.f32 %v43, %v291
  %293 = vmatmul.f32.gmra.mxu0 %v106
  %v294 = vpop.f32.mrf.mxu0
  %v295 = vadd.f32 %v43, %v294
  %296 = vmatmul.f32.gmra.mxu0 %v109
  %v297 = vpop.f32.mrf.mxu0
  %v298 = vadd.f32 %v43, %v297
  %299 = vmatmul.f32.gmra.mxu0 %v112
  %v300 = vpop.f32.mrf.mxu0
  %v301 = vadd.f32 %v43, %v300
  %302 = vmatmul.f32.gmra.mxu0 %v115
  %v303 = vpop.f32.mrf.mxu0
  %v304 = vadd.f32 %v43, %v303
  %305 = vmatmul.f32.gmra.mxu0 %v118
  %v306 = vpop.f32.mrf.mxu0
  %v307 = vadd.f32 %v43, %v306
  %308 = vmatmul.f32.gmra.mxu0 %v121
  %v309 = vpop.f32.mrf.mxu0
  %v310 = vadd.f32 %v43, %v309
  %311 = vmatmul.f32.gmra.mxu0 %v124
  %v312 = vpop.f32.mrf.mxu0
  %v313 = vadd.f32 %v43, %v312
  %314 = vdwg.mxu0
  %v315 = vmul.f32 %v241, 1.442695
  %v316 = vpow.pop %v315
  %v317 = vmul.f32 %v244, 1.442695
  %v318 = vpow.pop %v317
  %v319 = vmul.f32 %v247, 1.442695
  %v320 = vpow.pop %v319
  %v321 = vmul.f32 %v250, 1.442695
  %v322 = vpow.pop %v321
  %v323 = vmul.f32 %v253, 1.442695
  %v324 = vpow.pop %v323
  %v325 = vmul.f32 %v256, 1.442695
  %v326 = vpow.pop %v325
  %v327 = vmul.f32 %v259, 1.442695
  %v328 = vpow.pop %v327
  %v329 = vmul.f32 %v262, 1.442695
  %v330 = vpow.pop %v329
  %v331 = vmul.f32 %v265, 1.442695
  %v332 = vpow.pop %v331
  %v333 = vmul.f32 %v268, 1.442695
  %v334 = vpow.pop %v333
  %v335 = vmul.f32 %v271, 1.442695
  %v336 = vpow.pop %v335
  %v337 = vmul.f32 %v274, 1.442695
  %v338 = vpow.pop %v337
  %v339 = vmul.f32 %v277, 1.442695
  %v340 = vpow.pop %v339
  %v341 = vmul.f32 %v280, 1.442695
  %v342 = vpow.pop %v341
  %v343 = vmul.f32 %v283, 1.442695
  %v344 = vpow.pop %v343
  %v345 = vmul.f32 %v286, 1.442695
  %v346 = vpow.pop %v345
  %v347 = vmul.f32 %v289, 1.442695
  %v348 = vpow.pop %v347
  %v349 = vmul.f32 %v292, 1.442695
  %v350 = vpow.pop %v349
  %v351 = vmul.f32 %v295, 1.442695
  %v352 = vpow.pop %v351
  %v353 = vmul.f32 %v298, 1.442695
  %v354 = vpow.pop %v353
  %v355 = vmul.f32 %v301, 1.442695
  %v356 = vpow.pop %v355
  %v357 = vmul.f32 %v304, 1.442695
  %v358 = vpow.pop %v357
  %v359 = vmul.f32 %v307, 1.442695
  %v360 = vpow.pop %v359
  %v361 = vmul.f32 %v310, 1.442695
  %v362 = vpow.pop %v361
  %v363 = vmul.f32 %v313, 1.442695
  %v364 = vpow.pop %v363
  %v365 = vand.u32 2147483647, %v149
  %vm366 = vcmp.le.f32.partialorder %v365, 0.7853982
  %vm367 = vcmp.lt.s32.totalorder %v149, 0
  %v368 = vand.u32 %v149, 2139095040
  %v369 = vshrl.u32 %v368, 23
  %v370 = vsub.s32 %v369, 127
  %v371 = vand.u32 2147483647, %v149
  %v372 = vand.u32 %v371, 8388607
  %v373 = vor.u32 %v372, 8388608
  %v374 = vsub.s32 0, %v373
  %v375 = vadd.s32 %v370, 1
  %vm376 = vcmp.gt.s32.totalorder %v375, 0
  %v377 = vsel %vm376, %v375, 0
  %v378 = vshrl.u32 %v377, 5
  %v379 = vand.u32 %v377, 31
  %v380 = vsub.s32 32, %v379
  %v381 = vshrl.u32 683565275, %v380
  %v382 = vshll.u32 683565275, %v379
  %v383 = vshrl.u32 2475754826, %v380
  %v384 = vor.u32 %v382, %v383
  %v385 = vshll.u32 2475754826, %v379
  %v386 = vshrl.u32 2131351028, %v380
  %v387 = vor.u32 %v385, %v386
  %v388 = vshll.u32 2131351028, %v379
  %v389 = vshrl.u32 2102212464, %v380
  %v390 = vor.u32 %v388, %v389
  %v391 = vshll.u32 2102212464, %v379
  %v392 = vshrl.u32 920167782, %v380
  %v393 = vor.u32 %v391, %v392
  %v394 = vshll.u32 920167782, %v379
  %v395 = vshrl.u32 1326507024, %v380
  %v396 = vor.u32 %v394, %v395
  %vm397 = vcmp.lt.s32.totalorder %v378, 1
  %vm398 = vcmp.lt.s32.totalorder %v378, 2
  %vm399 = vcmp.lt.s32.totalorder %v378, 3
  %vm400 = vcmp.lt.s32.totalorder %v378, 4
  %v401 = vsel %vm397, %v381, %v384
  %v402 = vsel %vm400, %v390, 2102212464
  %v403 = vsel %vm399, %v387, %v402
  %v404 = vsel %vm398, %v401, %v403
  %v405 = vsel %vm397, %v384, %v387
  %v406 = vsel %vm400, %v393, 920167782
  %v407 = vsel %vm399, %v390, %v406
  %v408 = vsel %vm398, %v405, %v407
  %v409 = vsel %vm397, %v387, %v390
  %v410 = vsel %vm400, %v396, 1326507024
  %v411 = vsel %vm399, %v393, %v410
  %v412 = vsel %vm398, %v409, %v411
  %v413 = vshll.u32 %v373, 8
  %v414 = vand.u32 %v413, 65535
  %v415 = vshrl.u32 %v413, 16
  %v416 = vand.u32 %v412, 65535
  %v417 = vshrl.u32 %v412, 16
  %v418 = vmul.u32 %v414, %v416
  %v419 = vmul.u32 %v414, %v417
  %v420 = vmul.u32 %v415, %v416
  %v421 = vmul.u32 %v415, %v417
  %v422 = vshll.u32 %v419, 16
  %v423 = vshrl.u32 %v419, 16
  %v424 = vshll.u32 %v420, 16
  %v425 = vshrl.u32 %v420, 16
  %vm426 = vc.u32 %v418, %v422
  %v427 = vsel %vm426, 1, 0
  %v428 = vadd.s32 %v418, %v422
  %v429 = vadd.s32 %v421, %v427
  %vm430 = vc.u32 %v428, %v424
  %v431 = vsel %vm430, 1, 0
  %v432 = vadd.s32 %v428, %v424
  %v433 = vadd.s32 %v429, %v431
  %v434 = vadd.s32 %v433, %v423
  %v435 = vadd.s32 %v434, %v425
  %v436 = vand.u32 %v413, 65535
  %v437 = vshrl.u32 %v413, 16
  %v438 = vand.u32 %v408, 65535
  %v439 = vshrl.u32 %v408, 16
  %v440 = vmul.u32 %v436, %v438
  %v441 = vmul.u32 %v436, %v439
  %v442 = vmul.u32 %v437, %v438
  %v443 = vmul.u32 %v437, %v439
  %v444 = vshll.u32 %v441, 16
  %v445 = vshrl.u32 %v441, 16
  %v446 = vshll.u32 %v442, 16
  %v447 = vshrl.u32 %v442, 16
  %vm448 = vc.u32 %v440, %v444
  %v449 = vsel %vm448, 1, 0
  %v450 = vadd.s32 %v440, %v444
  %v451 = vadd.s32 %v443, %v449
  %vm452 = vc.u32 %v450, %v446
  %v453 = vsel %vm452, 1, 0
  %v454 = vadd.s32 %v450, %v446
  %v455 = vadd.s32 %v451, %v453
  %v456 = vadd.s32 %v455, %v445
  %v457 = vadd.s32 %v456, %v447
  %v458 = vmul.u32 %v413, %v404
  %v459 = vadd.s32 %v435, %v454
  %vm460 = vc.u32 %v435, %v454
  %v461 = vadd.s32 %v457, 1
  %v462 = vsel %vm460, %v461, %v457
  %v463 = vadd.s32 %v458, %v462
  %v464 = vadd.s32 %v463, 536870912
  %v465 = vshrl.u32 %v464, 30
  %v466 = vshll.u32 %v465, 30
  %v467 = vsub.s32 %v463, %v466
  %vm468 = vcmp.lt.s32.totalorder %v467, 0
  %v469 = vsub.s32 0, %v467
  %v470 = vsel %vm468, %v469, %v467
  %v471 = vclz %v470
  %v472 = vsub.s32 %v471, 2
  %vm473 = vcmp.gt.s32.totalorder 0, %v472
  %v474 = vsel %vm473, 0, %v472
  %v475 = vsub.s32 32, %v474
  %v476 = vshll.u32 %v467, %v474
  %v477 = vshrl.u32 %v459, %v475
  %v478 = vor.u32 %v476, %v477
  %v479 = vsub.s32 4294967266, %v474
  %v480 = vadd.s32 %v479, 127
  %v481 = vshll.u32 %v480, 23
  %v482 = vor.u32 4788187, %v481
  %v483 = vand.u32 2147483647, %v482
  %v485 = vcvt.s32.f32 %v478
  %v486 = vmul.f32 %v485, %v483
  %v487 = vxor.u32 %v486, 2147483648
  %v488 = vsel %vm367, %v487, %v486
  %v489 = vsub.s32 4, %v465
  %v490 = vsel %vm367, %v489, %v465
  %v491 = vsel %vm366, %v149, %v488
  %v492 = vsel %vm366, 0, %v490
  %v493 = vmul.f32 %v491, %v491
  %v494 = vmul.f32 %v493, -0.001358992
  %v495 = vadd.f32 %v494, 0.041655596
  %v496 = vmul.f32 %v493, %v495
  %v497 = vadd.f32 %v496, -0.4999988
  %v498 = vmul.f32 %v493, %v497
  %v499 = vadd.f32 1.0, %v498
  %v500 = vmul.f32 %v491, %v491
  %v501 = vmul.f32 %v500, -0.00019511016
  %v502 = vadd.f32 %v501, 0.008332121
  %v503 = vmul.f32 %v500, %v502
  %v504 = vadd.f32 %v503, -0.16666654
  %v505 = vmul.f32 %v500, %v504
  %v506 = vadd.f32 %v505, 1.0
  %v507 = vmul.f32 %v506, %v491
  %vm508 = vweird.f32 %v149
  %v509 = vand.u32 %v492, 3
  %vm510 = vcmp.lt.s32.totalorder %v509, 2
  %vm511 = vcmp.eq.s32.totalorder %v509, 0
  %v512 = vxor.u32 %v507, 2147483648
  %v513 = vsel %vm511, %v499, %v512
  %vm514 = vcmp.eq.s32.totalorder %v509, 2
  %v515 = vxor.u32 %v499, 2147483648
  %v516 = vsel %vm514, %v515, %v507
  %v517 = vsel %vm510, %v513, %v516
  %v518 = vsel %vm508, nan, %v517
  %v519 = vand.u32 2147483647, %v152
  %vm520 = vcmp.le.f32.partialorder %v519, 0.7853982
  %vm521 = vcmp.lt.s32.totalorder %v152, 0
  %v522 = vand.u32 %v152, 2139095040
  %v523 = vshrl.u32 %v522, 23
  %v524 = vsub.s32 %v523, 127
  %v525 = vand.u32 2147483647, %v152
  %v526 = vand.u32 %v525, 8388607
  %v527 = vor.u32 %v526, 8388608
  %v528 = vsub.s32 0, %v527
  %v529 = vadd.s32 %v524, 1
  %vm530 = vcmp.gt.s32.totalorder %v529, 0
  %v531 = vsel %vm530, %v529, 0
  %v532 = vshrl.u32 %v531, 5
  %v533 = vand.u32 %v531, 31
  %v534 = vsub.s32 32, %v533
  %v535 = vshrl.u32 683565275, %v534
  %v536 = vshll.u32 683565275, %v533
  %v537 = vshrl.u32 2475754826, %v534
  %v538 = vor.u32 %v536, %v537
  %v539 = vshll.u32 2475754826, %v533
  %v540 = vshrl.u32 2131351028, %v534
  %v541 = vor.u32 %v539, %v540
  %v542 = vshll.u32 2131351028, %v533
  %v543 = vshrl.u32 2102212464, %v534
  %v544 = vor.u32 %v542, %v543
  %v545 = vshll.u32 2102212464, %v533
  %v546 = vshrl.u32 920167782, %v534
  %v547 = vor.u32 %v545, %v546
  %v548 = vshll.u32 920167782, %v533
  %v549 = vshrl.u32 1326507024, %v534
  %v550 = vor.u32 %v548, %v549
  %vm551 = vcmp.lt.s32.totalorder %v532, 1
  %vm552 = vcmp.lt.s32.totalorder %v532, 2
  %vm553 = vcmp.lt.s32.totalorder %v532, 3
  %vm554 = vcmp.lt.s32.totalorder %v532, 4
  %v555 = vsel %vm551, %v535, %v538
  %v556 = vsel %vm554, %v544, 2102212464
  %v557 = vsel %vm553, %v541, %v556
  %v558 = vsel %vm552, %v555, %v557
  %v559 = vsel %vm551, %v538, %v541
  %v560 = vsel %vm554, %v547, 920167782
  %v561 = vsel %vm553, %v544, %v560
  %v562 = vsel %vm552, %v559, %v561
  %v563 = vsel %vm551, %v541, %v544
  %v564 = vsel %vm554, %v550, 1326507024
  %v565 = vsel %vm553, %v547, %v564
  %v566 = vsel %vm552, %v563, %v565
  %v567 = vshll.u32 %v527, 8
  %v568 = vand.u32 %v567, 65535
  %v569 = vshrl.u32 %v567, 16
  %v570 = vand.u32 %v566, 65535
  %v571 = vshrl.u32 %v566, 16
  %v572 = vmul.u32 %v568, %v570
  %v573 = vmul.u32 %v568, %v571
  %v574 = vmul.u32 %v569, %v570
  %v575 = vmul.u32 %v569, %v571
  %v576 = vshll.u32 %v573, 16
  %v577 = vshrl.u32 %v573, 16
  %v578 = vshll.u32 %v574, 16
  %v579 = vshrl.u32 %v574, 16
  %vm580 = vc.u32 %v572, %v576
  %v581 = vsel %vm580, 1, 0
  %v582 = vadd.s32 %v572, %v576
  %v583 = vadd.s32 %v575, %v581
  %vm584 = vc.u32 %v582, %v578
  %v585 = vsel %vm584, 1, 0
  %v586 = vadd.s32 %v582, %v578
  %v587 = vadd.s32 %v583, %v585
  %v588 = vadd.s32 %v587, %v577
  %v589 = vadd.s32 %v588, %v579
  %v590 = vand.u32 %v567, 65535
  %v591 = vshrl.u32 %v567, 16
  %v592 = vand.u32 %v562, 65535
  %v593 = vshrl.u32 %v562, 16
  %v594 = vmul.u32 %v590, %v592
  %v595 = vmul.u32 %v590, %v593
  %v596 = vmul.u32 %v591, %v592
  %v597 = vmul.u32 %v591, %v593
  %v598 = vshll.u32 %v595, 16
  %v599 = vshrl.u32 %v595, 16
  %v600 = vshll.u32 %v596, 16
  %v601 = vshrl.u32 %v596, 16
  %vm602 = vc.u32 %v594, %v598
  %v603 = vsel %vm602, 1, 0
  %v604 = vadd.s32 %v594, %v598
  %v605 = vadd.s32 %v597, %v603
  %vm606 = vc.u32 %v604, %v600
  %v607 = vsel %vm606, 1, 0
  %v608 = vadd.s32 %v604, %v600
  %v609 = vadd.s32 %v605, %v607
  %v610 = vadd.s32 %v609, %v599
  %v611 = vadd.s32 %v610, %v601
  %v612 = vmul.u32 %v567, %v558
  %v613 = vadd.s32 %v589, %v608
  %vm614 = vc.u32 %v589, %v608
  %v615 = vadd.s32 %v611, 1
  %v616 = vsel %vm614, %v615, %v611
  %v617 = vadd.s32 %v612, %v616
  %v618 = vadd.s32 %v617, 536870912
  %v619 = vshrl.u32 %v618, 30
  %v620 = vshll.u32 %v619, 30
  %v621 = vsub.s32 %v617, %v620
  %vm622 = vcmp.lt.s32.totalorder %v621, 0
  %v623 = vsub.s32 0, %v621
  %v624 = vsel %vm622, %v623, %v621
  %v625 = vclz %v624
  %v626 = vsub.s32 %v625, 2
  %vm627 = vcmp.gt.s32.totalorder 0, %v626
  %v628 = vsel %vm627, 0, %v626
  %v629 = vsub.s32 32, %v628
  %v630 = vshll.u32 %v621, %v628
  %v631 = vshrl.u32 %v613, %v629
  %v632 = vor.u32 %v630, %v631
  %v633 = vsub.s32 4294967266, %v628
  %v634 = vadd.s32 %v633, 127
  %v635 = vshll.u32 %v634, 23
  %v636 = vor.u32 4788187, %v635
  %v637 = vand.u32 2147483647, %v636
  %v639 = vcvt.s32.f32 %v632
  %v640 = vmul.f32 %v639, %v637
  %v641 = vxor.u32 %v640, 2147483648
  %v642 = vsel %vm521, %v641, %v640
  %v643 = vsub.s32 4, %v619
  %v644 = vsel %vm521, %v643, %v619
  %v645 = vsel %vm520, %v152, %v642
  %v646 = vsel %vm520, 0, %v644
  %v647 = vmul.f32 %v645, %v645
  %v648 = vmul.f32 %v647, -0.001358992
  %v649 = vadd.f32 %v648, 0.041655596
  %v650 = vmul.f32 %v647, %v649
  %v651 = vadd.f32 %v650, -0.4999988
  %v652 = vmul.f32 %v647, %v651
  %v653 = vadd.f32 1.0, %v652
  %v654 = vmul.f32 %v645, %v645
  %v655 = vmul.f32 %v654, -0.00019511016
  %v656 = vadd.f32 %v655, 0.008332121
  %v657 = vmul.f32 %v654, %v656
  %v658 = vadd.f32 %v657, -0.16666654
  %v659 = vmul.f32 %v654, %v658
  %v660 = vadd.f32 %v659, 1.0
  %v661 = vmul.f32 %v660, %v645
  %vm662 = vweird.f32 %v152
  %v663 = vand.u32 %v646, 3
  %vm664 = vcmp.lt.s32.totalorder %v663, 2
  %vm665 = vcmp.eq.s32.totalorder %v663, 0
  %v666 = vxor.u32 %v661, 2147483648
  %v667 = vsel %vm665, %v653, %v666
  %vm668 = vcmp.eq.s32.totalorder %v663, 2
  %v669 = vxor.u32 %v653, 2147483648
  %v670 = vsel %vm668, %v669, %v661
  %v671 = vsel %vm664, %v667, %v670
  %v672 = vsel %vm662, nan, %v671
  %v673 = vand.u32 2147483647, %v155
  %vm674 = vcmp.le.f32.partialorder %v673, 0.7853982
  %vm675 = vcmp.lt.s32.totalorder %v155, 0
  %v676 = vand.u32 %v155, 2139095040
  %v677 = vshrl.u32 %v676, 23
  %v678 = vsub.s32 %v677, 127
  %v679 = vand.u32 2147483647, %v155
  %v680 = vand.u32 %v679, 8388607
  %v681 = vor.u32 %v680, 8388608
  %v682 = vsub.s32 0, %v681
  %v683 = vadd.s32 %v678, 1
  %vm684 = vcmp.gt.s32.totalorder %v683, 0
  %v685 = vsel %vm684, %v683, 0
  %v686 = vshrl.u32 %v685, 5
  %v687 = vand.u32 %v685, 31
  %v688 = vsub.s32 32, %v687
  %v689 = vshrl.u32 683565275, %v688
  %v690 = vshll.u32 683565275, %v687
  %v691 = vshrl.u32 2475754826, %v688
  %v692 = vor.u32 %v690, %v691
  %v693 = vshll.u32 2475754826, %v687
  %v694 = vshrl.u32 2131351028, %v688
  %v695 = vor.u32 %v693, %v694
  %v696 = vshll.u32 2131351028, %v687
  %v697 = vshrl.u32 2102212464, %v688
  %v698 = vor.u32 %v696, %v697
  %v699 = vshll.u32 2102212464, %v687
  %v700 = vshrl.u32 920167782, %v688
  %v701 = vor.u32 %v699, %v700
  %v702 = vshll.u32 920167782, %v687
  %v703 = vshrl.u32 1326507024, %v688
  %v704 = vor.u32 %v702, %v703
  %vm705 = vcmp.lt.s32.totalorder %v686, 1
  %vm706 = vcmp.lt.s32.totalorder %v686, 2
  %vm707 = vcmp.lt.s32.totalorder %v686, 3
  %vm708 = vcmp.lt.s32.totalorder %v686, 4
  %v709 = vsel %vm705, %v689, %v692
  %v710 = vsel %vm708, %v698, 2102212464
  %v711 = vsel %vm707, %v695, %v710
  %v712 = vsel %vm706, %v709, %v711
  %v713 = vsel %vm705, %v692, %v695
  %v714 = vsel %vm708, %v701, 920167782
  %v715 = vsel %vm707, %v698, %v714
  %v716 = vsel %vm706, %v713, %v715
  %v717 = vsel %vm705, %v695, %v698
  %v718 = vsel %vm708, %v704, 1326507024
  %v719 = vsel %vm707, %v701, %v718
  %v720 = vsel %vm706, %v717, %v719
  %v721 = vshll.u32 %v681, 8
  %v722 = vand.u32 %v721, 65535
  %v723 = vshrl.u32 %v721, 16
  %v724 = vand.u32 %v720, 65535
  %v725 = vshrl.u32 %v720, 16
  %v726 = vmul.u32 %v722, %v724
  %v727 = vmul.u32 %v722, %v725
  %v728 = vmul.u32 %v723, %v724
  %v729 = vmul.u32 %v723, %v725
  %v730 = vshll.u32 %v727, 16
  %v731 = vshrl.u32 %v727, 16
  %v732 = vshll.u32 %v728, 16
  %v733 = vshrl.u32 %v728, 16
  %vm734 = vc.u32 %v726, %v730
  %v735 = vsel %vm734, 1, 0
  %v736 = vadd.s32 %v726, %v730
  %v737 = vadd.s32 %v729, %v735
  %vm738 = vc.u32 %v736, %v732
  %v739 = vsel %vm738, 1, 0
  %v740 = vadd.s32 %v736, %v732
  %v741 = vadd.s32 %v737, %v739
  %v742 = vadd.s32 %v741, %v731
  %v743 = vadd.s32 %v742, %v733
  %v744 = vand.u32 %v721, 65535
  %v745 = vshrl.u32 %v721, 16
  %v746 = vand.u32 %v716, 65535
  %v747 = vshrl.u32 %v716, 16
  %v748 = vmul.u32 %v744, %v746
  %v749 = vmul.u32 %v744, %v747
  %v750 = vmul.u32 %v745, %v746
  %v751 = vmul.u32 %v745, %v747
  %v752 = vshll.u32 %v749, 16
  %v753 = vshrl.u32 %v749, 16
  %v754 = vshll.u32 %v750, 16
  %v755 = vshrl.u32 %v750, 16
  %vm756 = vc.u32 %v748, %v752
  %v757 = vsel %vm756, 1, 0
  %v758 = vadd.s32 %v748, %v752
  %v759 = vadd.s32 %v751, %v757
  %vm760 = vc.u32 %v758, %v754
  %v761 = vsel %vm760, 1, 0
  %v762 = vadd.s32 %v758, %v754
  %v763 = vadd.s32 %v759, %v761
  %v764 = vadd.s32 %v763, %v753
  %v765 = vadd.s32 %v764, %v755
  %v766 = vmul.u32 %v721, %v712
  %v767 = vadd.s32 %v743, %v762
  %vm768 = vc.u32 %v743, %v762
  %v769 = vadd.s32 %v765, 1
  %v770 = vsel %vm768, %v769, %v765
  %v771 = vadd.s32 %v766, %v770
  %v772 = vadd.s32 %v771, 536870912
  %v773 = vshrl.u32 %v772, 30
  %v774 = vshll.u32 %v773, 30
  %v775 = vsub.s32 %v771, %v774
  %vm776 = vcmp.lt.s32.totalorder %v775, 0
  %v777 = vsub.s32 0, %v775
  %v778 = vsel %vm776, %v777, %v775
  %v779 = vclz %v778
  %v780 = vsub.s32 %v779, 2
  %vm781 = vcmp.gt.s32.totalorder 0, %v780
  %v782 = vsel %vm781, 0, %v780
  %v783 = vsub.s32 32, %v782
  %v784 = vshll.u32 %v775, %v782
  %v785 = vshrl.u32 %v767, %v783
  %v786 = vor.u32 %v784, %v785
  %v787 = vsub.s32 4294967266, %v782
  %v788 = vadd.s32 %v787, 127
  %v789 = vshll.u32 %v788, 23
  %v790 = vor.u32 4788187, %v789
  %v791 = vand.u32 2147483647, %v790
  %v793 = vcvt.s32.f32 %v786
  %v794 = vmul.f32 %v793, %v791
  %v795 = vxor.u32 %v794, 2147483648
  %v796 = vsel %vm675, %v795, %v794
  %v797 = vsub.s32 4, %v773
  %v798 = vsel %vm675, %v797, %v773
  %v799 = vsel %vm674, %v155, %v796
  %v800 = vsel %vm674, 0, %v798
  %v801 = vmul.f32 %v799, %v799
  %v802 = vmul.f32 %v801, -0.001358992
  %v803 = vadd.f32 %v802, 0.041655596
  %v804 = vmul.f32 %v801, %v803
  %v805 = vadd.f32 %v804, -0.4999988
  %v806 = vmul.f32 %v801, %v805
  %v807 = vadd.f32 1.0, %v806
  %v808 = vmul.f32 %v799, %v799
  %v809 = vmul.f32 %v808, -0.00019511016
  %v810 = vadd.f32 %v809, 0.008332121
  %v811 = vmul.f32 %v808, %v810
  %v812 = vadd.f32 %v811, -0.16666654
  %v813 = vmul.f32 %v808, %v812
  %v814 = vadd.f32 %v813, 1.0
  %v815 = vmul.f32 %v814, %v799
  %vm816 = vweird.f32 %v155
  %v817 = vand.u32 %v800, 3
  %vm818 = vcmp.lt.s32.totalorder %v817, 2
  %vm819 = vcmp.eq.s32.totalorder %v817, 0
  %v820 = vxor.u32 %v815, 2147483648
  %v821 = vsel %vm819, %v807, %v820
  %vm822 = vcmp.eq.s32.totalorder %v817, 2
  %v823 = vxor.u32 %v807, 2147483648
  %v824 = vsel %vm822, %v823, %v815
  %v825 = vsel %vm818, %v821, %v824
  %v826 = vsel %vm816, nan, %v825
  %v827 = vand.u32 2147483647, %v158
  %vm828 = vcmp.le.f32.partialorder %v827, 0.7853982
  %vm829 = vcmp.lt.s32.totalorder %v158, 0
  %v830 = vand.u32 %v158, 2139095040
  %v831 = vshrl.u32 %v830, 23
  %v832 = vsub.s32 %v831, 127
  %v833 = vand.u32 2147483647, %v158
  %v834 = vand.u32 %v833, 8388607
  %v835 = vor.u32 %v834, 8388608
  %v836 = vsub.s32 0, %v835
  %v837 = vadd.s32 %v832, 1
  %vm838 = vcmp.gt.s32.totalorder %v837, 0
  %v839 = vsel %vm838, %v837, 0
  %v840 = vshrl.u32 %v839, 5
  %v841 = vand.u32 %v839, 31
  %v842 = vsub.s32 32, %v841
  %v843 = vshrl.u32 683565275, %v842
  %v844 = vshll.u32 683565275, %v841
  %v845 = vshrl.u32 2475754826, %v842
  %v846 = vor.u32 %v844, %v845
  %v847 = vshll.u32 2475754826, %v841
  %v848 = vshrl.u32 2131351028, %v842
  %v849 = vor.u32 %v847, %v848
  %v850 = vshll.u32 2131351028, %v841
  %v851 = vshrl.u32 2102212464, %v842
  %v852 = vor.u32 %v850, %v851
  %v853 = vshll.u32 2102212464, %v841
  %v854 = vshrl.u32 920167782, %v842
  %v855 = vor.u32 %v853, %v854
  %v856 = vshll.u32 920167782, %v841
  %v857 = vshrl.u32 1326507024, %v842
  %v858 = vor.u32 %v856, %v857
  %vm859 = vcmp.lt.s32.totalorder %v840, 1
  %vm860 = vcmp.lt.s32.totalorder %v840, 2
  %vm861 = vcmp.lt.s32.totalorder %v840, 3
  %vm862 = vcmp.lt.s32.totalorder %v840, 4
  %v863 = vsel %vm859, %v843, %v846
  %v864 = vsel %vm862, %v852, 2102212464
  %v865 = vsel %vm861, %v849, %v864
  %v866 = vsel %vm860, %v863, %v865
  %v867 = vsel %vm859, %v846, %v849
  %v868 = vsel %vm862, %v855, 920167782
  %v869 = vsel %vm861, %v852, %v868
  %v870 = vsel %vm860, %v867, %v869
  %v871 = vsel %vm859, %v849, %v852
  %v872 = vsel %vm862, %v858, 1326507024
  %v873 = vsel %vm861, %v855, %v872
  %v874 = vsel %vm860, %v871, %v873
  %v875 = vshll.u32 %v835, 8
  %v876 = vand.u32 %v875, 65535
  %v877 = vshrl.u32 %v875, 16
  %v878 = vand.u32 %v874, 65535
  %v879 = vshrl.u32 %v874, 16
  %v880 = vmul.u32 %v876, %v878
  %v881 = vmul.u32 %v876, %v879
  %v882 = vmul.u32 %v877, %v878
  %v883 = vmul.u32 %v877, %v879
  %v884 = vshll.u32 %v881, 16
  %v885 = vshrl.u32 %v881, 16
  %v886 = vshll.u32 %v882, 16
  %v887 = vshrl.u32 %v882, 16
  %vm888 = vc.u32 %v880, %v884
  %v889 = vsel %vm888, 1, 0
  %v890 = vadd.s32 %v880, %v884
  %v891 = vadd.s32 %v883, %v889
  %vm892 = vc.u32 %v890, %v886
  %v893 = vsel %vm892, 1, 0
  %v894 = vadd.s32 %v890, %v886
  %v895 = vadd.s32 %v891, %v893
  %v896 = vadd.s32 %v895, %v885
  %v897 = vadd.s32 %v896, %v887
  %v898 = vand.u32 %v875, 65535
  %v899 = vshrl.u32 %v875, 16
  %v900 = vand.u32 %v870, 65535
  %v901 = vshrl.u32 %v870, 16
  %v902 = vmul.u32 %v898, %v900
  %v903 = vmul.u32 %v898, %v901
  %v904 = vmul.u32 %v899, %v900
  %v905 = vmul.u32 %v899, %v901
  %v906 = vshll.u32 %v903, 16
  %v907 = vshrl.u32 %v903, 16
  %v908 = vshll.u32 %v904, 16
  %v909 = vshrl.u32 %v904, 16
  %vm910 = vc.u32 %v902, %v906
  %v911 = vsel %vm910, 1, 0
  %v912 = vadd.s32 %v902, %v906
  %v913 = vadd.s32 %v905, %v911
  %vm914 = vc.u32 %v912, %v908
  %v915 = vsel %vm914, 1, 0
  %v916 = vadd.s32 %v912, %v908
  %v917 = vadd.s32 %v913, %v915
  %v918 = vadd.s32 %v917, %v907
  %v919 = vadd.s32 %v918, %v909
  %v920 = vmul.u32 %v875, %v866
  %v921 = vadd.s32 %v897, %v916
  %vm922 = vc.u32 %v897, %v916
  %v923 = vadd.s32 %v919, 1
  %v924 = vsel %vm922, %v923, %v919
  %v925 = vadd.s32 %v920, %v924
  %v926 = vadd.s32 %v925, 536870912
  %v927 = vshrl.u32 %v926, 30
  %v928 = vshll.u32 %v927, 30
  %v929 = vsub.s32 %v925, %v928
  %vm930 = vcmp.lt.s32.totalorder %v929, 0
  %v931 = vsub.s32 0, %v929
  %v932 = vsel %vm930, %v931, %v929
  %v933 = vclz %v932
  %v934 = vsub.s32 %v933, 2
  %vm935 = vcmp.gt.s32.totalorder 0, %v934
  %v936 = vsel %vm935, 0, %v934
  %v937 = vsub.s32 32, %v936
  %v938 = vshll.u32 %v929, %v936
  %v939 = vshrl.u32 %v921, %v937
  %v940 = vor.u32 %v938, %v939
  %v941 = vsub.s32 4294967266, %v936
  %v942 = vadd.s32 %v941, 127
  %v943 = vshll.u32 %v942, 23
  %v944 = vor.u32 4788187, %v943
  %v945 = vand.u32 2147483647, %v944
  %v947 = vcvt.s32.f32 %v940
  %v948 = vmul.f32 %v947, %v945
  %v949 = vxor.u32 %v948, 2147483648
  %v950 = vsel %vm829, %v949, %v948
  %v951 = vsub.s32 4, %v927
  %v952 = vsel %vm829, %v951, %v927
  %v953 = vsel %vm828, %v158, %v950
  %v954 = vsel %vm828, 0, %v952
  %v955 = vmul.f32 %v953, %v953
  %v956 = vmul.f32 %v955, -0.001358992
  %v957 = vadd.f32 %v956, 0.041655596
  %v958 = vmul.f32 %v955, %v957
  %v959 = vadd.f32 %v958, -0.4999988
  %v960 = vmul.f32 %v955, %v959
  %v961 = vadd.f32 1.0, %v960
  %v962 = vmul.f32 %v953, %v953
  %v963 = vmul.f32 %v962, -0.00019511016
  %v964 = vadd.f32 %v963, 0.008332121
  %v965 = vmul.f32 %v962, %v964
  %v966 = vadd.f32 %v965, -0.16666654
  %v967 = vmul.f32 %v962, %v966
  %v968 = vadd.f32 %v967, 1.0
  %v969 = vmul.f32 %v968, %v953
  %vm970 = vweird.f32 %v158
  %v971 = vand.u32 %v954, 3
  %vm972 = vcmp.lt.s32.totalorder %v971, 2
  %vm973 = vcmp.eq.s32.totalorder %v971, 0
  %v974 = vxor.u32 %v969, 2147483648
  %v975 = vsel %vm973, %v961, %v974
  %vm976 = vcmp.eq.s32.totalorder %v971, 2
  %v977 = vxor.u32 %v961, 2147483648
  %v978 = vsel %vm976, %v977, %v969
  %v979 = vsel %vm972, %v975, %v978
  %v980 = vsel %vm970, nan, %v979
  %v981 = vand.u32 2147483647, %v161
  %vm982 = vcmp.le.f32.partialorder %v981, 0.7853982
  %vm983 = vcmp.lt.s32.totalorder %v161, 0
  %v984 = vand.u32 %v161, 2139095040
  %v985 = vshrl.u32 %v984, 23
  %v986 = vsub.s32 %v985, 127
  %v987 = vand.u32 2147483647, %v161
  %v988 = vand.u32 %v987, 8388607
  %v989 = vor.u32 %v988, 8388608
  %v990 = vsub.s32 0, %v989
  %v991 = vadd.s32 %v986, 1
  %vm992 = vcmp.gt.s32.totalorder %v991, 0
  %v993 = vsel %vm992, %v991, 0
  %v994 = vshrl.u32 %v993, 5
  %v995 = vand.u32 %v993, 31
  %v996 = vsub.s32 32, %v995
  %v997 = vshrl.u32 683565275, %v996
  %v998 = vshll.u32 683565275, %v995
  %v999 = vshrl.u32 2475754826, %v996
  %v1000 = vor.u32 %v998, %v999
  %v1001 = vshll.u32 2475754826, %v995
  %v1002 = vshrl.u32 2131351028, %v996
  %v1003 = vor.u32 %v1001, %v1002
  %v1004 = vshll.u32 2131351028, %v995
  %v1005 = vshrl.u32 2102212464, %v996
  %v1006 = vor.u32 %v1004, %v1005
  %v1007 = vshll.u32 2102212464, %v995
  %v1008 = vshrl.u32 920167782, %v996
  %v1009 = vor.u32 %v1007, %v1008
  %v1010 = vshll.u32 920167782, %v995
  %v1011 = vshrl.u32 1326507024, %v996
  %v1012 = vor.u32 %v1010, %v1011
  %vm1013 = vcmp.lt.s32.totalorder %v994, 1
  %vm1014 = vcmp.lt.s32.totalorder %v994, 2
  %vm1015 = vcmp.lt.s32.totalorder %v994, 3
  %vm1016 = vcmp.lt.s32.totalorder %v994, 4
  %v1017 = vsel %vm1013, %v997, %v1000
  %v1018 = vsel %vm1016, %v1006, 2102212464
  %v1019 = vsel %vm1015, %v1003, %v1018
  %v1020 = vsel %vm1014, %v1017, %v1019
  %v1021 = vsel %vm1013, %v1000, %v1003
  %v1022 = vsel %vm1016, %v1009, 920167782
  %v1023 = vsel %vm1015, %v1006, %v1022
  %v1024 = vsel %vm1014, %v1021, %v1023
  %v1025 = vsel %vm1013, %v1003, %v1006
  %v1026 = vsel %vm1016, %v1012, 1326507024
  %v1027 = vsel %vm1015, %v1009, %v1026
  %v1028 = vsel %vm1014, %v1025, %v1027
  %v1029 = vshll.u32 %v989, 8
  %v1030 = vand.u32 %v1029, 65535
  %v1031 = vshrl.u32 %v1029, 16
  %v1032 = vand.u32 %v1028, 65535
  %v1033 = vshrl.u32 %v1028, 16
  %v1034 = vmul.u32 %v1030, %v1032
  %v1035 = vmul.u32 %v1030, %v1033
  %v1036 = vmul.u32 %v1031, %v1032
  %v1037 = vmul.u32 %v1031, %v1033
  %v1038 = vshll.u32 %v1035, 16
  %v1039 = vshrl.u32 %v1035, 16
  %v1040 = vshll.u32 %v1036, 16
  %v1041 = vshrl.u32 %v1036, 16
  %vm1042 = vc.u32 %v1034, %v1038
  %v1043 = vsel %vm1042, 1, 0
  %v1044 = vadd.s32 %v1034, %v1038
  %v1045 = vadd.s32 %v1037, %v1043
  %vm1046 = vc.u32 %v1044, %v1040
  %v1047 = vsel %vm1046, 1, 0
  %v1048 = vadd.s32 %v1044, %v1040
  %v1049 = vadd.s32 %v1045, %v1047
  %v1050 = vadd.s32 %v1049, %v1039
  %v1051 = vadd.s32 %v1050, %v1041
  %v1052 = vand.u32 %v1029, 65535
  %v1053 = vshrl.u32 %v1029, 16
  %v1054 = vand.u32 %v1024, 65535
  %v1055 = vshrl.u32 %v1024, 16
  %v1056 = vmul.u32 %v1052, %v1054
  %v1057 = vmul.u32 %v1052, %v1055
  %v1058 = vmul.u32 %v1053, %v1054
  %v1059 = vmul.u32 %v1053, %v1055
  %v1060 = vshll.u32 %v1057, 16
  %v1061 = vshrl.u32 %v1057, 16
  %v1062 = vshll.u32 %v1058, 16
  %v1063 = vshrl.u32 %v1058, 16
  %vm1064 = vc.u32 %v1056, %v1060
  %v1065 = vsel %vm1064, 1, 0
  %v1066 = vadd.s32 %v1056, %v1060
  %v1067 = vadd.s32 %v1059, %v1065
  %vm1068 = vc.u32 %v1066, %v1062
  %v1069 = vsel %vm1068, 1, 0
  %v1070 = vadd.s32 %v1066, %v1062
  %v1071 = vadd.s32 %v1067, %v1069
  %v1072 = vadd.s32 %v1071, %v1061
  %v1073 = vadd.s32 %v1072, %v1063
  %v1074 = vmul.u32 %v1029, %v1020
  %v1075 = vadd.s32 %v1051, %v1070
  %vm1076 = vc.u32 %v1051, %v1070
  %v1077 = vadd.s32 %v1073, 1
  %v1078 = vsel %vm1076, %v1077, %v1073
  %v1079 = vadd.s32 %v1074, %v1078
  %v1080 = vadd.s32 %v1079, 536870912
  %v1081 = vshrl.u32 %v1080, 30
  %v1082 = vshll.u32 %v1081, 30
  %v1083 = vsub.s32 %v1079, %v1082
  %vm1084 = vcmp.lt.s32.totalorder %v1083, 0
  %v1085 = vsub.s32 0, %v1083
  %v1086 = vsel %vm1084, %v1085, %v1083
  %v1087 = vclz %v1086
  %v1088 = vsub.s32 %v1087, 2
  %vm1089 = vcmp.gt.s32.totalorder 0, %v1088
  %v1090 = vsel %vm1089, 0, %v1088
  %v1091 = vsub.s32 32, %v1090
  %v1092 = vshll.u32 %v1083, %v1090
  %v1093 = vshrl.u32 %v1075, %v1091
  %v1094 = vor.u32 %v1092, %v1093
  %v1095 = vsub.s32 4294967266, %v1090
  %v1096 = vadd.s32 %v1095, 127
  %v1097 = vshll.u32 %v1096, 23
  %v1098 = vor.u32 4788187, %v1097
  %v1099 = vand.u32 2147483647, %v1098
  %v1101 = vcvt.s32.f32 %v1094
  %v1102 = vmul.f32 %v1101, %v1099
  %v1103 = vxor.u32 %v1102, 2147483648
  %v1104 = vsel %vm983, %v1103, %v1102
  %v1105 = vsub.s32 4, %v1081
  %v1106 = vsel %vm983, %v1105, %v1081
  %v1107 = vsel %vm982, %v161, %v1104
  %v1108 = vsel %vm982, 0, %v1106
  %v1109 = vmul.f32 %v1107, %v1107
  %v1110 = vmul.f32 %v1109, -0.001358992
  %v1111 = vadd.f32 %v1110, 0.041655596
  %v1112 = vmul.f32 %v1109, %v1111
  %v1113 = vadd.f32 %v1112, -0.4999988
  %v1114 = vmul.f32 %v1109, %v1113
  %v1115 = vadd.f32 1.0, %v1114
  %v1116 = vmul.f32 %v1107, %v1107
  %v1117 = vmul.f32 %v1116, -0.00019511016
  %v1118 = vadd.f32 %v1117, 0.008332121
  %v1119 = vmul.f32 %v1116, %v1118
  %v1120 = vadd.f32 %v1119, -0.16666654
  %v1121 = vmul.f32 %v1116, %v1120
  %v1122 = vadd.f32 %v1121, 1.0
  %v1123 = vmul.f32 %v1122, %v1107
  %vm1124 = vweird.f32 %v161
  %v1125 = vand.u32 %v1108, 3
  %vm1126 = vcmp.lt.s32.totalorder %v1125, 2
  %vm1127 = vcmp.eq.s32.totalorder %v1125, 0
  %v1128 = vxor.u32 %v1123, 2147483648
  %v1129 = vsel %vm1127, %v1115, %v1128
  %vm1130 = vcmp.eq.s32.totalorder %v1125, 2
  %v1131 = vxor.u32 %v1115, 2147483648
  %v1132 = vsel %vm1130, %v1131, %v1123
  %v1133 = vsel %vm1126, %v1129, %v1132
  %v1134 = vsel %vm1124, nan, %v1133
  %v1135 = vand.u32 2147483647, %v164
  %vm1136 = vcmp.le.f32.partialorder %v1135, 0.7853982
  %vm1137 = vcmp.lt.s32.totalorder %v164, 0
  %v1138 = vand.u32 %v164, 2139095040
  %v1139 = vshrl.u32 %v1138, 23
  %v1140 = vsub.s32 %v1139, 127
  %v1141 = vand.u32 2147483647, %v164
  %v1142 = vand.u32 %v1141, 8388607
  %v1143 = vor.u32 %v1142, 8388608
  %v1144 = vsub.s32 0, %v1143
  %v1145 = vadd.s32 %v1140, 1
  %vm1146 = vcmp.gt.s32.totalorder %v1145, 0
  %v1147 = vsel %vm1146, %v1145, 0
  %v1148 = vshrl.u32 %v1147, 5
  %v1149 = vand.u32 %v1147, 31
  %v1150 = vsub.s32 32, %v1149
  %v1151 = vshrl.u32 683565275, %v1150
  %v1152 = vshll.u32 683565275, %v1149
  %v1153 = vshrl.u32 2475754826, %v1150
  %v1154 = vor.u32 %v1152, %v1153
  %v1155 = vshll.u32 2475754826, %v1149
  %v1156 = vshrl.u32 2131351028, %v1150
  %v1157 = vor.u32 %v1155, %v1156
  %v1158 = vshll.u32 2131351028, %v1149
  %v1159 = vshrl.u32 2102212464, %v1150
  %v1160 = vor.u32 %v1158, %v1159
  %v1161 = vshll.u32 2102212464, %v1149
  %v1162 = vshrl.u32 920167782, %v1150
  %v1163 = vor.u32 %v1161, %v1162
  %v1164 = vshll.u32 920167782, %v1149
  %v1165 = vshrl.u32 1326507024, %v1150
  %v1166 = vor.u32 %v1164, %v1165
  %vm1167 = vcmp.lt.s32.totalorder %v1148, 1
  %vm1168 = vcmp.lt.s32.totalorder %v1148, 2
  %vm1169 = vcmp.lt.s32.totalorder %v1148, 3
  %vm1170 = vcmp.lt.s32.totalorder %v1148, 4
  %v1171 = vsel %vm1167, %v1151, %v1154
  %v1172 = vsel %vm1170, %v1160, 2102212464
  %v1173 = vsel %vm1169, %v1157, %v1172
  %v1174 = vsel %vm1168, %v1171, %v1173
  %v1175 = vsel %vm1167, %v1154, %v1157
  %v1176 = vsel %vm1170, %v1163, 920167782
  %v1177 = vsel %vm1169, %v1160, %v1176
  %v1178 = vsel %vm1168, %v1175, %v1177
  %v1179 = vsel %vm1167, %v1157, %v1160
  %v1180 = vsel %vm1170, %v1166, 1326507024
  %v1181 = vsel %vm1169, %v1163, %v1180
  %v1182 = vsel %vm1168, %v1179, %v1181
  %v1183 = vshll.u32 %v1143, 8
  %v1184 = vand.u32 %v1183, 65535
  %v1185 = vshrl.u32 %v1183, 16
  %v1186 = vand.u32 %v1182, 65535
  %v1187 = vshrl.u32 %v1182, 16
  %v1188 = vmul.u32 %v1184, %v1186
  %v1189 = vmul.u32 %v1184, %v1187
  %v1190 = vmul.u32 %v1185, %v1186
  %v1191 = vmul.u32 %v1185, %v1187
  %v1192 = vshll.u32 %v1189, 16
  %v1193 = vshrl.u32 %v1189, 16
  %v1194 = vshll.u32 %v1190, 16
  %v1195 = vshrl.u32 %v1190, 16
  %vm1196 = vc.u32 %v1188, %v1192
  %v1197 = vsel %vm1196, 1, 0
  %v1198 = vadd.s32 %v1188, %v1192
  %v1199 = vadd.s32 %v1191, %v1197
  %vm1200 = vc.u32 %v1198, %v1194
  %v1201 = vsel %vm1200, 1, 0
  %v1202 = vadd.s32 %v1198, %v1194
  %v1203 = vadd.s32 %v1199, %v1201
  %v1204 = vadd.s32 %v1203, %v1193
  %v1205 = vadd.s32 %v1204, %v1195
  %v1206 = vand.u32 %v1183, 65535
  %v1207 = vshrl.u32 %v1183, 16
  %v1208 = vand.u32 %v1178, 65535
  %v1209 = vshrl.u32 %v1178, 16
  %v1210 = vmul.u32 %v1206, %v1208
  %v1211 = vmul.u32 %v1206, %v1209
  %v1212 = vmul.u32 %v1207, %v1208
  %v1213 = vmul.u32 %v1207, %v1209
  %v1214 = vshll.u32 %v1211, 16
  %v1215 = vshrl.u32 %v1211, 16
  %v1216 = vshll.u32 %v1212, 16
  %v1217 = vshrl.u32 %v1212, 16
  %vm1218 = vc.u32 %v1210, %v1214
  %v1219 = vsel %vm1218, 1, 0
  %v1220 = vadd.s32 %v1210, %v1214
  %v1221 = vadd.s32 %v1213, %v1219
  %vm1222 = vc.u32 %v1220, %v1216
  %v1223 = vsel %vm1222, 1, 0
  %v1224 = vadd.s32 %v1220, %v1216
  %v1225 = vadd.s32 %v1221, %v1223
  %v1226 = vadd.s32 %v1225, %v1215
  %v1227 = vadd.s32 %v1226, %v1217
  %v1228 = vmul.u32 %v1183, %v1174
  %v1229 = vadd.s32 %v1205, %v1224
  %vm1230 = vc.u32 %v1205, %v1224
  %v1231 = vadd.s32 %v1227, 1
  %v1232 = vsel %vm1230, %v1231, %v1227
  %v1233 = vadd.s32 %v1228, %v1232
  %v1234 = vadd.s32 %v1233, 536870912
  %v1235 = vshrl.u32 %v1234, 30
  %v1236 = vshll.u32 %v1235, 30
  %v1237 = vsub.s32 %v1233, %v1236
  %vm1238 = vcmp.lt.s32.totalorder %v1237, 0
  %v1239 = vsub.s32 0, %v1237
  %v1240 = vsel %vm1238, %v1239, %v1237
  %v1241 = vclz %v1240
  %v1242 = vsub.s32 %v1241, 2
  %vm1243 = vcmp.gt.s32.totalorder 0, %v1242
  %v1244 = vsel %vm1243, 0, %v1242
  %v1245 = vsub.s32 32, %v1244
  %v1246 = vshll.u32 %v1237, %v1244
  %v1247 = vshrl.u32 %v1229, %v1245
  %v1248 = vor.u32 %v1246, %v1247
  %v1249 = vsub.s32 4294967266, %v1244
  %v1250 = vadd.s32 %v1249, 127
  %v1251 = vshll.u32 %v1250, 23
  %v1252 = vor.u32 4788187, %v1251
  %v1253 = vand.u32 2147483647, %v1252
  %v1255 = vcvt.s32.f32 %v1248
  %v1256 = vmul.f32 %v1255, %v1253
  %v1257 = vxor.u32 %v1256, 2147483648
  %v1258 = vsel %vm1137, %v1257, %v1256
  %v1259 = vsub.s32 4, %v1235
  %v1260 = vsel %vm1137, %v1259, %v1235
  %v1261 = vsel %vm1136, %v164, %v1258
  %v1262 = vsel %vm1136, 0, %v1260
  %v1263 = vmul.f32 %v1261, %v1261
  %v1264 = vmul.f32 %v1263, -0.001358992
  %v1265 = vadd.f32 %v1264, 0.041655596
  %v1266 = vmul.f32 %v1263, %v1265
  %v1267 = vadd.f32 %v1266, -0.4999988
  %v1268 = vmul.f32 %v1263, %v1267
  %v1269 = vadd.f32 1.0, %v1268
  %v1270 = vmul.f32 %v1261, %v1261
  %v1271 = vmul.f32 %v1270, -0.00019511016
  %v1272 = vadd.f32 %v1271, 0.008332121
  %v1273 = vmul.f32 %v1270, %v1272
  %v1274 = vadd.f32 %v1273, -0.16666654
  %v1275 = vmul.f32 %v1270, %v1274
  %v1276 = vadd.f32 %v1275, 1.0
  %v1277 = vmul.f32 %v1276, %v1261
  %vm1278 = vweird.f32 %v164
  %v1279 = vand.u32 %v1262, 3
  %vm1280 = vcmp.lt.s32.totalorder %v1279, 2
  %vm1281 = vcmp.eq.s32.totalorder %v1279, 0
  %v1282 = vxor.u32 %v1277, 2147483648
  %v1283 = vsel %vm1281, %v1269, %v1282
  %vm1284 = vcmp.eq.s32.totalorder %v1279, 2
  %v1285 = vxor.u32 %v1269, 2147483648
  %v1286 = vsel %vm1284, %v1285, %v1277
  %v1287 = vsel %vm1280, %v1283, %v1286
  %v1288 = vsel %vm1278, nan, %v1287
  %v1289 = vand.u32 2147483647, %v167
  %vm1290 = vcmp.le.f32.partialorder %v1289, 0.7853982
  %vm1291 = vcmp.lt.s32.totalorder %v167, 0
  %v1292 = vand.u32 %v167, 2139095040
  %v1293 = vshrl.u32 %v1292, 23
  %v1294 = vsub.s32 %v1293, 127
  %v1295 = vand.u32 2147483647, %v167
  %v1296 = vand.u32 %v1295, 8388607
  %v1297 = vor.u32 %v1296, 8388608
  %v1298 = vsub.s32 0, %v1297
  %v1299 = vadd.s32 %v1294, 1
  %vm1300 = vcmp.gt.s32.totalorder %v1299, 0
  %v1301 = vsel %vm1300, %v1299, 0
  %v1302 = vshrl.u32 %v1301, 5
  %v1303 = vand.u32 %v1301, 31
  %v1304 = vsub.s32 32, %v1303
  %v1305 = vshrl.u32 683565275, %v1304
  %v1306 = vshll.u32 683565275, %v1303
  %v1307 = vshrl.u32 2475754826, %v1304
  %v1308 = vor.u32 %v1306, %v1307
  %v1309 = vshll.u32 2475754826, %v1303
  %v1310 = vshrl.u32 2131351028, %v1304
  %v1311 = vor.u32 %v1309, %v1310
  %v1312 = vshll.u32 2131351028, %v1303
  %v1313 = vshrl.u32 2102212464, %v1304
  %v1314 = vor.u32 %v1312, %v1313
  %v1315 = vshll.u32 2102212464, %v1303
  %v1316 = vshrl.u32 920167782, %v1304
  %v1317 = vor.u32 %v1315, %v1316
  %v1318 = vshll.u32 920167782, %v1303
  %v1319 = vshrl.u32 1326507024, %v1304
  %v1320 = vor.u32 %v1318, %v1319
  %vm1321 = vcmp.lt.s32.totalorder %v1302, 1
  %vm1322 = vcmp.lt.s32.totalorder %v1302, 2
  %vm1323 = vcmp.lt.s32.totalorder %v1302, 3
  %vm1324 = vcmp.lt.s32.totalorder %v1302, 4
  %v1325 = vsel %vm1321, %v1305, %v1308
  %v1326 = vsel %vm1324, %v1314, 2102212464
  %v1327 = vsel %vm1323, %v1311, %v1326
  %v1328 = vsel %vm1322, %v1325, %v1327
  %v1329 = vsel %vm1321, %v1308, %v1311
  %v1330 = vsel %vm1324, %v1317, 920167782
  %v1331 = vsel %vm1323, %v1314, %v1330
  %v1332 = vsel %vm1322, %v1329, %v1331
  %v1333 = vsel %vm1321, %v1311, %v1314
  %v1334 = vsel %vm1324, %v1320, 1326507024
  %v1335 = vsel %vm1323, %v1317, %v1334
  %v1336 = vsel %vm1322, %v1333, %v1335
  %v1337 = vshll.u32 %v1297, 8
  %v1338 = vand.u32 %v1337, 65535
  %v1339 = vshrl.u32 %v1337, 16
  %v1340 = vand.u32 %v1336, 65535
  %v1341 = vshrl.u32 %v1336, 16
  %v1342 = vmul.u32 %v1338, %v1340
  %v1343 = vmul.u32 %v1338, %v1341
  %v1344 = vmul.u32 %v1339, %v1340
  %v1345 = vmul.u32 %v1339, %v1341
  %v1346 = vshll.u32 %v1343, 16
  %v1347 = vshrl.u32 %v1343, 16
  %v1348 = vshll.u32 %v1344, 16
  %v1349 = vshrl.u32 %v1344, 16
  %vm1350 = vc.u32 %v1342, %v1346
  %v1351 = vsel %vm1350, 1, 0
  %v1352 = vadd.s32 %v1342, %v1346
  %v1353 = vadd.s32 %v1345, %v1351
  %vm1354 = vc.u32 %v1352, %v1348
  %v1355 = vsel %vm1354, 1, 0
  %v1356 = vadd.s32 %v1352, %v1348
  %v1357 = vadd.s32 %v1353, %v1355
  %v1358 = vadd.s32 %v1357, %v1347
  %v1359 = vadd.s32 %v1358, %v1349
  %v1360 = vand.u32 %v1337, 65535
  %v1361 = vshrl.u32 %v1337, 16
  %v1362 = vand.u32 %v1332, 65535
  %v1363 = vshrl.u32 %v1332, 16
  %v1364 = vmul.u32 %v1360, %v1362
  %v1365 = vmul.u32 %v1360, %v1363
  %v1366 = vmul.u32 %v1361, %v1362
  %v1367 = vmul.u32 %v1361, %v1363
  %v1368 = vshll.u32 %v1365, 16
  %v1369 = vshrl.u32 %v1365, 16
  %v1370 = vshll.u32 %v1366, 16
  %v1371 = vshrl.u32 %v1366, 16
  %vm1372 = vc.u32 %v1364, %v1368
  %v1373 = vsel %vm1372, 1, 0
  %v1374 = vadd.s32 %v1364, %v1368
  %v1375 = vadd.s32 %v1367, %v1373
  %vm1376 = vc.u32 %v1374, %v1370
  %v1377 = vsel %vm1376, 1, 0
  %v1378 = vadd.s32 %v1374, %v1370
  %v1379 = vadd.s32 %v1375, %v1377
  %v1380 = vadd.s32 %v1379, %v1369
  %v1381 = vadd.s32 %v1380, %v1371
  %v1382 = vmul.u32 %v1337, %v1328
  %v1383 = vadd.s32 %v1359, %v1378
  %vm1384 = vc.u32 %v1359, %v1378
  %v1385 = vadd.s32 %v1381, 1
  %v1386 = vsel %vm1384, %v1385, %v1381
  %v1387 = vadd.s32 %v1382, %v1386
  %v1388 = vadd.s32 %v1387, 536870912
  %v1389 = vshrl.u32 %v1388, 30
  %v1390 = vshll.u32 %v1389, 30
  %v1391 = vsub.s32 %v1387, %v1390
  %vm1392 = vcmp.lt.s32.totalorder %v1391, 0
  %v1393 = vsub.s32 0, %v1391
  %v1394 = vsel %vm1392, %v1393, %v1391
  %v1395 = vclz %v1394
  %v1396 = vsub.s32 %v1395, 2
  %vm1397 = vcmp.gt.s32.totalorder 0, %v1396
  %v1398 = vsel %vm1397, 0, %v1396
  %v1399 = vsub.s32 32, %v1398
  %v1400 = vshll.u32 %v1391, %v1398
  %v1401 = vshrl.u32 %v1383, %v1399
  %v1402 = vor.u32 %v1400, %v1401
  %v1403 = vsub.s32 4294967266, %v1398
  %v1404 = vadd.s32 %v1403, 127
  %v1405 = vshll.u32 %v1404, 23
  %v1406 = vor.u32 4788187, %v1405
  %v1407 = vand.u32 2147483647, %v1406
  %v1409 = vcvt.s32.f32 %v1402
  %v1410 = vmul.f32 %v1409, %v1407
  %v1411 = vxor.u32 %v1410, 2147483648
  %v1412 = vsel %vm1291, %v1411, %v1410
  %v1413 = vsub.s32 4, %v1389
  %v1414 = vsel %vm1291, %v1413, %v1389
  %v1415 = vsel %vm1290, %v167, %v1412
  %v1416 = vsel %vm1290, 0, %v1414
  %v1417 = vmul.f32 %v1415, %v1415
  %v1418 = vmul.f32 %v1417, -0.001358992
  %v1419 = vadd.f32 %v1418, 0.041655596
  %v1420 = vmul.f32 %v1417, %v1419
  %v1421 = vadd.f32 %v1420, -0.4999988
  %v1422 = vmul.f32 %v1417, %v1421
  %v1423 = vadd.f32 1.0, %v1422
  %v1424 = vmul.f32 %v1415, %v1415
  %v1425 = vmul.f32 %v1424, -0.00019511016
  %v1426 = vadd.f32 %v1425, 0.008332121
  %v1427 = vmul.f32 %v1424, %v1426
  %v1428 = vadd.f32 %v1427, -0.16666654
  %v1429 = vmul.f32 %v1424, %v1428
  %v1430 = vadd.f32 %v1429, 1.0
  %v1431 = vmul.f32 %v1430, %v1415
  %vm1432 = vweird.f32 %v167
  %v1433 = vand.u32 %v1416, 3
  %vm1434 = vcmp.lt.s32.totalorder %v1433, 2
  %vm1435 = vcmp.eq.s32.totalorder %v1433, 0
  %v1436 = vxor.u32 %v1431, 2147483648
  %v1437 = vsel %vm1435, %v1423, %v1436
  %vm1438 = vcmp.eq.s32.totalorder %v1433, 2
  %v1439 = vxor.u32 %v1423, 2147483648
  %v1440 = vsel %vm1438, %v1439, %v1431
  %v1441 = vsel %vm1434, %v1437, %v1440
  %v1442 = vsel %vm1432, nan, %v1441
  %v1443 = vand.u32 2147483647, %v170
  %vm1444 = vcmp.le.f32.partialorder %v1443, 0.7853982
  %vm1445 = vcmp.lt.s32.totalorder %v170, 0
  %v1446 = vand.u32 %v170, 2139095040
  %v1447 = vshrl.u32 %v1446, 23
  %v1448 = vsub.s32 %v1447, 127
  %v1449 = vand.u32 2147483647, %v170
  %v1450 = vand.u32 %v1449, 8388607
  %v1451 = vor.u32 %v1450, 8388608
  %v1452 = vsub.s32 0, %v1451
  %v1453 = vadd.s32 %v1448, 1
  %vm1454 = vcmp.gt.s32.totalorder %v1453, 0
  %v1455 = vsel %vm1454, %v1453, 0
  %v1456 = vshrl.u32 %v1455, 5
  %v1457 = vand.u32 %v1455, 31
  %v1458 = vsub.s32 32, %v1457
  %v1459 = vshrl.u32 683565275, %v1458
  %v1460 = vshll.u32 683565275, %v1457
  %v1461 = vshrl.u32 2475754826, %v1458
  %v1462 = vor.u32 %v1460, %v1461
  %v1463 = vshll.u32 2475754826, %v1457
  %v1464 = vshrl.u32 2131351028, %v1458
  %v1465 = vor.u32 %v1463, %v1464
  %v1466 = vshll.u32 2131351028, %v1457
  %v1467 = vshrl.u32 2102212464, %v1458
  %v1468 = vor.u32 %v1466, %v1467
  %v1469 = vshll.u32 2102212464, %v1457
  %v1470 = vshrl.u32 920167782, %v1458
  %v1471 = vor.u32 %v1469, %v1470
  %v1472 = vshll.u32 920167782, %v1457
  %v1473 = vshrl.u32 1326507024, %v1458
  %v1474 = vor.u32 %v1472, %v1473
  %vm1475 = vcmp.lt.s32.totalorder %v1456, 1
  %vm1476 = vcmp.lt.s32.totalorder %v1456, 2
  %vm1477 = vcmp.lt.s32.totalorder %v1456, 3
  %vm1478 = vcmp.lt.s32.totalorder %v1456, 4
  %v1479 = vsel %vm1475, %v1459, %v1462
  %v1480 = vsel %vm1478, %v1468, 2102212464
  %v1481 = vsel %vm1477, %v1465, %v1480
  %v1482 = vsel %vm1476, %v1479, %v1481
  %v1483 = vsel %vm1475, %v1462, %v1465
  %v1484 = vsel %vm1478, %v1471, 920167782
  %v1485 = vsel %vm1477, %v1468, %v1484
  %v1486 = vsel %vm1476, %v1483, %v1485
  %v1487 = vsel %vm1475, %v1465, %v1468
  %v1488 = vsel %vm1478, %v1474, 1326507024
  %v1489 = vsel %vm1477, %v1471, %v1488
  %v1490 = vsel %vm1476, %v1487, %v1489
  %v1491 = vshll.u32 %v1451, 8
  %v1492 = vand.u32 %v1491, 65535
  %v1493 = vshrl.u32 %v1491, 16
  %v1494 = vand.u32 %v1490, 65535
  %v1495 = vshrl.u32 %v1490, 16
  %v1496 = vmul.u32 %v1492, %v1494
  %v1497 = vmul.u32 %v1492, %v1495
  %v1498 = vmul.u32 %v1493, %v1494
  %v1499 = vmul.u32 %v1493, %v1495
  %v1500 = vshll.u32 %v1497, 16
  %v1501 = vshrl.u32 %v1497, 16
  %v1502 = vshll.u32 %v1498, 16
  %v1503 = vshrl.u32 %v1498, 16
  %vm1504 = vc.u32 %v1496, %v1500
  %v1505 = vsel %vm1504, 1, 0
  %v1506 = vadd.s32 %v1496, %v1500
  %v1507 = vadd.s32 %v1499, %v1505
  %vm1508 = vc.u32 %v1506, %v1502
  %v1509 = vsel %vm1508, 1, 0
  %v1510 = vadd.s32 %v1506, %v1502
  %v1511 = vadd.s32 %v1507, %v1509
  %v1512 = vadd.s32 %v1511, %v1501
  %v1513 = vadd.s32 %v1512, %v1503
  %v1514 = vand.u32 %v1491, 65535
  %v1515 = vshrl.u32 %v1491, 16
  %v1516 = vand.u32 %v1486, 65535
  %v1517 = vshrl.u32 %v1486, 16
  %v1518 = vmul.u32 %v1514, %v1516
  %v1519 = vmul.u32 %v1514, %v1517
  %v1520 = vmul.u32 %v1515, %v1516
  %v1521 = vmul.u32 %v1515, %v1517
  %v1522 = vshll.u32 %v1519, 16
  %v1523 = vshrl.u32 %v1519, 16
  %v1524 = vshll.u32 %v1520, 16
  %v1525 = vshrl.u32 %v1520, 16
  %vm1526 = vc.u32 %v1518, %v1522
  %v1527 = vsel %vm1526, 1, 0
  %v1528 = vadd.s32 %v1518, %v1522
  %v1529 = vadd.s32 %v1521, %v1527
  %vm1530 = vc.u32 %v1528, %v1524
  %v1531 = vsel %vm1530, 1, 0
  %v1532 = vadd.s32 %v1528, %v1524
  %v1533 = vadd.s32 %v1529, %v1531
  %v1534 = vadd.s32 %v1533, %v1523
  %v1535 = vadd.s32 %v1534, %v1525
  %v1536 = vmul.u32 %v1491, %v1482
  %v1537 = vadd.s32 %v1513, %v1532
  %vm1538 = vc.u32 %v1513, %v1532
  %v1539 = vadd.s32 %v1535, 1
  %v1540 = vsel %vm1538, %v1539, %v1535
  %v1541 = vadd.s32 %v1536, %v1540
  %v1542 = vadd.s32 %v1541, 536870912
  %v1543 = vshrl.u32 %v1542, 30
  %v1544 = vshll.u32 %v1543, 30
  %v1545 = vsub.s32 %v1541, %v1544
  %vm1546 = vcmp.lt.s32.totalorder %v1545, 0
  %v1547 = vsub.s32 0, %v1545
  %v1548 = vsel %vm1546, %v1547, %v1545
  %v1549 = vclz %v1548
  %v1550 = vsub.s32 %v1549, 2
  %vm1551 = vcmp.gt.s32.totalorder 0, %v1550
  %v1552 = vsel %vm1551, 0, %v1550
  %v1553 = vsub.s32 32, %v1552
  %v1554 = vshll.u32 %v1545, %v1552
  %v1555 = vshrl.u32 %v1537, %v1553
  %v1556 = vor.u32 %v1554, %v1555
  %v1557 = vsub.s32 4294967266, %v1552
  %v1558 = vadd.s32 %v1557, 127
  %v1559 = vshll.u32 %v1558, 23
  %v1560 = vor.u32 4788187, %v1559
  %v1561 = vand.u32 2147483647, %v1560
  %v1563 = vcvt.s32.f32 %v1556
  %v1564 = vmul.f32 %v1563, %v1561
  %v1565 = vxor.u32 %v1564, 2147483648
  %v1566 = vsel %vm1445, %v1565, %v1564
  %v1567 = vsub.s32 4, %v1543
  %v1568 = vsel %vm1445, %v1567, %v1543
  %v1569 = vsel %vm1444, %v170, %v1566
  %v1570 = vsel %vm1444, 0, %v1568
  %v1571 = vmul.f32 %v1569, %v1569
  %v1572 = vmul.f32 %v1571, -0.001358992
  %v1573 = vadd.f32 %v1572, 0.041655596
  %v1574 = vmul.f32 %v1571, %v1573
  %v1575 = vadd.f32 %v1574, -0.4999988
  %v1576 = vmul.f32 %v1571, %v1575
  %v1577 = vadd.f32 1.0, %v1576
  %v1578 = vmul.f32 %v1569, %v1569
  %v1579 = vmul.f32 %v1578, -0.00019511016
  %v1580 = vadd.f32 %v1579, 0.008332121
  %v1581 = vmul.f32 %v1578, %v1580
  %v1582 = vadd.f32 %v1581, -0.16666654
  %v1583 = vmul.f32 %v1578, %v1582
  %v1584 = vadd.f32 %v1583, 1.0
  %v1585 = vmul.f32 %v1584, %v1569
  %vm1586 = vweird.f32 %v170
  %v1587 = vand.u32 %v1570, 3
  %vm1588 = vcmp.lt.s32.totalorder %v1587, 2
  %vm1589 = vcmp.eq.s32.totalorder %v1587, 0
  %v1590 = vxor.u32 %v1585, 2147483648
  %v1591 = vsel %vm1589, %v1577, %v1590
  %vm1592 = vcmp.eq.s32.totalorder %v1587, 2
  %v1593 = vxor.u32 %v1577, 2147483648
  %v1594 = vsel %vm1592, %v1593, %v1585
  %v1595 = vsel %vm1588, %v1591, %v1594
  %v1596 = vsel %vm1586, nan, %v1595
  %v1597 = vand.u32 2147483647, %v173
  %vm1598 = vcmp.le.f32.partialorder %v1597, 0.7853982
  %vm1599 = vcmp.lt.s32.totalorder %v173, 0
  %v1600 = vand.u32 %v173, 2139095040
  %v1601 = vshrl.u32 %v1600, 23
  %v1602 = vsub.s32 %v1601, 127
  %v1603 = vand.u32 2147483647, %v173
  %v1604 = vand.u32 %v1603, 8388607
  %v1605 = vor.u32 %v1604, 8388608
  %v1606 = vsub.s32 0, %v1605
  %v1607 = vadd.s32 %v1602, 1
  %vm1608 = vcmp.gt.s32.totalorder %v1607, 0
  %v1609 = vsel %vm1608, %v1607, 0
  %v1610 = vshrl.u32 %v1609, 5
  %v1611 = vand.u32 %v1609, 31
  %v1612 = vsub.s32 32, %v1611
  %v1613 = vshrl.u32 683565275, %v1612
  %v1614 = vshll.u32 683565275, %v1611
  %v1615 = vshrl.u32 2475754826, %v1612
  %v1616 = vor.u32 %v1614, %v1615
  %v1617 = vshll.u32 2475754826, %v1611
  %v1618 = vshrl.u32 2131351028, %v1612
  %v1619 = vor.u32 %v1617, %v1618
  %v1620 = vshll.u32 2131351028, %v1611
  %v1621 = vshrl.u32 2102212464, %v1612
  %v1622 = vor.u32 %v1620, %v1621
  %v1623 = vshll.u32 2102212464, %v1611
  %v1624 = vshrl.u32 920167782, %v1612
  %v1625 = vor.u32 %v1623, %v1624
  %v1626 = vshll.u32 920167782, %v1611
  %v1627 = vshrl.u32 1326507024, %v1612
  %v1628 = vor.u32 %v1626, %v1627
  %vm1629 = vcmp.lt.s32.totalorder %v1610, 1
  %vm1630 = vcmp.lt.s32.totalorder %v1610, 2
  %vm1631 = vcmp.lt.s32.totalorder %v1610, 3
  %vm1632 = vcmp.lt.s32.totalorder %v1610, 4
  %v1633 = vsel %vm1629, %v1613, %v1616
  %v1634 = vsel %vm1632, %v1622, 2102212464
  %v1635 = vsel %vm1631, %v1619, %v1634
  %v1636 = vsel %vm1630, %v1633, %v1635
  %v1637 = vsel %vm1629, %v1616, %v1619
  %v1638 = vsel %vm1632, %v1625, 920167782
  %v1639 = vsel %vm1631, %v1622, %v1638
  %v1640 = vsel %vm1630, %v1637, %v1639
  %v1641 = vsel %vm1629, %v1619, %v1622
  %v1642 = vsel %vm1632, %v1628, 1326507024
  %v1643 = vsel %vm1631, %v1625, %v1642
  %v1644 = vsel %vm1630, %v1641, %v1643
  %v1645 = vshll.u32 %v1605, 8
  %v1646 = vand.u32 %v1645, 65535
  %v1647 = vshrl.u32 %v1645, 16
  %v1648 = vand.u32 %v1644, 65535
  %v1649 = vshrl.u32 %v1644, 16
  %v1650 = vmul.u32 %v1646, %v1648
  %v1651 = vmul.u32 %v1646, %v1649
  %v1652 = vmul.u32 %v1647, %v1648
  %v1653 = vmul.u32 %v1647, %v1649
  %v1654 = vshll.u32 %v1651, 16
  %v1655 = vshrl.u32 %v1651, 16
  %v1656 = vshll.u32 %v1652, 16
  %v1657 = vshrl.u32 %v1652, 16
  %vm1658 = vc.u32 %v1650, %v1654
  %v1659 = vsel %vm1658, 1, 0
  %v1660 = vadd.s32 %v1650, %v1654
  %v1661 = vadd.s32 %v1653, %v1659
  %vm1662 = vc.u32 %v1660, %v1656
  %v1663 = vsel %vm1662, 1, 0
  %v1664 = vadd.s32 %v1660, %v1656
  %v1665 = vadd.s32 %v1661, %v1663
  %v1666 = vadd.s32 %v1665, %v1655
  %v1667 = vadd.s32 %v1666, %v1657
  %v1668 = vand.u32 %v1645, 65535
  %v1669 = vshrl.u32 %v1645, 16
  %v1670 = vand.u32 %v1640, 65535
  %v1671 = vshrl.u32 %v1640, 16
  %v1672 = vmul.u32 %v1668, %v1670
  %v1673 = vmul.u32 %v1668, %v1671
  %v1674 = vmul.u32 %v1669, %v1670
  %v1675 = vmul.u32 %v1669, %v1671
  %v1676 = vshll.u32 %v1673, 16
  %v1677 = vshrl.u32 %v1673, 16
  %v1678 = vshll.u32 %v1674, 16
  %v1679 = vshrl.u32 %v1674, 16
  %vm1680 = vc.u32 %v1672, %v1676
  %v1681 = vsel %vm1680, 1, 0
  %v1682 = vadd.s32 %v1672, %v1676
  %v1683 = vadd.s32 %v1675, %v1681
  %vm1684 = vc.u32 %v1682, %v1678
  %v1685 = vsel %vm1684, 1, 0
  %v1686 = vadd.s32 %v1682, %v1678
  %v1687 = vadd.s32 %v1683, %v1685
  %v1688 = vadd.s32 %v1687, %v1677
  %v1689 = vadd.s32 %v1688, %v1679
  %v1690 = vmul.u32 %v1645, %v1636
  %v1691 = vadd.s32 %v1667, %v1686
  %vm1692 = vc.u32 %v1667, %v1686
  %v1693 = vadd.s32 %v1689, 1
  %v1694 = vsel %vm1692, %v1693, %v1689
  %v1695 = vadd.s32 %v1690, %v1694
  %v1696 = vadd.s32 %v1695, 536870912
  %v1697 = vshrl.u32 %v1696, 30
  %v1698 = vshll.u32 %v1697, 30
  %v1699 = vsub.s32 %v1695, %v1698
  %vm1700 = vcmp.lt.s32.totalorder %v1699, 0
  %v1701 = vsub.s32 0, %v1699
  %v1702 = vsel %vm1700, %v1701, %v1699
  %v1703 = vclz %v1702
  %v1704 = vsub.s32 %v1703, 2
  %vm1705 = vcmp.gt.s32.totalorder 0, %v1704
  %v1706 = vsel %vm1705, 0, %v1704
  %v1707 = vsub.s32 32, %v1706
  %v1708 = vshll.u32 %v1699, %v1706
  %v1709 = vshrl.u32 %v1691, %v1707
  %v1710 = vor.u32 %v1708, %v1709
  %v1711 = vsub.s32 4294967266, %v1706
  %v1712 = vadd.s32 %v1711, 127
  %v1713 = vshll.u32 %v1712, 23
  %v1714 = vor.u32 4788187, %v1713
  %v1715 = vand.u32 2147483647, %v1714
  %v1717 = vcvt.s32.f32 %v1710
  %v1718 = vmul.f32 %v1717, %v1715
  %v1719 = vxor.u32 %v1718, 2147483648
  %v1720 = vsel %vm1599, %v1719, %v1718
  %v1721 = vsub.s32 4, %v1697
  %v1722 = vsel %vm1599, %v1721, %v1697
  %v1723 = vsel %vm1598, %v173, %v1720
  %v1724 = vsel %vm1598, 0, %v1722
  %v1725 = vmul.f32 %v1723, %v1723
  %v1726 = vmul.f32 %v1725, -0.001358992
  %v1727 = vadd.f32 %v1726, 0.041655596
  %v1728 = vmul.f32 %v1725, %v1727
  %v1729 = vadd.f32 %v1728, -0.4999988
  %v1730 = vmul.f32 %v1725, %v1729
  %v1731 = vadd.f32 1.0, %v1730
  %v1732 = vmul.f32 %v1723, %v1723
  %v1733 = vmul.f32 %v1732, -0.00019511016
  %v1734 = vadd.f32 %v1733, 0.008332121
  %v1735 = vmul.f32 %v1732, %v1734
  %v1736 = vadd.f32 %v1735, -0.16666654
  %v1737 = vmul.f32 %v1732, %v1736
  %v1738 = vadd.f32 %v1737, 1.0
  %v1739 = vmul.f32 %v1738, %v1723
  %vm1740 = vweird.f32 %v173
  %v1741 = vand.u32 %v1724, 3
  %vm1742 = vcmp.lt.s32.totalorder %v1741, 2
  %vm1743 = vcmp.eq.s32.totalorder %v1741, 0
  %v1744 = vxor.u32 %v1739, 2147483648
  %v1745 = vsel %vm1743, %v1731, %v1744
  %vm1746 = vcmp.eq.s32.totalorder %v1741, 2
  %v1747 = vxor.u32 %v1731, 2147483648
  %v1748 = vsel %vm1746, %v1747, %v1739
  %v1749 = vsel %vm1742, %v1745, %v1748
  %v1750 = vsel %vm1740, nan, %v1749
  %v1751 = vand.u32 2147483647, %v176
  %vm1752 = vcmp.le.f32.partialorder %v1751, 0.7853982
  %vm1753 = vcmp.lt.s32.totalorder %v176, 0
  %v1754 = vand.u32 %v176, 2139095040
  %v1755 = vshrl.u32 %v1754, 23
  %v1756 = vsub.s32 %v1755, 127
  %v1757 = vand.u32 2147483647, %v176
  %v1758 = vand.u32 %v1757, 8388607
  %v1759 = vor.u32 %v1758, 8388608
  %v1760 = vsub.s32 0, %v1759
  %v1761 = vadd.s32 %v1756, 1
  %vm1762 = vcmp.gt.s32.totalorder %v1761, 0
  %v1763 = vsel %vm1762, %v1761, 0
  %v1764 = vshrl.u32 %v1763, 5
  %v1765 = vand.u32 %v1763, 31
  %v1766 = vsub.s32 32, %v1765
  %v1767 = vshrl.u32 683565275, %v1766
  %v1768 = vshll.u32 683565275, %v1765
  %v1769 = vshrl.u32 2475754826, %v1766
  %v1770 = vor.u32 %v1768, %v1769
  %v1771 = vshll.u32 2475754826, %v1765
  %v1772 = vshrl.u32 2131351028, %v1766
  %v1773 = vor.u32 %v1771, %v1772
  %v1774 = vshll.u32 2131351028, %v1765
  %v1775 = vshrl.u32 2102212464, %v1766
  %v1776 = vor.u32 %v1774, %v1775
  %v1777 = vshll.u32 2102212464, %v1765
  %v1778 = vshrl.u32 920167782, %v1766
  %v1779 = vor.u32 %v1777, %v1778
  %v1780 = vshll.u32 920167782, %v1765
  %v1781 = vshrl.u32 1326507024, %v1766
  %v1782 = vor.u32 %v1780, %v1781
  %vm1783 = vcmp.lt.s32.totalorder %v1764, 1
  %vm1784 = vcmp.lt.s32.totalorder %v1764, 2
  %vm1785 = vcmp.lt.s32.totalorder %v1764, 3
  %vm1786 = vcmp.lt.s32.totalorder %v1764, 4
  %v1787 = vsel %vm1783, %v1767, %v1770
  %v1788 = vsel %vm1786, %v1776, 2102212464
  %v1789 = vsel %vm1785, %v1773, %v1788
  %v1790 = vsel %vm1784, %v1787, %v1789
  %v1791 = vsel %vm1783, %v1770, %v1773
  %v1792 = vsel %vm1786, %v1779, 920167782
  %v1793 = vsel %vm1785, %v1776, %v1792
  %v1794 = vsel %vm1784, %v1791, %v1793
  %v1795 = vsel %vm1783, %v1773, %v1776
  %v1796 = vsel %vm1786, %v1782, 1326507024
  %v1797 = vsel %vm1785, %v1779, %v1796
  %v1798 = vsel %vm1784, %v1795, %v1797
  %v1799 = vshll.u32 %v1759, 8
  %v1800 = vand.u32 %v1799, 65535
  %v1801 = vshrl.u32 %v1799, 16
  %v1802 = vand.u32 %v1798, 65535
  %v1803 = vshrl.u32 %v1798, 16
  %v1804 = vmul.u32 %v1800, %v1802
  %v1805 = vmul.u32 %v1800, %v1803
  %v1806 = vmul.u32 %v1801, %v1802
  %v1807 = vmul.u32 %v1801, %v1803
  %v1808 = vshll.u32 %v1805, 16
  %v1809 = vshrl.u32 %v1805, 16
  %v1810 = vshll.u32 %v1806, 16
  %v1811 = vshrl.u32 %v1806, 16
  %vm1812 = vc.u32 %v1804, %v1808
  %v1813 = vsel %vm1812, 1, 0
  %v1814 = vadd.s32 %v1804, %v1808
  %v1815 = vadd.s32 %v1807, %v1813
  %vm1816 = vc.u32 %v1814, %v1810
  %v1817 = vsel %vm1816, 1, 0
  %v1818 = vadd.s32 %v1814, %v1810
  %v1819 = vadd.s32 %v1815, %v1817
  %v1820 = vadd.s32 %v1819, %v1809
  %v1821 = vadd.s32 %v1820, %v1811
  %v1822 = vand.u32 %v1799, 65535
  %v1823 = vshrl.u32 %v1799, 16
  %v1824 = vand.u32 %v1794, 65535
  %v1825 = vshrl.u32 %v1794, 16
  %v1826 = vmul.u32 %v1822, %v1824
  %v1827 = vmul.u32 %v1822, %v1825
  %v1828 = vmul.u32 %v1823, %v1824
  %v1829 = vmul.u32 %v1823, %v1825
  %v1830 = vshll.u32 %v1827, 16
  %v1831 = vshrl.u32 %v1827, 16
  %v1832 = vshll.u32 %v1828, 16
  %v1833 = vshrl.u32 %v1828, 16
  %vm1834 = vc.u32 %v1826, %v1830
  %v1835 = vsel %vm1834, 1, 0
  %v1836 = vadd.s32 %v1826, %v1830
  %v1837 = vadd.s32 %v1829, %v1835
  %vm1838 = vc.u32 %v1836, %v1832
  %v1839 = vsel %vm1838, 1, 0
  %v1840 = vadd.s32 %v1836, %v1832
  %v1841 = vadd.s32 %v1837, %v1839
  %v1842 = vadd.s32 %v1841, %v1831
  %v1843 = vadd.s32 %v1842, %v1833
  %v1844 = vmul.u32 %v1799, %v1790
  %v1845 = vadd.s32 %v1821, %v1840
  %vm1846 = vc.u32 %v1821, %v1840
  %v1847 = vadd.s32 %v1843, 1
  %v1848 = vsel %vm1846, %v1847, %v1843
  %v1849 = vadd.s32 %v1844, %v1848
  %v1850 = vadd.s32 %v1849, 536870912
  %v1851 = vshrl.u32 %v1850, 30
  %v1852 = vshll.u32 %v1851, 30
  %v1853 = vsub.s32 %v1849, %v1852
  %vm1854 = vcmp.lt.s32.totalorder %v1853, 0
  %v1855 = vsub.s32 0, %v1853
  %v1856 = vsel %vm1854, %v1855, %v1853
  %v1857 = vclz %v1856
  %v1858 = vsub.s32 %v1857, 2
  %vm1859 = vcmp.gt.s32.totalorder 0, %v1858
  %v1860 = vsel %vm1859, 0, %v1858
  %v1861 = vsub.s32 32, %v1860
  %v1862 = vshll.u32 %v1853, %v1860
  %v1863 = vshrl.u32 %v1845, %v1861
  %v1864 = vor.u32 %v1862, %v1863
  %v1865 = vsub.s32 4294967266, %v1860
  %v1866 = vadd.s32 %v1865, 127
  %v1867 = vshll.u32 %v1866, 23
  %v1868 = vor.u32 4788187, %v1867
  %v1869 = vand.u32 2147483647, %v1868
  %v1871 = vcvt.s32.f32 %v1864
  %v1872 = vmul.f32 %v1871, %v1869
  %v1873 = vxor.u32 %v1872, 2147483648
  %v1874 = vsel %vm1753, %v1873, %v1872
  %v1875 = vsub.s32 4, %v1851
  %v1876 = vsel %vm1753, %v1875, %v1851
  %v1877 = vsel %vm1752, %v176, %v1874
  %v1878 = vsel %vm1752, 0, %v1876
  %v1879 = vmul.f32 %v1877, %v1877
  %v1880 = vmul.f32 %v1879, -0.001358992
  %v1881 = vadd.f32 %v1880, 0.041655596
  %v1882 = vmul.f32 %v1879, %v1881
  %v1883 = vadd.f32 %v1882, -0.4999988
  %v1884 = vmul.f32 %v1879, %v1883
  %v1885 = vadd.f32 1.0, %v1884
  %v1886 = vmul.f32 %v1877, %v1877
  %v1887 = vmul.f32 %v1886, -0.00019511016
  %v1888 = vadd.f32 %v1887, 0.008332121
  %v1889 = vmul.f32 %v1886, %v1888
  %v1890 = vadd.f32 %v1889, -0.16666654
  %v1891 = vmul.f32 %v1886, %v1890
  %v1892 = vadd.f32 %v1891, 1.0
  %v1893 = vmul.f32 %v1892, %v1877
  %vm1894 = vweird.f32 %v176
  %v1895 = vand.u32 %v1878, 3
  %vm1896 = vcmp.lt.s32.totalorder %v1895, 2
  %vm1897 = vcmp.eq.s32.totalorder %v1895, 0
  %v1898 = vxor.u32 %v1893, 2147483648
  %v1899 = vsel %vm1897, %v1885, %v1898
  %vm1900 = vcmp.eq.s32.totalorder %v1895, 2
  %v1901 = vxor.u32 %v1885, 2147483648
  %v1902 = vsel %vm1900, %v1901, %v1893
  %v1903 = vsel %vm1896, %v1899, %v1902
  %v1904 = vsel %vm1894, nan, %v1903
  %v1905 = vand.u32 2147483647, %v179
  %vm1906 = vcmp.le.f32.partialorder %v1905, 0.7853982
  %vm1907 = vcmp.lt.s32.totalorder %v179, 0
  %v1908 = vand.u32 %v179, 2139095040
  %v1909 = vshrl.u32 %v1908, 23
  %v1910 = vsub.s32 %v1909, 127
  %v1911 = vand.u32 2147483647, %v179
  %v1912 = vand.u32 %v1911, 8388607
  %v1913 = vor.u32 %v1912, 8388608
  %v1914 = vsub.s32 0, %v1913
  %v1915 = vadd.s32 %v1910, 1
  %vm1916 = vcmp.gt.s32.totalorder %v1915, 0
  %v1917 = vsel %vm1916, %v1915, 0
  %v1918 = vshrl.u32 %v1917, 5
  %v1919 = vand.u32 %v1917, 31
  %v1920 = vsub.s32 32, %v1919
  %v1921 = vshrl.u32 683565275, %v1920
  %v1922 = vshll.u32 683565275, %v1919
  %v1923 = vshrl.u32 2475754826, %v1920
  %v1924 = vor.u32 %v1922, %v1923
  %v1925 = vshll.u32 2475754826, %v1919
  %v1926 = vshrl.u32 2131351028, %v1920
  %v1927 = vor.u32 %v1925, %v1926
  %v1928 = vshll.u32 2131351028, %v1919
  %v1929 = vshrl.u32 2102212464, %v1920
  %v1930 = vor.u32 %v1928, %v1929
  %v1931 = vshll.u32 2102212464, %v1919
  %v1932 = vshrl.u32 920167782, %v1920
  %v1933 = vor.u32 %v1931, %v1932
  %v1934 = vshll.u32 920167782, %v1919
  %v1935 = vshrl.u32 1326507024, %v1920
  %v1936 = vor.u32 %v1934, %v1935
  %vm1937 = vcmp.lt.s32.totalorder %v1918, 1
  %vm1938 = vcmp.lt.s32.totalorder %v1918, 2
  %vm1939 = vcmp.lt.s32.totalorder %v1918, 3
  %vm1940 = vcmp.lt.s32.totalorder %v1918, 4
  %v1941 = vsel %vm1937, %v1921, %v1924
  %v1942 = vsel %vm1940, %v1930, 2102212464
  %v1943 = vsel %vm1939, %v1927, %v1942
  %v1944 = vsel %vm1938, %v1941, %v1943
  %v1945 = vsel %vm1937, %v1924, %v1927
  %v1946 = vsel %vm1940, %v1933, 920167782
  %v1947 = vsel %vm1939, %v1930, %v1946
  %v1948 = vsel %vm1938, %v1945, %v1947
  %v1949 = vsel %vm1937, %v1927, %v1930
  %v1950 = vsel %vm1940, %v1936, 1326507024
  %v1951 = vsel %vm1939, %v1933, %v1950
  %v1952 = vsel %vm1938, %v1949, %v1951
  %v1953 = vshll.u32 %v1913, 8
  %v1954 = vand.u32 %v1953, 65535
  %v1955 = vshrl.u32 %v1953, 16
  %v1956 = vand.u32 %v1952, 65535
  %v1957 = vshrl.u32 %v1952, 16
  %v1958 = vmul.u32 %v1954, %v1956
  %v1959 = vmul.u32 %v1954, %v1957
  %v1960 = vmul.u32 %v1955, %v1956
  %v1961 = vmul.u32 %v1955, %v1957
  %v1962 = vshll.u32 %v1959, 16
  %v1963 = vshrl.u32 %v1959, 16
  %v1964 = vshll.u32 %v1960, 16
  %v1965 = vshrl.u32 %v1960, 16
  %vm1966 = vc.u32 %v1958, %v1962
  %v1967 = vsel %vm1966, 1, 0
  %v1968 = vadd.s32 %v1958, %v1962
  %v1969 = vadd.s32 %v1961, %v1967
  %vm1970 = vc.u32 %v1968, %v1964
  %v1971 = vsel %vm1970, 1, 0
  %v1972 = vadd.s32 %v1968, %v1964
  %v1973 = vadd.s32 %v1969, %v1971
  %v1974 = vadd.s32 %v1973, %v1963
  %v1975 = vadd.s32 %v1974, %v1965
  %v1976 = vand.u32 %v1953, 65535
  %v1977 = vshrl.u32 %v1953, 16
  %v1978 = vand.u32 %v1948, 65535
  %v1979 = vshrl.u32 %v1948, 16
  %v1980 = vmul.u32 %v1976, %v1978
  %v1981 = vmul.u32 %v1976, %v1979
  %v1982 = vmul.u32 %v1977, %v1978
  %v1983 = vmul.u32 %v1977, %v1979
  %v1984 = vshll.u32 %v1981, 16
  %v1985 = vshrl.u32 %v1981, 16
  %v1986 = vshll.u32 %v1982, 16
  %v1987 = vshrl.u32 %v1982, 16
  %vm1988 = vc.u32 %v1980, %v1984
  %v1989 = vsel %vm1988, 1, 0
  %v1990 = vadd.s32 %v1980, %v1984
  %v1991 = vadd.s32 %v1983, %v1989
  %vm1992 = vc.u32 %v1990, %v1986
  %v1993 = vsel %vm1992, 1, 0
  %v1994 = vadd.s32 %v1990, %v1986
  %v1995 = vadd.s32 %v1991, %v1993
  %v1996 = vadd.s32 %v1995, %v1985
  %v1997 = vadd.s32 %v1996, %v1987
  %v1998 = vmul.u32 %v1953, %v1944
  %v1999 = vadd.s32 %v1975, %v1994
  %vm2000 = vc.u32 %v1975, %v1994
  %v2001 = vadd.s32 %v1997, 1
  %v2002 = vsel %vm2000, %v2001, %v1997
  %v2003 = vadd.s32 %v1998, %v2002
  %v2004 = vadd.s32 %v2003, 536870912
  %v2005 = vshrl.u32 %v2004, 30
  %v2006 = vshll.u32 %v2005, 30
  %v2007 = vsub.s32 %v2003, %v2006
  %vm2008 = vcmp.lt.s32.totalorder %v2007, 0
  %v2009 = vsub.s32 0, %v2007
  %v2010 = vsel %vm2008, %v2009, %v2007
  %v2011 = vclz %v2010
  %v2012 = vsub.s32 %v2011, 2
  %vm2013 = vcmp.gt.s32.totalorder 0, %v2012
  %v2014 = vsel %vm2013, 0, %v2012
  %v2015 = vsub.s32 32, %v2014
  %v2016 = vshll.u32 %v2007, %v2014
  %v2017 = vshrl.u32 %v1999, %v2015
  %v2018 = vor.u32 %v2016, %v2017
  %v2019 = vsub.s32 4294967266, %v2014
  %v2020 = vadd.s32 %v2019, 127
  %v2021 = vshll.u32 %v2020, 23
  %v2022 = vor.u32 4788187, %v2021
  %v2023 = vand.u32 2147483647, %v2022
  %v2025 = vcvt.s32.f32 %v2018
  %v2026 = vmul.f32 %v2025, %v2023
  %v2027 = vxor.u32 %v2026, 2147483648
  %v2028 = vsel %vm1907, %v2027, %v2026
  %v2029 = vsub.s32 4, %v2005
  %v2030 = vsel %vm1907, %v2029, %v2005
  %v2031 = vsel %vm1906, %v179, %v2028
  %v2032 = vsel %vm1906, 0, %v2030
  %v2033 = vmul.f32 %v2031, %v2031
  %v2034 = vmul.f32 %v2033, -0.001358992
  %v2035 = vadd.f32 %v2034, 0.041655596
  %v2036 = vmul.f32 %v2033, %v2035
  %v2037 = vadd.f32 %v2036, -0.4999988
  %v2038 = vmul.f32 %v2033, %v2037
  %v2039 = vadd.f32 1.0, %v2038
  %v2040 = vmul.f32 %v2031, %v2031
  %v2041 = vmul.f32 %v2040, -0.00019511016
  %v2042 = vadd.f32 %v2041, 0.008332121
  %v2043 = vmul.f32 %v2040, %v2042
  %v2044 = vadd.f32 %v2043, -0.16666654
  %v2045 = vmul.f32 %v2040, %v2044
  %v2046 = vadd.f32 %v2045, 1.0
  %v2047 = vmul.f32 %v2046, %v2031
  %vm2048 = vweird.f32 %v179
  %v2049 = vand.u32 %v2032, 3
  %vm2050 = vcmp.lt.s32.totalorder %v2049, 2
  %vm2051 = vcmp.eq.s32.totalorder %v2049, 0
  %v2052 = vxor.u32 %v2047, 2147483648
  %v2053 = vsel %vm2051, %v2039, %v2052
  %vm2054 = vcmp.eq.s32.totalorder %v2049, 2
  %v2055 = vxor.u32 %v2039, 2147483648
  %v2056 = vsel %vm2054, %v2055, %v2047
  %v2057 = vsel %vm2050, %v2053, %v2056
  %v2058 = vsel %vm2048, nan, %v2057
  %v2059 = vand.u32 2147483647, %v182
  %vm2060 = vcmp.le.f32.partialorder %v2059, 0.7853982
  %vm2061 = vcmp.lt.s32.totalorder %v182, 0
  %v2062 = vand.u32 %v182, 2139095040
  %v2063 = vshrl.u32 %v2062, 23
  %v2064 = vsub.s32 %v2063, 127
  %v2065 = vand.u32 2147483647, %v182
  %v2066 = vand.u32 %v2065, 8388607
  %v2067 = vor.u32 %v2066, 8388608
  %v2068 = vsub.s32 0, %v2067
  %v2069 = vadd.s32 %v2064, 1
  %vm2070 = vcmp.gt.s32.totalorder %v2069, 0
  %v2071 = vsel %vm2070, %v2069, 0
  %v2072 = vshrl.u32 %v2071, 5
  %v2073 = vand.u32 %v2071, 31
  %v2074 = vsub.s32 32, %v2073
  %v2075 = vshrl.u32 683565275, %v2074
  %v2076 = vshll.u32 683565275, %v2073
  %v2077 = vshrl.u32 2475754826, %v2074
  %v2078 = vor.u32 %v2076, %v2077
  %v2079 = vshll.u32 2475754826, %v2073
  %v2080 = vshrl.u32 2131351028, %v2074
  %v2081 = vor.u32 %v2079, %v2080
  %v2082 = vshll.u32 2131351028, %v2073
  %v2083 = vshrl.u32 2102212464, %v2074
  %v2084 = vor.u32 %v2082, %v2083
  %v2085 = vshll.u32 2102212464, %v2073
  %v2086 = vshrl.u32 920167782, %v2074
  %v2087 = vor.u32 %v2085, %v2086
  %v2088 = vshll.u32 920167782, %v2073
  %v2089 = vshrl.u32 1326507024, %v2074
  %v2090 = vor.u32 %v2088, %v2089
  %vm2091 = vcmp.lt.s32.totalorder %v2072, 1
  %vm2092 = vcmp.lt.s32.totalorder %v2072, 2
  %vm2093 = vcmp.lt.s32.totalorder %v2072, 3
  %vm2094 = vcmp.lt.s32.totalorder %v2072, 4
  %v2095 = vsel %vm2091, %v2075, %v2078
  %v2096 = vsel %vm2094, %v2084, 2102212464
  %v2097 = vsel %vm2093, %v2081, %v2096
  %v2098 = vsel %vm2092, %v2095, %v2097
  %v2099 = vsel %vm2091, %v2078, %v2081
  %v2100 = vsel %vm2094, %v2087, 920167782
  %v2101 = vsel %vm2093, %v2084, %v2100
  %v2102 = vsel %vm2092, %v2099, %v2101
  %v2103 = vsel %vm2091, %v2081, %v2084
  %v2104 = vsel %vm2094, %v2090, 1326507024
  %v2105 = vsel %vm2093, %v2087, %v2104
  %v2106 = vsel %vm2092, %v2103, %v2105
  %v2107 = vshll.u32 %v2067, 8
  %v2108 = vand.u32 %v2107, 65535
  %v2109 = vshrl.u32 %v2107, 16
  %v2110 = vand.u32 %v2106, 65535
  %v2111 = vshrl.u32 %v2106, 16
  %v2112 = vmul.u32 %v2108, %v2110
  %v2113 = vmul.u32 %v2108, %v2111
  %v2114 = vmul.u32 %v2109, %v2110
  %v2115 = vmul.u32 %v2109, %v2111
  %v2116 = vshll.u32 %v2113, 16
  %v2117 = vshrl.u32 %v2113, 16
  %v2118 = vshll.u32 %v2114, 16
  %v2119 = vshrl.u32 %v2114, 16
  %vm2120 = vc.u32 %v2112, %v2116
  %v2121 = vsel %vm2120, 1, 0
  %v2122 = vadd.s32 %v2112, %v2116
  %v2123 = vadd.s32 %v2115, %v2121
  %vm2124 = vc.u32 %v2122, %v2118
  %v2125 = vsel %vm2124, 1, 0
  %v2126 = vadd.s32 %v2122, %v2118
  %v2127 = vadd.s32 %v2123, %v2125
  %v2128 = vadd.s32 %v2127, %v2117
  %v2129 = vadd.s32 %v2128, %v2119
  %v2130 = vand.u32 %v2107, 65535
  %v2131 = vshrl.u32 %v2107, 16
  %v2132 = vand.u32 %v2102, 65535
  %v2133 = vshrl.u32 %v2102, 16
  %v2134 = vmul.u32 %v2130, %v2132
  %v2135 = vmul.u32 %v2130, %v2133
  %v2136 = vmul.u32 %v2131, %v2132
  %v2137 = vmul.u32 %v2131, %v2133
  %v2138 = vshll.u32 %v2135, 16
  %v2139 = vshrl.u32 %v2135, 16
  %v2140 = vshll.u32 %v2136, 16
  %v2141 = vshrl.u32 %v2136, 16
  %vm2142 = vc.u32 %v2134, %v2138
  %v2143 = vsel %vm2142, 1, 0
  %v2144 = vadd.s32 %v2134, %v2138
  %v2145 = vadd.s32 %v2137, %v2143
  %vm2146 = vc.u32 %v2144, %v2140
  %v2147 = vsel %vm2146, 1, 0
  %v2148 = vadd.s32 %v2144, %v2140
  %v2149 = vadd.s32 %v2145, %v2147
  %v2150 = vadd.s32 %v2149, %v2139
  %v2151 = vadd.s32 %v2150, %v2141
  %v2152 = vmul.u32 %v2107, %v2098
  %v2153 = vadd.s32 %v2129, %v2148
  %vm2154 = vc.u32 %v2129, %v2148
  %v2155 = vadd.s32 %v2151, 1
  %v2156 = vsel %vm2154, %v2155, %v2151
  %v2157 = vadd.s32 %v2152, %v2156
  %v2158 = vadd.s32 %v2157, 536870912
  %v2159 = vshrl.u32 %v2158, 30
  %v2160 = vshll.u32 %v2159, 30
  %v2161 = vsub.s32 %v2157, %v2160
  %vm2162 = vcmp.lt.s32.totalorder %v2161, 0
  %v2163 = vsub.s32 0, %v2161
  %v2164 = vsel %vm2162, %v2163, %v2161
  %v2165 = vclz %v2164
  %v2166 = vsub.s32 %v2165, 2
  %vm2167 = vcmp.gt.s32.totalorder 0, %v2166
  %v2168 = vsel %vm2167, 0, %v2166
  %v2169 = vsub.s32 32, %v2168
  %v2170 = vshll.u32 %v2161, %v2168
  %v2171 = vshrl.u32 %v2153, %v2169
  %v2172 = vor.u32 %v2170, %v2171
  %v2173 = vsub.s32 4294967266, %v2168
  %v2174 = vadd.s32 %v2173, 127
  %v2175 = vshll.u32 %v2174, 23
  %v2176 = vor.u32 4788187, %v2175
  %v2177 = vand.u32 2147483647, %v2176
  %v2179 = vcvt.s32.f32 %v2172
  %v2180 = vmul.f32 %v2179, %v2177
  %v2181 = vxor.u32 %v2180, 2147483648
  %v2182 = vsel %vm2061, %v2181, %v2180
  %v2183 = vsub.s32 4, %v2159
  %v2184 = vsel %vm2061, %v2183, %v2159
  %v2185 = vsel %vm2060, %v182, %v2182
  %v2186 = vsel %vm2060, 0, %v2184
  %v2187 = vmul.f32 %v2185, %v2185
  %v2188 = vmul.f32 %v2187, -0.001358992
  %v2189 = vadd.f32 %v2188, 0.041655596
  %v2190 = vmul.f32 %v2187, %v2189
  %v2191 = vadd.f32 %v2190, -0.4999988
  %v2192 = vmul.f32 %v2187, %v2191
  %v2193 = vadd.f32 1.0, %v2192
  %v2194 = vmul.f32 %v2185, %v2185
  %v2195 = vmul.f32 %v2194, -0.00019511016
  %v2196 = vadd.f32 %v2195, 0.008332121
  %v2197 = vmul.f32 %v2194, %v2196
  %v2198 = vadd.f32 %v2197, -0.16666654
  %v2199 = vmul.f32 %v2194, %v2198
  %v2200 = vadd.f32 %v2199, 1.0
  %v2201 = vmul.f32 %v2200, %v2185
  %vm2202 = vweird.f32 %v182
  %v2203 = vand.u32 %v2186, 3
  %vm2204 = vcmp.lt.s32.totalorder %v2203, 2
  %vm2205 = vcmp.eq.s32.totalorder %v2203, 0
  %v2206 = vxor.u32 %v2201, 2147483648
  %v2207 = vsel %vm2205, %v2193, %v2206
  %vm2208 = vcmp.eq.s32.totalorder %v2203, 2
  %v2209 = vxor.u32 %v2193, 2147483648
  %v2210 = vsel %vm2208, %v2209, %v2201
  %v2211 = vsel %vm2204, %v2207, %v2210
  %v2212 = vsel %vm2202, nan, %v2211
  %v2213 = vand.u32 2147483647, %v185
  %vm2214 = vcmp.le.f32.partialorder %v2213, 0.7853982
  %vm2215 = vcmp.lt.s32.totalorder %v185, 0
  %v2216 = vand.u32 %v185, 2139095040
  %v2217 = vshrl.u32 %v2216, 23
  %v2218 = vsub.s32 %v2217, 127
  %v2219 = vand.u32 2147483647, %v185
  %v2220 = vand.u32 %v2219, 8388607
  %v2221 = vor.u32 %v2220, 8388608
  %v2222 = vsub.s32 0, %v2221
  %v2223 = vadd.s32 %v2218, 1
  %vm2224 = vcmp.gt.s32.totalorder %v2223, 0
  %v2225 = vsel %vm2224, %v2223, 0
  %v2226 = vshrl.u32 %v2225, 5
  %v2227 = vand.u32 %v2225, 31
  %v2228 = vsub.s32 32, %v2227
  %v2229 = vshrl.u32 683565275, %v2228
  %v2230 = vshll.u32 683565275, %v2227
  %v2231 = vshrl.u32 2475754826, %v2228
  %v2232 = vor.u32 %v2230, %v2231
  %v2233 = vshll.u32 2475754826, %v2227
  %v2234 = vshrl.u32 2131351028, %v2228
  %v2235 = vor.u32 %v2233, %v2234
  %v2236 = vshll.u32 2131351028, %v2227
  %v2237 = vshrl.u32 2102212464, %v2228
  %v2238 = vor.u32 %v2236, %v2237
  %v2239 = vshll.u32 2102212464, %v2227
  %v2240 = vshrl.u32 920167782, %v2228
  %v2241 = vor.u32 %v2239, %v2240
  %v2242 = vshll.u32 920167782, %v2227
  %v2243 = vshrl.u32 1326507024, %v2228
  %v2244 = vor.u32 %v2242, %v2243
  %vm2245 = vcmp.lt.s32.totalorder %v2226, 1
  %vm2246 = vcmp.lt.s32.totalorder %v2226, 2
  %vm2247 = vcmp.lt.s32.totalorder %v2226, 3
  %vm2248 = vcmp.lt.s32.totalorder %v2226, 4
  %v2249 = vsel %vm2245, %v2229, %v2232
  %v2250 = vsel %vm2248, %v2238, 2102212464
  %v2251 = vsel %vm2247, %v2235, %v2250
  %v2252 = vsel %vm2246, %v2249, %v2251
  %v2253 = vsel %vm2245, %v2232, %v2235
  %v2254 = vsel %vm2248, %v2241, 920167782
  %v2255 = vsel %vm2247, %v2238, %v2254
  %v2256 = vsel %vm2246, %v2253, %v2255
  %v2257 = vsel %vm2245, %v2235, %v2238
  %v2258 = vsel %vm2248, %v2244, 1326507024
  %v2259 = vsel %vm2247, %v2241, %v2258
  %v2260 = vsel %vm2246, %v2257, %v2259
  %v2261 = vshll.u32 %v2221, 8
  %v2262 = vand.u32 %v2261, 65535
  %v2263 = vshrl.u32 %v2261, 16
  %v2264 = vand.u32 %v2260, 65535
  %v2265 = vshrl.u32 %v2260, 16
  %v2266 = vmul.u32 %v2262, %v2264
  %v2267 = vmul.u32 %v2262, %v2265
  %v2268 = vmul.u32 %v2263, %v2264
  %v2269 = vmul.u32 %v2263, %v2265
  %v2270 = vshll.u32 %v2267, 16
  %v2271 = vshrl.u32 %v2267, 16
  %v2272 = vshll.u32 %v2268, 16
  %v2273 = vshrl.u32 %v2268, 16
  %vm2274 = vc.u32 %v2266, %v2270
  %v2275 = vsel %vm2274, 1, 0
  %v2276 = vadd.s32 %v2266, %v2270
  %v2277 = vadd.s32 %v2269, %v2275
  %vm2278 = vc.u32 %v2276, %v2272
  %v2279 = vsel %vm2278, 1, 0
  %v2280 = vadd.s32 %v2276, %v2272
  %v2281 = vadd.s32 %v2277, %v2279
  %v2282 = vadd.s32 %v2281, %v2271
  %v2283 = vadd.s32 %v2282, %v2273
  %v2284 = vand.u32 %v2261, 65535
  %v2285 = vshrl.u32 %v2261, 16
  %v2286 = vand.u32 %v2256, 65535
  %v2287 = vshrl.u32 %v2256, 16
  %v2288 = vmul.u32 %v2284, %v2286
  %v2289 = vmul.u32 %v2284, %v2287
  %v2290 = vmul.u32 %v2285, %v2286
  %v2291 = vmul.u32 %v2285, %v2287
  %v2292 = vshll.u32 %v2289, 16
  %v2293 = vshrl.u32 %v2289, 16
  %v2294 = vshll.u32 %v2290, 16
  %v2295 = vshrl.u32 %v2290, 16
  %vm2296 = vc.u32 %v2288, %v2292
  %v2297 = vsel %vm2296, 1, 0
  %v2298 = vadd.s32 %v2288, %v2292
  %v2299 = vadd.s32 %v2291, %v2297
  %vm2300 = vc.u32 %v2298, %v2294
  %v2301 = vsel %vm2300, 1, 0
  %v2302 = vadd.s32 %v2298, %v2294
  %v2303 = vadd.s32 %v2299, %v2301
  %v2304 = vadd.s32 %v2303, %v2293
  %v2305 = vadd.s32 %v2304, %v2295
  %v2306 = vmul.u32 %v2261, %v2252
  %v2307 = vadd.s32 %v2283, %v2302
  %vm2308 = vc.u32 %v2283, %v2302
  %v2309 = vadd.s32 %v2305, 1
  %v2310 = vsel %vm2308, %v2309, %v2305
  %v2311 = vadd.s32 %v2306, %v2310
  %v2312 = vadd.s32 %v2311, 536870912
  %v2313 = vshrl.u32 %v2312, 30
  %v2314 = vshll.u32 %v2313, 30
  %v2315 = vsub.s32 %v2311, %v2314
  %vm2316 = vcmp.lt.s32.totalorder %v2315, 0
  %v2317 = vsub.s32 0, %v2315
  %v2318 = vsel %vm2316, %v2317, %v2315
  %v2319 = vclz %v2318
  %v2320 = vsub.s32 %v2319, 2
  %vm2321 = vcmp.gt.s32.totalorder 0, %v2320
  %v2322 = vsel %vm2321, 0, %v2320
  %v2323 = vsub.s32 32, %v2322
  %v2324 = vshll.u32 %v2315, %v2322
  %v2325 = vshrl.u32 %v2307, %v2323
  %v2326 = vor.u32 %v2324, %v2325
  %v2327 = vsub.s32 4294967266, %v2322
  %v2328 = vadd.s32 %v2327, 127
  %v2329 = vshll.u32 %v2328, 23
  %v2330 = vor.u32 4788187, %v2329
  %v2331 = vand.u32 2147483647, %v2330
  %v2333 = vcvt.s32.f32 %v2326
  %v2334 = vmul.f32 %v2333, %v2331
  %v2335 = vxor.u32 %v2334, 2147483648
  %v2336 = vsel %vm2215, %v2335, %v2334
  %v2337 = vsub.s32 4, %v2313
  %v2338 = vsel %vm2215, %v2337, %v2313
  %v2339 = vsel %vm2214, %v185, %v2336
  %v2340 = vsel %vm2214, 0, %v2338
  %v2341 = vmul.f32 %v2339, %v2339
  %v2342 = vmul.f32 %v2341, -0.001358992
  %v2343 = vadd.f32 %v2342, 0.041655596
  %v2344 = vmul.f32 %v2341, %v2343
  %v2345 = vadd.f32 %v2344, -0.4999988
  %v2346 = vmul.f32 %v2341, %v2345
  %v2347 = vadd.f32 1.0, %v2346
  %v2348 = vmul.f32 %v2339, %v2339
  %v2349 = vmul.f32 %v2348, -0.00019511016
  %v2350 = vadd.f32 %v2349, 0.008332121
  %v2351 = vmul.f32 %v2348, %v2350
  %v2352 = vadd.f32 %v2351, -0.16666654
  %v2353 = vmul.f32 %v2348, %v2352
  %v2354 = vadd.f32 %v2353, 1.0
  %v2355 = vmul.f32 %v2354, %v2339
  %vm2356 = vweird.f32 %v185
  %v2357 = vand.u32 %v2340, 3
  %vm2358 = vcmp.lt.s32.totalorder %v2357, 2
  %vm2359 = vcmp.eq.s32.totalorder %v2357, 0
  %v2360 = vxor.u32 %v2355, 2147483648
  %v2361 = vsel %vm2359, %v2347, %v2360
  %vm2362 = vcmp.eq.s32.totalorder %v2357, 2
  %v2363 = vxor.u32 %v2347, 2147483648
  %v2364 = vsel %vm2362, %v2363, %v2355
  %v2365 = vsel %vm2358, %v2361, %v2364
  %v2366 = vsel %vm2356, nan, %v2365
  %v2367 = vand.u32 2147483647, %v188
  %vm2368 = vcmp.le.f32.partialorder %v2367, 0.7853982
  %vm2369 = vcmp.lt.s32.totalorder %v188, 0
  %v2370 = vand.u32 %v188, 2139095040
  %v2371 = vshrl.u32 %v2370, 23
  %v2372 = vsub.s32 %v2371, 127
  %v2373 = vand.u32 2147483647, %v188
  %v2374 = vand.u32 %v2373, 8388607
  %v2375 = vor.u32 %v2374, 8388608
  %v2376 = vsub.s32 0, %v2375
  %v2377 = vadd.s32 %v2372, 1
  %vm2378 = vcmp.gt.s32.totalorder %v2377, 0
  %v2379 = vsel %vm2378, %v2377, 0
  %v2380 = vshrl.u32 %v2379, 5
  %v2381 = vand.u32 %v2379, 31
  %v2382 = vsub.s32 32, %v2381
  %v2383 = vshrl.u32 683565275, %v2382
  %v2384 = vshll.u32 683565275, %v2381
  %v2385 = vshrl.u32 2475754826, %v2382
  %v2386 = vor.u32 %v2384, %v2385
  %v2387 = vshll.u32 2475754826, %v2381
  %v2388 = vshrl.u32 2131351028, %v2382
  %v2389 = vor.u32 %v2387, %v2388
  %v2390 = vshll.u32 2131351028, %v2381
  %v2391 = vshrl.u32 2102212464, %v2382
  %v2392 = vor.u32 %v2390, %v2391
  %v2393 = vshll.u32 2102212464, %v2381
  %v2394 = vshrl.u32 920167782, %v2382
  %v2395 = vor.u32 %v2393, %v2394
  %v2396 = vshll.u32 920167782, %v2381
  %v2397 = vshrl.u32 1326507024, %v2382
  %v2398 = vor.u32 %v2396, %v2397
  %vm2399 = vcmp.lt.s32.totalorder %v2380, 1
  %vm2400 = vcmp.lt.s32.totalorder %v2380, 2
  %vm2401 = vcmp.lt.s32.totalorder %v2380, 3
  %vm2402 = vcmp.lt.s32.totalorder %v2380, 4
  %v2403 = vsel %vm2399, %v2383, %v2386
  %v2404 = vsel %vm2402, %v2392, 2102212464
  %v2405 = vsel %vm2401, %v2389, %v2404
  %v2406 = vsel %vm2400, %v2403, %v2405
  %v2407 = vsel %vm2399, %v2386, %v2389
  %v2408 = vsel %vm2402, %v2395, 920167782
  %v2409 = vsel %vm2401, %v2392, %v2408
  %v2410 = vsel %vm2400, %v2407, %v2409
  %v2411 = vsel %vm2399, %v2389, %v2392
  %v2412 = vsel %vm2402, %v2398, 1326507024
  %v2413 = vsel %vm2401, %v2395, %v2412
  %v2414 = vsel %vm2400, %v2411, %v2413
  %v2415 = vshll.u32 %v2375, 8
  %v2416 = vand.u32 %v2415, 65535
  %v2417 = vshrl.u32 %v2415, 16
  %v2418 = vand.u32 %v2414, 65535
  %v2419 = vshrl.u32 %v2414, 16
  %v2420 = vmul.u32 %v2416, %v2418
  %v2421 = vmul.u32 %v2416, %v2419
  %v2422 = vmul.u32 %v2417, %v2418
  %v2423 = vmul.u32 %v2417, %v2419
  %v2424 = vshll.u32 %v2421, 16
  %v2425 = vshrl.u32 %v2421, 16
  %v2426 = vshll.u32 %v2422, 16
  %v2427 = vshrl.u32 %v2422, 16
  %vm2428 = vc.u32 %v2420, %v2424
  %v2429 = vsel %vm2428, 1, 0
  %v2430 = vadd.s32 %v2420, %v2424
  %v2431 = vadd.s32 %v2423, %v2429
  %vm2432 = vc.u32 %v2430, %v2426
  %v2433 = vsel %vm2432, 1, 0
  %v2434 = vadd.s32 %v2430, %v2426
  %v2435 = vadd.s32 %v2431, %v2433
  %v2436 = vadd.s32 %v2435, %v2425
  %v2437 = vadd.s32 %v2436, %v2427
  %v2438 = vand.u32 %v2415, 65535
  %v2439 = vshrl.u32 %v2415, 16
  %v2440 = vand.u32 %v2410, 65535
  %v2441 = vshrl.u32 %v2410, 16
  %v2442 = vmul.u32 %v2438, %v2440
  %v2443 = vmul.u32 %v2438, %v2441
  %v2444 = vmul.u32 %v2439, %v2440
  %v2445 = vmul.u32 %v2439, %v2441
  %v2446 = vshll.u32 %v2443, 16
  %v2447 = vshrl.u32 %v2443, 16
  %v2448 = vshll.u32 %v2444, 16
  %v2449 = vshrl.u32 %v2444, 16
  %vm2450 = vc.u32 %v2442, %v2446
  %v2451 = vsel %vm2450, 1, 0
  %v2452 = vadd.s32 %v2442, %v2446
  %v2453 = vadd.s32 %v2445, %v2451
  %vm2454 = vc.u32 %v2452, %v2448
  %v2455 = vsel %vm2454, 1, 0
  %v2456 = vadd.s32 %v2452, %v2448
  %v2457 = vadd.s32 %v2453, %v2455
  %v2458 = vadd.s32 %v2457, %v2447
  %v2459 = vadd.s32 %v2458, %v2449
  %v2460 = vmul.u32 %v2415, %v2406
  %v2461 = vadd.s32 %v2437, %v2456
  %vm2462 = vc.u32 %v2437, %v2456
  %v2463 = vadd.s32 %v2459, 1
  %v2464 = vsel %vm2462, %v2463, %v2459
  %v2465 = vadd.s32 %v2460, %v2464
  %v2466 = vadd.s32 %v2465, 536870912
  %v2467 = vshrl.u32 %v2466, 30
  %v2468 = vshll.u32 %v2467, 30
  %v2469 = vsub.s32 %v2465, %v2468
  %vm2470 = vcmp.lt.s32.totalorder %v2469, 0
  %v2471 = vsub.s32 0, %v2469
  %v2472 = vsel %vm2470, %v2471, %v2469
  %v2473 = vclz %v2472
  %v2474 = vsub.s32 %v2473, 2
  %vm2475 = vcmp.gt.s32.totalorder 0, %v2474
  %v2476 = vsel %vm2475, 0, %v2474
  %v2477 = vsub.s32 32, %v2476
  %v2478 = vshll.u32 %v2469, %v2476
  %v2479 = vshrl.u32 %v2461, %v2477
  %v2480 = vor.u32 %v2478, %v2479
  %v2481 = vsub.s32 4294967266, %v2476
  %v2482 = vadd.s32 %v2481, 127
  %v2483 = vshll.u32 %v2482, 23
  %v2484 = vor.u32 4788187, %v2483
  %v2485 = vand.u32 2147483647, %v2484
  %v2487 = vcvt.s32.f32 %v2480
  %v2488 = vmul.f32 %v2487, %v2485
  %v2489 = vxor.u32 %v2488, 2147483648
  %v2490 = vsel %vm2369, %v2489, %v2488
  %v2491 = vsub.s32 4, %v2467
  %v2492 = vsel %vm2369, %v2491, %v2467
  %v2493 = vsel %vm2368, %v188, %v2490
  %v2494 = vsel %vm2368, 0, %v2492
  %v2495 = vmul.f32 %v2493, %v2493
  %v2496 = vmul.f32 %v2495, -0.001358992
  %v2497 = vadd.f32 %v2496, 0.041655596
  %v2498 = vmul.f32 %v2495, %v2497
  %v2499 = vadd.f32 %v2498, -0.4999988
  %v2500 = vmul.f32 %v2495, %v2499
  %v2501 = vadd.f32 1.0, %v2500
  %v2502 = vmul.f32 %v2493, %v2493
  %v2503 = vmul.f32 %v2502, -0.00019511016
  %v2504 = vadd.f32 %v2503, 0.008332121
  %v2505 = vmul.f32 %v2502, %v2504
  %v2506 = vadd.f32 %v2505, -0.16666654
  %v2507 = vmul.f32 %v2502, %v2506
  %v2508 = vadd.f32 %v2507, 1.0
  %v2509 = vmul.f32 %v2508, %v2493
  %vm2510 = vweird.f32 %v188
  %v2511 = vand.u32 %v2494, 3
  %vm2512 = vcmp.lt.s32.totalorder %v2511, 2
  %vm2513 = vcmp.eq.s32.totalorder %v2511, 0
  %v2514 = vxor.u32 %v2509, 2147483648
  %v2515 = vsel %vm2513, %v2501, %v2514
  %vm2516 = vcmp.eq.s32.totalorder %v2511, 2
  %v2517 = vxor.u32 %v2501, 2147483648
  %v2518 = vsel %vm2516, %v2517, %v2509
  %v2519 = vsel %vm2512, %v2515, %v2518
  %v2520 = vsel %vm2510, nan, %v2519
  %v2521 = vand.u32 2147483647, %v191
  %vm2522 = vcmp.le.f32.partialorder %v2521, 0.7853982
  %vm2523 = vcmp.lt.s32.totalorder %v191, 0
  %v2524 = vand.u32 %v191, 2139095040
  %v2525 = vshrl.u32 %v2524, 23
  %v2526 = vsub.s32 %v2525, 127
  %v2527 = vand.u32 2147483647, %v191
  %v2528 = vand.u32 %v2527, 8388607
  %v2529 = vor.u32 %v2528, 8388608
  %v2530 = vsub.s32 0, %v2529
  %v2531 = vadd.s32 %v2526, 1
  %vm2532 = vcmp.gt.s32.totalorder %v2531, 0
  %v2533 = vsel %vm2532, %v2531, 0
  %v2534 = vshrl.u32 %v2533, 5
  %v2535 = vand.u32 %v2533, 31
  %v2536 = vsub.s32 32, %v2535
  %v2537 = vshrl.u32 683565275, %v2536
  %v2538 = vshll.u32 683565275, %v2535
  %v2539 = vshrl.u32 2475754826, %v2536
  %v2540 = vor.u32 %v2538, %v2539
  %v2541 = vshll.u32 2475754826, %v2535
  %v2542 = vshrl.u32 2131351028, %v2536
  %v2543 = vor.u32 %v2541, %v2542
  %v2544 = vshll.u32 2131351028, %v2535
  %v2545 = vshrl.u32 2102212464, %v2536
  %v2546 = vor.u32 %v2544, %v2545
  %v2547 = vshll.u32 2102212464, %v2535
  %v2548 = vshrl.u32 920167782, %v2536
  %v2549 = vor.u32 %v2547, %v2548
  %v2550 = vshll.u32 920167782, %v2535
  %v2551 = vshrl.u32 1326507024, %v2536
  %v2552 = vor.u32 %v2550, %v2551
  %vm2553 = vcmp.lt.s32.totalorder %v2534, 1
  %vm2554 = vcmp.lt.s32.totalorder %v2534, 2
  %vm2555 = vcmp.lt.s32.totalorder %v2534, 3
  %vm2556 = vcmp.lt.s32.totalorder %v2534, 4
  %v2557 = vsel %vm2553, %v2537, %v2540
  %v2558 = vsel %vm2556, %v2546, 2102212464
  %v2559 = vsel %vm2555, %v2543, %v2558
  %v2560 = vsel %vm2554, %v2557, %v2559
  %v2561 = vsel %vm2553, %v2540, %v2543
  %v2562 = vsel %vm2556, %v2549, 920167782
  %v2563 = vsel %vm2555, %v2546, %v2562
  %v2564 = vsel %vm2554, %v2561, %v2563
  %v2565 = vsel %vm2553, %v2543, %v2546
  %v2566 = vsel %vm2556, %v2552, 1326507024
  %v2567 = vsel %vm2555, %v2549, %v2566
  %v2568 = vsel %vm2554, %v2565, %v2567
  %v2569 = vshll.u32 %v2529, 8
  %v2570 = vand.u32 %v2569, 65535
  %v2571 = vshrl.u32 %v2569, 16
  %v2572 = vand.u32 %v2568, 65535
  %v2573 = vshrl.u32 %v2568, 16
  %v2574 = vmul.u32 %v2570, %v2572
  %v2575 = vmul.u32 %v2570, %v2573
  %v2576 = vmul.u32 %v2571, %v2572
  %v2577 = vmul.u32 %v2571, %v2573
  %v2578 = vshll.u32 %v2575, 16
  %v2579 = vshrl.u32 %v2575, 16
  %v2580 = vshll.u32 %v2576, 16
  %v2581 = vshrl.u32 %v2576, 16
  %vm2582 = vc.u32 %v2574, %v2578
  %v2583 = vsel %vm2582, 1, 0
  %v2584 = vadd.s32 %v2574, %v2578
  %v2585 = vadd.s32 %v2577, %v2583
  %vm2586 = vc.u32 %v2584, %v2580
  %v2587 = vsel %vm2586, 1, 0
  %v2588 = vadd.s32 %v2584, %v2580
  %v2589 = vadd.s32 %v2585, %v2587
  %v2590 = vadd.s32 %v2589, %v2579
  %v2591 = vadd.s32 %v2590, %v2581
  %v2592 = vand.u32 %v2569, 65535
  %v2593 = vshrl.u32 %v2569, 16
  %v2594 = vand.u32 %v2564, 65535
  %v2595 = vshrl.u32 %v2564, 16
  %v2596 = vmul.u32 %v2592, %v2594
  %v2597 = vmul.u32 %v2592, %v2595
  %v2598 = vmul.u32 %v2593, %v2594
  %v2599 = vmul.u32 %v2593, %v2595
  %v2600 = vshll.u32 %v2597, 16
  %v2601 = vshrl.u32 %v2597, 16
  %v2602 = vshll.u32 %v2598, 16
  %v2603 = vshrl.u32 %v2598, 16
  %vm2604 = vc.u32 %v2596, %v2600
  %v2605 = vsel %vm2604, 1, 0
  %v2606 = vadd.s32 %v2596, %v2600
  %v2607 = vadd.s32 %v2599, %v2605
  %vm2608 = vc.u32 %v2606, %v2602
  %v2609 = vsel %vm2608, 1, 0
  %v2610 = vadd.s32 %v2606, %v2602
  %v2611 = vadd.s32 %v2607, %v2609
  %v2612 = vadd.s32 %v2611, %v2601
  %v2613 = vadd.s32 %v2612, %v2603
  %v2614 = vmul.u32 %v2569, %v2560
  %v2615 = vadd.s32 %v2591, %v2610
  %vm2616 = vc.u32 %v2591, %v2610
  %v2617 = vadd.s32 %v2613, 1
  %v2618 = vsel %vm2616, %v2617, %v2613
  %v2619 = vadd.s32 %v2614, %v2618
  %v2620 = vadd.s32 %v2619, 536870912
  %v2621 = vshrl.u32 %v2620, 30
  %v2622 = vshll.u32 %v2621, 30
  %v2623 = vsub.s32 %v2619, %v2622
  %vm2624 = vcmp.lt.s32.totalorder %v2623, 0
  %v2625 = vsub.s32 0, %v2623
  %v2626 = vsel %vm2624, %v2625, %v2623
  %v2627 = vclz %v2626
  %v2628 = vsub.s32 %v2627, 2
  %vm2629 = vcmp.gt.s32.totalorder 0, %v2628
  %v2630 = vsel %vm2629, 0, %v2628
  %v2631 = vsub.s32 32, %v2630
  %v2632 = vshll.u32 %v2623, %v2630
  %v2633 = vshrl.u32 %v2615, %v2631
  %v2634 = vor.u32 %v2632, %v2633
  %v2635 = vsub.s32 4294967266, %v2630
  %v2636 = vadd.s32 %v2635, 127
  %v2637 = vshll.u32 %v2636, 23
  %v2638 = vor.u32 4788187, %v2637
  %v2639 = vand.u32 2147483647, %v2638
  %v2641 = vcvt.s32.f32 %v2634
  %v2642 = vmul.f32 %v2641, %v2639
  %v2643 = vxor.u32 %v2642, 2147483648
  %v2644 = vsel %vm2523, %v2643, %v2642
  %v2645 = vsub.s32 4, %v2621
  %v2646 = vsel %vm2523, %v2645, %v2621
  %v2647 = vsel %vm2522, %v191, %v2644
  %v2648 = vsel %vm2522, 0, %v2646
  %v2649 = vmul.f32 %v2647, %v2647
  %v2650 = vmul.f32 %v2649, -0.001358992
  %v2651 = vadd.f32 %v2650, 0.041655596
  %v2652 = vmul.f32 %v2649, %v2651
  %v2653 = vadd.f32 %v2652, -0.4999988
  %v2654 = vmul.f32 %v2649, %v2653
  %v2655 = vadd.f32 1.0, %v2654
  %v2656 = vmul.f32 %v2647, %v2647
  %v2657 = vmul.f32 %v2656, -0.00019511016
  %v2658 = vadd.f32 %v2657, 0.008332121
  %v2659 = vmul.f32 %v2656, %v2658
  %v2660 = vadd.f32 %v2659, -0.16666654
  %v2661 = vmul.f32 %v2656, %v2660
  %v2662 = vadd.f32 %v2661, 1.0
  %v2663 = vmul.f32 %v2662, %v2647
  %vm2664 = vweird.f32 %v191
  %v2665 = vand.u32 %v2648, 3
  %vm2666 = vcmp.lt.s32.totalorder %v2665, 2
  %vm2667 = vcmp.eq.s32.totalorder %v2665, 0
  %v2668 = vxor.u32 %v2663, 2147483648
  %v2669 = vsel %vm2667, %v2655, %v2668
  %vm2670 = vcmp.eq.s32.totalorder %v2665, 2
  %v2671 = vxor.u32 %v2655, 2147483648
  %v2672 = vsel %vm2670, %v2671, %v2663
  %v2673 = vsel %vm2666, %v2669, %v2672
  %v2674 = vsel %vm2664, nan, %v2673
  %v2675 = vand.u32 2147483647, %v194
  %vm2676 = vcmp.le.f32.partialorder %v2675, 0.7853982
  %vm2677 = vcmp.lt.s32.totalorder %v194, 0
  %v2678 = vand.u32 %v194, 2139095040
  %v2679 = vshrl.u32 %v2678, 23
  %v2680 = vsub.s32 %v2679, 127
  %v2681 = vand.u32 2147483647, %v194
  %v2682 = vand.u32 %v2681, 8388607
  %v2683 = vor.u32 %v2682, 8388608
  %v2684 = vsub.s32 0, %v2683
  %v2685 = vadd.s32 %v2680, 1
  %vm2686 = vcmp.gt.s32.totalorder %v2685, 0
  %v2687 = vsel %vm2686, %v2685, 0
  %v2688 = vshrl.u32 %v2687, 5
  %v2689 = vand.u32 %v2687, 31
  %v2690 = vsub.s32 32, %v2689
  %v2691 = vshrl.u32 683565275, %v2690
  %v2692 = vshll.u32 683565275, %v2689
  %v2693 = vshrl.u32 2475754826, %v2690
  %v2694 = vor.u32 %v2692, %v2693
  %v2695 = vshll.u32 2475754826, %v2689
  %v2696 = vshrl.u32 2131351028, %v2690
  %v2697 = vor.u32 %v2695, %v2696
  %v2698 = vshll.u32 2131351028, %v2689
  %v2699 = vshrl.u32 2102212464, %v2690
  %v2700 = vor.u32 %v2698, %v2699
  %v2701 = vshll.u32 2102212464, %v2689
  %v2702 = vshrl.u32 920167782, %v2690
  %v2703 = vor.u32 %v2701, %v2702
  %v2704 = vshll.u32 920167782, %v2689
  %v2705 = vshrl.u32 1326507024, %v2690
  %v2706 = vor.u32 %v2704, %v2705
  %vm2707 = vcmp.lt.s32.totalorder %v2688, 1
  %vm2708 = vcmp.lt.s32.totalorder %v2688, 2
  %vm2709 = vcmp.lt.s32.totalorder %v2688, 3
  %vm2710 = vcmp.lt.s32.totalorder %v2688, 4
  %v2711 = vsel %vm2707, %v2691, %v2694
  %v2712 = vsel %vm2710, %v2700, 2102212464
  %v2713 = vsel %vm2709, %v2697, %v2712
  %v2714 = vsel %vm2708, %v2711, %v2713
  %v2715 = vsel %vm2707, %v2694, %v2697
  %v2716 = vsel %vm2710, %v2703, 920167782
  %v2717 = vsel %vm2709, %v2700, %v2716
  %v2718 = vsel %vm2708, %v2715, %v2717
  %v2719 = vsel %vm2707, %v2697, %v2700
  %v2720 = vsel %vm2710, %v2706, 1326507024
  %v2721 = vsel %vm2709, %v2703, %v2720
  %v2722 = vsel %vm2708, %v2719, %v2721
  %v2723 = vshll.u32 %v2683, 8
  %v2724 = vand.u32 %v2723, 65535
  %v2725 = vshrl.u32 %v2723, 16
  %v2726 = vand.u32 %v2722, 65535
  %v2727 = vshrl.u32 %v2722, 16
  %v2728 = vmul.u32 %v2724, %v2726
  %v2729 = vmul.u32 %v2724, %v2727
  %v2730 = vmul.u32 %v2725, %v2726
  %v2731 = vmul.u32 %v2725, %v2727
  %v2732 = vshll.u32 %v2729, 16
  %v2733 = vshrl.u32 %v2729, 16
  %v2734 = vshll.u32 %v2730, 16
  %v2735 = vshrl.u32 %v2730, 16
  %vm2736 = vc.u32 %v2728, %v2732
  %v2737 = vsel %vm2736, 1, 0
  %v2738 = vadd.s32 %v2728, %v2732
  %v2739 = vadd.s32 %v2731, %v2737
  %vm2740 = vc.u32 %v2738, %v2734
  %v2741 = vsel %vm2740, 1, 0
  %v2742 = vadd.s32 %v2738, %v2734
  %v2743 = vadd.s32 %v2739, %v2741
  %v2744 = vadd.s32 %v2743, %v2733
  %v2745 = vadd.s32 %v2744, %v2735
  %v2746 = vand.u32 %v2723, 65535
  %v2747 = vshrl.u32 %v2723, 16
  %v2748 = vand.u32 %v2718, 65535
  %v2749 = vshrl.u32 %v2718, 16
  %v2750 = vmul.u32 %v2746, %v2748
  %v2751 = vmul.u32 %v2746, %v2749
  %v2752 = vmul.u32 %v2747, %v2748
  %v2753 = vmul.u32 %v2747, %v2749
  %v2754 = vshll.u32 %v2751, 16
  %v2755 = vshrl.u32 %v2751, 16
  %v2756 = vshll.u32 %v2752, 16
  %v2757 = vshrl.u32 %v2752, 16
  %vm2758 = vc.u32 %v2750, %v2754
  %v2759 = vsel %vm2758, 1, 0
  %v2760 = vadd.s32 %v2750, %v2754
  %v2761 = vadd.s32 %v2753, %v2759
  %vm2762 = vc.u32 %v2760, %v2756
  %v2763 = vsel %vm2762, 1, 0
  %v2764 = vadd.s32 %v2760, %v2756
  %v2765 = vadd.s32 %v2761, %v2763
  %v2766 = vadd.s32 %v2765, %v2755
  %v2767 = vadd.s32 %v2766, %v2757
  %v2768 = vmul.u32 %v2723, %v2714
  %v2769 = vadd.s32 %v2745, %v2764
  %vm2770 = vc.u32 %v2745, %v2764
  %v2771 = vadd.s32 %v2767, 1
  %v2772 = vsel %vm2770, %v2771, %v2767
  %v2773 = vadd.s32 %v2768, %v2772
  %v2774 = vadd.s32 %v2773, 536870912
  %v2775 = vshrl.u32 %v2774, 30
  %v2776 = vshll.u32 %v2775, 30
  %v2777 = vsub.s32 %v2773, %v2776
  %vm2778 = vcmp.lt.s32.totalorder %v2777, 0
  %v2779 = vsub.s32 0, %v2777
  %v2780 = vsel %vm2778, %v2779, %v2777
  %v2781 = vclz %v2780
  %v2782 = vsub.s32 %v2781, 2
  %vm2783 = vcmp.gt.s32.totalorder 0, %v2782
  %v2784 = vsel %vm2783, 0, %v2782
  %v2785 = vsub.s32 32, %v2784
  %v2786 = vshll.u32 %v2777, %v2784
  %v2787 = vshrl.u32 %v2769, %v2785
  %v2788 = vor.u32 %v2786, %v2787
  %v2789 = vsub.s32 4294967266, %v2784
  %v2790 = vadd.s32 %v2789, 127
  %v2791 = vshll.u32 %v2790, 23
  %v2792 = vor.u32 4788187, %v2791
  %v2793 = vand.u32 2147483647, %v2792
  %v2795 = vcvt.s32.f32 %v2788
  %v2796 = vmul.f32 %v2795, %v2793
  %v2797 = vxor.u32 %v2796, 2147483648
  %v2798 = vsel %vm2677, %v2797, %v2796
  %v2799 = vsub.s32 4, %v2775
  %v2800 = vsel %vm2677, %v2799, %v2775
  %v2801 = vsel %vm2676, %v194, %v2798
  %v2802 = vsel %vm2676, 0, %v2800
  %v2803 = vmul.f32 %v2801, %v2801
  %v2804 = vmul.f32 %v2803, -0.001358992
  %v2805 = vadd.f32 %v2804, 0.041655596
  %v2806 = vmul.f32 %v2803, %v2805
  %v2807 = vadd.f32 %v2806, -0.4999988
  %v2808 = vmul.f32 %v2803, %v2807
  %v2809 = vadd.f32 1.0, %v2808
  %v2810 = vmul.f32 %v2801, %v2801
  %v2811 = vmul.f32 %v2810, -0.00019511016
  %v2812 = vadd.f32 %v2811, 0.008332121
  %v2813 = vmul.f32 %v2810, %v2812
  %v2814 = vadd.f32 %v2813, -0.16666654
  %v2815 = vmul.f32 %v2810, %v2814
  %v2816 = vadd.f32 %v2815, 1.0
  %v2817 = vmul.f32 %v2816, %v2801
  %vm2818 = vweird.f32 %v194
  %v2819 = vand.u32 %v2802, 3
  %vm2820 = vcmp.lt.s32.totalorder %v2819, 2
  %vm2821 = vcmp.eq.s32.totalorder %v2819, 0
  %v2822 = vxor.u32 %v2817, 2147483648
  %v2823 = vsel %vm2821, %v2809, %v2822
  %vm2824 = vcmp.eq.s32.totalorder %v2819, 2
  %v2825 = vxor.u32 %v2809, 2147483648
  %v2826 = vsel %vm2824, %v2825, %v2817
  %v2827 = vsel %vm2820, %v2823, %v2826
  %v2828 = vsel %vm2818, nan, %v2827
  %v2829 = vand.u32 2147483647, %v197
  %vm2830 = vcmp.le.f32.partialorder %v2829, 0.7853982
  %vm2831 = vcmp.lt.s32.totalorder %v197, 0
  %v2832 = vand.u32 %v197, 2139095040
  %v2833 = vshrl.u32 %v2832, 23
  %v2834 = vsub.s32 %v2833, 127
  %v2835 = vand.u32 2147483647, %v197
  %v2836 = vand.u32 %v2835, 8388607
  %v2837 = vor.u32 %v2836, 8388608
  %v2838 = vsub.s32 0, %v2837
  %v2839 = vadd.s32 %v2834, 1
  %vm2840 = vcmp.gt.s32.totalorder %v2839, 0
  %v2841 = vsel %vm2840, %v2839, 0
  %v2842 = vshrl.u32 %v2841, 5
  %v2843 = vand.u32 %v2841, 31
  %v2844 = vsub.s32 32, %v2843
  %v2845 = vshrl.u32 683565275, %v2844
  %v2846 = vshll.u32 683565275, %v2843
  %v2847 = vshrl.u32 2475754826, %v2844
  %v2848 = vor.u32 %v2846, %v2847
  %v2849 = vshll.u32 2475754826, %v2843
  %v2850 = vshrl.u32 2131351028, %v2844
  %v2851 = vor.u32 %v2849, %v2850
  %v2852 = vshll.u32 2131351028, %v2843
  %v2853 = vshrl.u32 2102212464, %v2844
  %v2854 = vor.u32 %v2852, %v2853
  %v2855 = vshll.u32 2102212464, %v2843
  %v2856 = vshrl.u32 920167782, %v2844
  %v2857 = vor.u32 %v2855, %v2856
  %v2858 = vshll.u32 920167782, %v2843
  %v2859 = vshrl.u32 1326507024, %v2844
  %v2860 = vor.u32 %v2858, %v2859
  %vm2861 = vcmp.lt.s32.totalorder %v2842, 1
  %vm2862 = vcmp.lt.s32.totalorder %v2842, 2
  %vm2863 = vcmp.lt.s32.totalorder %v2842, 3
  %vm2864 = vcmp.lt.s32.totalorder %v2842, 4
  %v2865 = vsel %vm2861, %v2845, %v2848
  %v2866 = vsel %vm2864, %v2854, 2102212464
  %v2867 = vsel %vm2863, %v2851, %v2866
  %v2868 = vsel %vm2862, %v2865, %v2867
  %v2869 = vsel %vm2861, %v2848, %v2851
  %v2870 = vsel %vm2864, %v2857, 920167782
  %v2871 = vsel %vm2863, %v2854, %v2870
  %v2872 = vsel %vm2862, %v2869, %v2871
  %v2873 = vsel %vm2861, %v2851, %v2854
  %v2874 = vsel %vm2864, %v2860, 1326507024
  %v2875 = vsel %vm2863, %v2857, %v2874
  %v2876 = vsel %vm2862, %v2873, %v2875
  %v2877 = vshll.u32 %v2837, 8
  %v2878 = vand.u32 %v2877, 65535
  %v2879 = vshrl.u32 %v2877, 16
  %v2880 = vand.u32 %v2876, 65535
  %v2881 = vshrl.u32 %v2876, 16
  %v2882 = vmul.u32 %v2878, %v2880
  %v2883 = vmul.u32 %v2878, %v2881
  %v2884 = vmul.u32 %v2879, %v2880
  %v2885 = vmul.u32 %v2879, %v2881
  %v2886 = vshll.u32 %v2883, 16
  %v2887 = vshrl.u32 %v2883, 16
  %v2888 = vshll.u32 %v2884, 16
  %v2889 = vshrl.u32 %v2884, 16
  %vm2890 = vc.u32 %v2882, %v2886
  %v2891 = vsel %vm2890, 1, 0
  %v2892 = vadd.s32 %v2882, %v2886
  %v2893 = vadd.s32 %v2885, %v2891
  %vm2894 = vc.u32 %v2892, %v2888
  %v2895 = vsel %vm2894, 1, 0
  %v2896 = vadd.s32 %v2892, %v2888
  %v2897 = vadd.s32 %v2893, %v2895
  %v2898 = vadd.s32 %v2897, %v2887
  %v2899 = vadd.s32 %v2898, %v2889
  %v2900 = vand.u32 %v2877, 65535
  %v2901 = vshrl.u32 %v2877, 16
  %v2902 = vand.u32 %v2872, 65535
  %v2903 = vshrl.u32 %v2872, 16
  %v2904 = vmul.u32 %v2900, %v2902
  %v2905 = vmul.u32 %v2900, %v2903
  %v2906 = vmul.u32 %v2901, %v2902
  %v2907 = vmul.u32 %v2901, %v2903
  %v2908 = vshll.u32 %v2905, 16
  %v2909 = vshrl.u32 %v2905, 16
  %v2910 = vshll.u32 %v2906, 16
  %v2911 = vshrl.u32 %v2906, 16
  %vm2912 = vc.u32 %v2904, %v2908
  %v2913 = vsel %vm2912, 1, 0
  %v2914 = vadd.s32 %v2904, %v2908
  %v2915 = vadd.s32 %v2907, %v2913
  %vm2916 = vc.u32 %v2914, %v2910
  %v2917 = vsel %vm2916, 1, 0
  %v2918 = vadd.s32 %v2914, %v2910
  %v2919 = vadd.s32 %v2915, %v2917
  %v2920 = vadd.s32 %v2919, %v2909
  %v2921 = vadd.s32 %v2920, %v2911
  %v2922 = vmul.u32 %v2877, %v2868
  %v2923 = vadd.s32 %v2899, %v2918
  %vm2924 = vc.u32 %v2899, %v2918
  %v2925 = vadd.s32 %v2921, 1
  %v2926 = vsel %vm2924, %v2925, %v2921
  %v2927 = vadd.s32 %v2922, %v2926
  %v2928 = vadd.s32 %v2927, 536870912
  %v2929 = vshrl.u32 %v2928, 30
  %v2930 = vshll.u32 %v2929, 30
  %v2931 = vsub.s32 %v2927, %v2930
  %vm2932 = vcmp.lt.s32.totalorder %v2931, 0
  %v2933 = vsub.s32 0, %v2931
  %v2934 = vsel %vm2932, %v2933, %v2931
  %v2935 = vclz %v2934
  %v2936 = vsub.s32 %v2935, 2
  %vm2937 = vcmp.gt.s32.totalorder 0, %v2936
  %v2938 = vsel %vm2937, 0, %v2936
  %v2939 = vsub.s32 32, %v2938
  %v2940 = vshll.u32 %v2931, %v2938
  %v2941 = vshrl.u32 %v2923, %v2939
  %v2942 = vor.u32 %v2940, %v2941
  %v2943 = vsub.s32 4294967266, %v2938
  %v2944 = vadd.s32 %v2943, 127
  %v2945 = vshll.u32 %v2944, 23
  %v2946 = vor.u32 4788187, %v2945
  %v2947 = vand.u32 2147483647, %v2946
  %v2949 = vcvt.s32.f32 %v2942
  %v2950 = vmul.f32 %v2949, %v2947
  %v2951 = vxor.u32 %v2950, 2147483648
  %v2952 = vsel %vm2831, %v2951, %v2950
  %v2953 = vsub.s32 4, %v2929
  %v2954 = vsel %vm2831, %v2953, %v2929
  %v2955 = vsel %vm2830, %v197, %v2952
  %v2956 = vsel %vm2830, 0, %v2954
  %v2957 = vmul.f32 %v2955, %v2955
  %v2958 = vmul.f32 %v2957, -0.001358992
  %v2959 = vadd.f32 %v2958, 0.041655596
  %v2960 = vmul.f32 %v2957, %v2959
  %v2961 = vadd.f32 %v2960, -0.4999988
  %v2962 = vmul.f32 %v2957, %v2961
  %v2963 = vadd.f32 1.0, %v2962
  %v2964 = vmul.f32 %v2955, %v2955
  %v2965 = vmul.f32 %v2964, -0.00019511016
  %v2966 = vadd.f32 %v2965, 0.008332121
  %v2967 = vmul.f32 %v2964, %v2966
  %v2968 = vadd.f32 %v2967, -0.16666654
  %v2969 = vmul.f32 %v2964, %v2968
  %v2970 = vadd.f32 %v2969, 1.0
  %v2971 = vmul.f32 %v2970, %v2955
  %vm2972 = vweird.f32 %v197
  %v2973 = vand.u32 %v2956, 3
  %vm2974 = vcmp.lt.s32.totalorder %v2973, 2
  %vm2975 = vcmp.eq.s32.totalorder %v2973, 0
  %v2976 = vxor.u32 %v2971, 2147483648
  %v2977 = vsel %vm2975, %v2963, %v2976
  %vm2978 = vcmp.eq.s32.totalorder %v2973, 2
  %v2979 = vxor.u32 %v2963, 2147483648
  %v2980 = vsel %vm2978, %v2979, %v2971
  %v2981 = vsel %vm2974, %v2977, %v2980
  %v2982 = vsel %vm2972, nan, %v2981
  %v2983 = vand.u32 2147483647, %v200
  %vm2984 = vcmp.le.f32.partialorder %v2983, 0.7853982
  %vm2985 = vcmp.lt.s32.totalorder %v200, 0
  %v2986 = vand.u32 %v200, 2139095040
  %v2987 = vshrl.u32 %v2986, 23
  %v2988 = vsub.s32 %v2987, 127
  %v2989 = vand.u32 2147483647, %v200
  %v2990 = vand.u32 %v2989, 8388607
  %v2991 = vor.u32 %v2990, 8388608
  %v2992 = vsub.s32 0, %v2991
  %v2993 = vadd.s32 %v2988, 1
  %vm2994 = vcmp.gt.s32.totalorder %v2993, 0
  %v2995 = vsel %vm2994, %v2993, 0
  %v2996 = vshrl.u32 %v2995, 5
  %v2997 = vand.u32 %v2995, 31
  %v2998 = vsub.s32 32, %v2997
  %v2999 = vshrl.u32 683565275, %v2998
  %v3000 = vshll.u32 683565275, %v2997
  %v3001 = vshrl.u32 2475754826, %v2998
  %v3002 = vor.u32 %v3000, %v3001
  %v3003 = vshll.u32 2475754826, %v2997
  %v3004 = vshrl.u32 2131351028, %v2998
  %v3005 = vor.u32 %v3003, %v3004
  %v3006 = vshll.u32 2131351028, %v2997
  %v3007 = vshrl.u32 2102212464, %v2998
  %v3008 = vor.u32 %v3006, %v3007
  %v3009 = vshll.u32 2102212464, %v2997
  %v3010 = vshrl.u32 920167782, %v2998
  %v3011 = vor.u32 %v3009, %v3010
  %v3012 = vshll.u32 920167782, %v2997
  %v3013 = vshrl.u32 1326507024, %v2998
  %v3014 = vor.u32 %v3012, %v3013
  %vm3015 = vcmp.lt.s32.totalorder %v2996, 1
  %vm3016 = vcmp.lt.s32.totalorder %v2996, 2
  %vm3017 = vcmp.lt.s32.totalorder %v2996, 3
  %vm3018 = vcmp.lt.s32.totalorder %v2996, 4
  %v3019 = vsel %vm3015, %v2999, %v3002
  %v3020 = vsel %vm3018, %v3008, 2102212464
  %v3021 = vsel %vm3017, %v3005, %v3020
  %v3022 = vsel %vm3016, %v3019, %v3021
  %v3023 = vsel %vm3015, %v3002, %v3005
  %v3024 = vsel %vm3018, %v3011, 920167782
  %v3025 = vsel %vm3017, %v3008, %v3024
  %v3026 = vsel %vm3016, %v3023, %v3025
  %v3027 = vsel %vm3015, %v3005, %v3008
  %v3028 = vsel %vm3018, %v3014, 1326507024
  %v3029 = vsel %vm3017, %v3011, %v3028
  %v3030 = vsel %vm3016, %v3027, %v3029
  %v3031 = vshll.u32 %v2991, 8
  %v3032 = vand.u32 %v3031, 65535
  %v3033 = vshrl.u32 %v3031, 16
  %v3034 = vand.u32 %v3030, 65535
  %v3035 = vshrl.u32 %v3030, 16
  %v3036 = vmul.u32 %v3032, %v3034
  %v3037 = vmul.u32 %v3032, %v3035
  %v3038 = vmul.u32 %v3033, %v3034
  %v3039 = vmul.u32 %v3033, %v3035
  %v3040 = vshll.u32 %v3037, 16
  %v3041 = vshrl.u32 %v3037, 16
  %v3042 = vshll.u32 %v3038, 16
  %v3043 = vshrl.u32 %v3038, 16
  %vm3044 = vc.u32 %v3036, %v3040
  %v3045 = vsel %vm3044, 1, 0
  %v3046 = vadd.s32 %v3036, %v3040
  %v3047 = vadd.s32 %v3039, %v3045
  %vm3048 = vc.u32 %v3046, %v3042
  %v3049 = vsel %vm3048, 1, 0
  %v3050 = vadd.s32 %v3046, %v3042
  %v3051 = vadd.s32 %v3047, %v3049
  %v3052 = vadd.s32 %v3051, %v3041
  %v3053 = vadd.s32 %v3052, %v3043
  %v3054 = vand.u32 %v3031, 65535
  %v3055 = vshrl.u32 %v3031, 16
  %v3056 = vand.u32 %v3026, 65535
  %v3057 = vshrl.u32 %v3026, 16
  %v3058 = vmul.u32 %v3054, %v3056
  %v3059 = vmul.u32 %v3054, %v3057
  %v3060 = vmul.u32 %v3055, %v3056
  %v3061 = vmul.u32 %v3055, %v3057
  %v3062 = vshll.u32 %v3059, 16
  %v3063 = vshrl.u32 %v3059, 16
  %v3064 = vshll.u32 %v3060, 16
  %v3065 = vshrl.u32 %v3060, 16
  %vm3066 = vc.u32 %v3058, %v3062
  %v3067 = vsel %vm3066, 1, 0
  %v3068 = vadd.s32 %v3058, %v3062
  %v3069 = vadd.s32 %v3061, %v3067
  %vm3070 = vc.u32 %v3068, %v3064
  %v3071 = vsel %vm3070, 1, 0
  %v3072 = vadd.s32 %v3068, %v3064
  %v3073 = vadd.s32 %v3069, %v3071
  %v3074 = vadd.s32 %v3073, %v3063
  %v3075 = vadd.s32 %v3074, %v3065
  %v3076 = vmul.u32 %v3031, %v3022
  %v3077 = vadd.s32 %v3053, %v3072
  %vm3078 = vc.u32 %v3053, %v3072
  %v3079 = vadd.s32 %v3075, 1
  %v3080 = vsel %vm3078, %v3079, %v3075
  %v3081 = vadd.s32 %v3076, %v3080
  %v3082 = vadd.s32 %v3081, 536870912
  %v3083 = vshrl.u32 %v3082, 30
  %v3084 = vshll.u32 %v3083, 30
  %v3085 = vsub.s32 %v3081, %v3084
  %vm3086 = vcmp.lt.s32.totalorder %v3085, 0
  %v3087 = vsub.s32 0, %v3085
  %v3088 = vsel %vm3086, %v3087, %v3085
  %v3089 = vclz %v3088
  %v3090 = vsub.s32 %v3089, 2
  %vm3091 = vcmp.gt.s32.totalorder 0, %v3090
  %v3092 = vsel %vm3091, 0, %v3090
  %v3093 = vsub.s32 32, %v3092
  %v3094 = vshll.u32 %v3085, %v3092
  %v3095 = vshrl.u32 %v3077, %v3093
  %v3096 = vor.u32 %v3094, %v3095
  %v3097 = vsub.s32 4294967266, %v3092
  %v3098 = vadd.s32 %v3097, 127
  %v3099 = vshll.u32 %v3098, 23
  %v3100 = vor.u32 4788187, %v3099
  %v3101 = vand.u32 2147483647, %v3100
  %v3103 = vcvt.s32.f32 %v3096
  %v3104 = vmul.f32 %v3103, %v3101
  %v3105 = vxor.u32 %v3104, 2147483648
  %v3106 = vsel %vm2985, %v3105, %v3104
  %v3107 = vsub.s32 4, %v3083
  %v3108 = vsel %vm2985, %v3107, %v3083
  %v3109 = vsel %vm2984, %v200, %v3106
  %v3110 = vsel %vm2984, 0, %v3108
  %v3111 = vmul.f32 %v3109, %v3109
  %v3112 = vmul.f32 %v3111, -0.001358992
  %v3113 = vadd.f32 %v3112, 0.041655596
  %v3114 = vmul.f32 %v3111, %v3113
  %v3115 = vadd.f32 %v3114, -0.4999988
  %v3116 = vmul.f32 %v3111, %v3115
  %v3117 = vadd.f32 1.0, %v3116
  %v3118 = vmul.f32 %v3109, %v3109
  %v3119 = vmul.f32 %v3118, -0.00019511016
  %v3120 = vadd.f32 %v3119, 0.008332121
  %v3121 = vmul.f32 %v3118, %v3120
  %v3122 = vadd.f32 %v3121, -0.16666654
  %v3123 = vmul.f32 %v3118, %v3122
  %v3124 = vadd.f32 %v3123, 1.0
  %v3125 = vmul.f32 %v3124, %v3109
  %vm3126 = vweird.f32 %v200
  %v3127 = vand.u32 %v3110, 3
  %vm3128 = vcmp.lt.s32.totalorder %v3127, 2
  %vm3129 = vcmp.eq.s32.totalorder %v3127, 0
  %v3130 = vxor.u32 %v3125, 2147483648
  %v3131 = vsel %vm3129, %v3117, %v3130
  %vm3132 = vcmp.eq.s32.totalorder %v3127, 2
  %v3133 = vxor.u32 %v3117, 2147483648
  %v3134 = vsel %vm3132, %v3133, %v3125
  %v3135 = vsel %vm3128, %v3131, %v3134
  %v3136 = vsel %vm3126, nan, %v3135
  %v3137 = vand.u32 2147483647, %v203
  %vm3138 = vcmp.le.f32.partialorder %v3137, 0.7853982
  %vm3139 = vcmp.lt.s32.totalorder %v203, 0
  %v3140 = vand.u32 %v203, 2139095040
  %v3141 = vshrl.u32 %v3140, 23
  %v3142 = vsub.s32 %v3141, 127
  %v3143 = vand.u32 2147483647, %v203
  %v3144 = vand.u32 %v3143, 8388607
  %v3145 = vor.u32 %v3144, 8388608
  %v3146 = vsub.s32 0, %v3145
  %v3147 = vadd.s32 %v3142, 1
  %vm3148 = vcmp.gt.s32.totalorder %v3147, 0
  %v3149 = vsel %vm3148, %v3147, 0
  %v3150 = vshrl.u32 %v3149, 5
  %v3151 = vand.u32 %v3149, 31
  %v3152 = vsub.s32 32, %v3151
  %v3153 = vshrl.u32 683565275, %v3152
  %v3154 = vshll.u32 683565275, %v3151
  %v3155 = vshrl.u32 2475754826, %v3152
  %v3156 = vor.u32 %v3154, %v3155
  %v3157 = vshll.u32 2475754826, %v3151
  %v3158 = vshrl.u32 2131351028, %v3152
  %v3159 = vor.u32 %v3157, %v3158
  %v3160 = vshll.u32 2131351028, %v3151
  %v3161 = vshrl.u32 2102212464, %v3152
  %v3162 = vor.u32 %v3160, %v3161
  %v3163 = vshll.u32 2102212464, %v3151
  %v3164 = vshrl.u32 920167782, %v3152
  %v3165 = vor.u32 %v3163, %v3164
  %v3166 = vshll.u32 920167782, %v3151
  %v3167 = vshrl.u32 1326507024, %v3152
  %v3168 = vor.u32 %v3166, %v3167
  %vm3169 = vcmp.lt.s32.totalorder %v3150, 1
  %vm3170 = vcmp.lt.s32.totalorder %v3150, 2
  %vm3171 = vcmp.lt.s32.totalorder %v3150, 3
  %vm3172 = vcmp.lt.s32.totalorder %v3150, 4
  %v3173 = vsel %vm3169, %v3153, %v3156
  %v3174 = vsel %vm3172, %v3162, 2102212464
  %v3175 = vsel %vm3171, %v3159, %v3174
  %v3176 = vsel %vm3170, %v3173, %v3175
  %v3177 = vsel %vm3169, %v3156, %v3159
  %v3178 = vsel %vm3172, %v3165, 920167782
  %v3179 = vsel %vm3171, %v3162, %v3178
  %v3180 = vsel %vm3170, %v3177, %v3179
  %v3181 = vsel %vm3169, %v3159, %v3162
  %v3182 = vsel %vm3172, %v3168, 1326507024
  %v3183 = vsel %vm3171, %v3165, %v3182
  %v3184 = vsel %vm3170, %v3181, %v3183
  %v3185 = vshll.u32 %v3145, 8
  %v3186 = vand.u32 %v3185, 65535
  %v3187 = vshrl.u32 %v3185, 16
  %v3188 = vand.u32 %v3184, 65535
  %v3189 = vshrl.u32 %v3184, 16
  %v3190 = vmul.u32 %v3186, %v3188
  %v3191 = vmul.u32 %v3186, %v3189
  %v3192 = vmul.u32 %v3187, %v3188
  %v3193 = vmul.u32 %v3187, %v3189
  %v3194 = vshll.u32 %v3191, 16
  %v3195 = vshrl.u32 %v3191, 16
  %v3196 = vshll.u32 %v3192, 16
  %v3197 = vshrl.u32 %v3192, 16
  %vm3198 = vc.u32 %v3190, %v3194
  %v3199 = vsel %vm3198, 1, 0
  %v3200 = vadd.s32 %v3190, %v3194
  %v3201 = vadd.s32 %v3193, %v3199
  %vm3202 = vc.u32 %v3200, %v3196
  %v3203 = vsel %vm3202, 1, 0
  %v3204 = vadd.s32 %v3200, %v3196
  %v3205 = vadd.s32 %v3201, %v3203
  %v3206 = vadd.s32 %v3205, %v3195
  %v3207 = vadd.s32 %v3206, %v3197
  %v3208 = vand.u32 %v3185, 65535
  %v3209 = vshrl.u32 %v3185, 16
  %v3210 = vand.u32 %v3180, 65535
  %v3211 = vshrl.u32 %v3180, 16
  %v3212 = vmul.u32 %v3208, %v3210
  %v3213 = vmul.u32 %v3208, %v3211
  %v3214 = vmul.u32 %v3209, %v3210
  %v3215 = vmul.u32 %v3209, %v3211
  %v3216 = vshll.u32 %v3213, 16
  %v3217 = vshrl.u32 %v3213, 16
  %v3218 = vshll.u32 %v3214, 16
  %v3219 = vshrl.u32 %v3214, 16
  %vm3220 = vc.u32 %v3212, %v3216
  %v3221 = vsel %vm3220, 1, 0
  %v3222 = vadd.s32 %v3212, %v3216
  %v3223 = vadd.s32 %v3215, %v3221
  %vm3224 = vc.u32 %v3222, %v3218
  %v3225 = vsel %vm3224, 1, 0
  %v3226 = vadd.s32 %v3222, %v3218
  %v3227 = vadd.s32 %v3223, %v3225
  %v3228 = vadd.s32 %v3227, %v3217
  %v3229 = vadd.s32 %v3228, %v3219
  %v3230 = vmul.u32 %v3185, %v3176
  %v3231 = vadd.s32 %v3207, %v3226
  %vm3232 = vc.u32 %v3207, %v3226
  %v3233 = vadd.s32 %v3229, 1
  %v3234 = vsel %vm3232, %v3233, %v3229
  %v3235 = vadd.s32 %v3230, %v3234
  %v3236 = vadd.s32 %v3235, 536870912
  %v3237 = vshrl.u32 %v3236, 30
  %v3238 = vshll.u32 %v3237, 30
  %v3239 = vsub.s32 %v3235, %v3238
  %vm3240 = vcmp.lt.s32.totalorder %v3239, 0
  %v3241 = vsub.s32 0, %v3239
  %v3242 = vsel %vm3240, %v3241, %v3239
  %v3243 = vclz %v3242
  %v3244 = vsub.s32 %v3243, 2
  %vm3245 = vcmp.gt.s32.totalorder 0, %v3244
  %v3246 = vsel %vm3245, 0, %v3244
  %v3247 = vsub.s32 32, %v3246
  %v3248 = vshll.u32 %v3239, %v3246
  %v3249 = vshrl.u32 %v3231, %v3247
  %v3250 = vor.u32 %v3248, %v3249
  %v3251 = vsub.s32 4294967266, %v3246
  %v3252 = vadd.s32 %v3251, 127
  %v3253 = vshll.u32 %v3252, 23
  %v3254 = vor.u32 4788187, %v3253
  %v3255 = vand.u32 2147483647, %v3254
  %v3257 = vcvt.s32.f32 %v3250
  %v3258 = vmul.f32 %v3257, %v3255
  %v3259 = vxor.u32 %v3258, 2147483648
  %v3260 = vsel %vm3139, %v3259, %v3258
  %v3261 = vsub.s32 4, %v3237
  %v3262 = vsel %vm3139, %v3261, %v3237
  %v3263 = vsel %vm3138, %v203, %v3260
  %v3264 = vsel %vm3138, 0, %v3262
  %v3265 = vmul.f32 %v3263, %v3263
  %v3266 = vmul.f32 %v3265, -0.001358992
  %v3267 = vadd.f32 %v3266, 0.041655596
  %v3268 = vmul.f32 %v3265, %v3267
  %v3269 = vadd.f32 %v3268, -0.4999988
  %v3270 = vmul.f32 %v3265, %v3269
  %v3271 = vadd.f32 1.0, %v3270
  %v3272 = vmul.f32 %v3263, %v3263
  %v3273 = vmul.f32 %v3272, -0.00019511016
  %v3274 = vadd.f32 %v3273, 0.008332121
  %v3275 = vmul.f32 %v3272, %v3274
  %v3276 = vadd.f32 %v3275, -0.16666654
  %v3277 = vmul.f32 %v3272, %v3276
  %v3278 = vadd.f32 %v3277, 1.0
  %v3279 = vmul.f32 %v3278, %v3263
  %vm3280 = vweird.f32 %v203
  %v3281 = vand.u32 %v3264, 3
  %vm3282 = vcmp.lt.s32.totalorder %v3281, 2
  %vm3283 = vcmp.eq.s32.totalorder %v3281, 0
  %v3284 = vxor.u32 %v3279, 2147483648
  %v3285 = vsel %vm3283, %v3271, %v3284
  %vm3286 = vcmp.eq.s32.totalorder %v3281, 2
  %v3287 = vxor.u32 %v3271, 2147483648
  %v3288 = vsel %vm3286, %v3287, %v3279
  %v3289 = vsel %vm3282, %v3285, %v3288
  %v3290 = vsel %vm3280, nan, %v3289
  %v3291 = vand.u32 2147483647, %v206
  %vm3292 = vcmp.le.f32.partialorder %v3291, 0.7853982
  %vm3293 = vcmp.lt.s32.totalorder %v206, 0
  %v3294 = vand.u32 %v206, 2139095040
  %v3295 = vshrl.u32 %v3294, 23
  %v3296 = vsub.s32 %v3295, 127
  %v3297 = vand.u32 2147483647, %v206
  %v3298 = vand.u32 %v3297, 8388607
  %v3299 = vor.u32 %v3298, 8388608
  %v3300 = vsub.s32 0, %v3299
  %v3301 = vadd.s32 %v3296, 1
  %vm3302 = vcmp.gt.s32.totalorder %v3301, 0
  %v3303 = vsel %vm3302, %v3301, 0
  %v3304 = vshrl.u32 %v3303, 5
  %v3305 = vand.u32 %v3303, 31
  %v3306 = vsub.s32 32, %v3305
  %v3307 = vshrl.u32 683565275, %v3306
  %v3308 = vshll.u32 683565275, %v3305
  %v3309 = vshrl.u32 2475754826, %v3306
  %v3310 = vor.u32 %v3308, %v3309
  %v3311 = vshll.u32 2475754826, %v3305
  %v3312 = vshrl.u32 2131351028, %v3306
  %v3313 = vor.u32 %v3311, %v3312
  %v3314 = vshll.u32 2131351028, %v3305
  %v3315 = vshrl.u32 2102212464, %v3306
  %v3316 = vor.u32 %v3314, %v3315
  %v3317 = vshll.u32 2102212464, %v3305
  %v3318 = vshrl.u32 920167782, %v3306
  %v3319 = vor.u32 %v3317, %v3318
  %v3320 = vshll.u32 920167782, %v3305
  %v3321 = vshrl.u32 1326507024, %v3306
  %v3322 = vor.u32 %v3320, %v3321
  %vm3323 = vcmp.lt.s32.totalorder %v3304, 1
  %vm3324 = vcmp.lt.s32.totalorder %v3304, 2
  %vm3325 = vcmp.lt.s32.totalorder %v3304, 3
  %vm3326 = vcmp.lt.s32.totalorder %v3304, 4
  %v3327 = vsel %vm3323, %v3307, %v3310
  %v3328 = vsel %vm3326, %v3316, 2102212464
  %v3329 = vsel %vm3325, %v3313, %v3328
  %v3330 = vsel %vm3324, %v3327, %v3329
  %v3331 = vsel %vm3323, %v3310, %v3313
  %v3332 = vsel %vm3326, %v3319, 920167782
  %v3333 = vsel %vm3325, %v3316, %v3332
  %v3334 = vsel %vm3324, %v3331, %v3333
  %v3335 = vsel %vm3323, %v3313, %v3316
  %v3336 = vsel %vm3326, %v3322, 1326507024
  %v3337 = vsel %vm3325, %v3319, %v3336
  %v3338 = vsel %vm3324, %v3335, %v3337
  %v3339 = vshll.u32 %v3299, 8
  %v3340 = vand.u32 %v3339, 65535
  %v3341 = vshrl.u32 %v3339, 16
  %v3342 = vand.u32 %v3338, 65535
  %v3343 = vshrl.u32 %v3338, 16
  %v3344 = vmul.u32 %v3340, %v3342
  %v3345 = vmul.u32 %v3340, %v3343
  %v3346 = vmul.u32 %v3341, %v3342
  %v3347 = vmul.u32 %v3341, %v3343
  %v3348 = vshll.u32 %v3345, 16
  %v3349 = vshrl.u32 %v3345, 16
  %v3350 = vshll.u32 %v3346, 16
  %v3351 = vshrl.u32 %v3346, 16
  %vm3352 = vc.u32 %v3344, %v3348
  %v3353 = vsel %vm3352, 1, 0
  %v3354 = vadd.s32 %v3344, %v3348
  %v3355 = vadd.s32 %v3347, %v3353
  %vm3356 = vc.u32 %v3354, %v3350
  %v3357 = vsel %vm3356, 1, 0
  %v3358 = vadd.s32 %v3354, %v3350
  %v3359 = vadd.s32 %v3355, %v3357
  %v3360 = vadd.s32 %v3359, %v3349
  %v3361 = vadd.s32 %v3360, %v3351
  %v3362 = vand.u32 %v3339, 65535
  %v3363 = vshrl.u32 %v3339, 16
  %v3364 = vand.u32 %v3334, 65535
  %v3365 = vshrl.u32 %v3334, 16
  %v3366 = vmul.u32 %v3362, %v3364
  %v3367 = vmul.u32 %v3362, %v3365
  %v3368 = vmul.u32 %v3363, %v3364
  %v3369 = vmul.u32 %v3363, %v3365
  %v3370 = vshll.u32 %v3367, 16
  %v3371 = vshrl.u32 %v3367, 16
  %v3372 = vshll.u32 %v3368, 16
  %v3373 = vshrl.u32 %v3368, 16
  %vm3374 = vc.u32 %v3366, %v3370
  %v3375 = vsel %vm3374, 1, 0
  %v3376 = vadd.s32 %v3366, %v3370
  %v3377 = vadd.s32 %v3369, %v3375
  %vm3378 = vc.u32 %v3376, %v3372
  %v3379 = vsel %vm3378, 1, 0
  %v3380 = vadd.s32 %v3376, %v3372
  %v3381 = vadd.s32 %v3377, %v3379
  %v3382 = vadd.s32 %v3381, %v3371
  %v3383 = vadd.s32 %v3382, %v3373
  %v3384 = vmul.u32 %v3339, %v3330
  %v3385 = vadd.s32 %v3361, %v3380
  %vm3386 = vc.u32 %v3361, %v3380
  %v3387 = vadd.s32 %v3383, 1
  %v3388 = vsel %vm3386, %v3387, %v3383
  %v3389 = vadd.s32 %v3384, %v3388
  %v3390 = vadd.s32 %v3389, 536870912
  %v3391 = vshrl.u32 %v3390, 30
  %v3392 = vshll.u32 %v3391, 30
  %v3393 = vsub.s32 %v3389, %v3392
  %vm3394 = vcmp.lt.s32.totalorder %v3393, 0
  %v3395 = vsub.s32 0, %v3393
  %v3396 = vsel %vm3394, %v3395, %v3393
  %v3397 = vclz %v3396
  %v3398 = vsub.s32 %v3397, 2
  %vm3399 = vcmp.gt.s32.totalorder 0, %v3398
  %v3400 = vsel %vm3399, 0, %v3398
  %v3401 = vsub.s32 32, %v3400
  %v3402 = vshll.u32 %v3393, %v3400
  %v3403 = vshrl.u32 %v3385, %v3401
  %v3404 = vor.u32 %v3402, %v3403
  %v3405 = vsub.s32 4294967266, %v3400
  %v3406 = vadd.s32 %v3405, 127
  %v3407 = vshll.u32 %v3406, 23
  %v3408 = vor.u32 4788187, %v3407
  %v3409 = vand.u32 2147483647, %v3408
  %v3411 = vcvt.s32.f32 %v3404
  %v3412 = vmul.f32 %v3411, %v3409
  %v3413 = vxor.u32 %v3412, 2147483648
  %v3414 = vsel %vm3293, %v3413, %v3412
  %v3415 = vsub.s32 4, %v3391
  %v3416 = vsel %vm3293, %v3415, %v3391
  %v3417 = vsel %vm3292, %v206, %v3414
  %v3418 = vsel %vm3292, 0, %v3416
  %v3419 = vmul.f32 %v3417, %v3417
  %v3420 = vmul.f32 %v3419, -0.001358992
  %v3421 = vadd.f32 %v3420, 0.041655596
  %v3422 = vmul.f32 %v3419, %v3421
  %v3423 = vadd.f32 %v3422, -0.4999988
  %v3424 = vmul.f32 %v3419, %v3423
  %v3425 = vadd.f32 1.0, %v3424
  %v3426 = vmul.f32 %v3417, %v3417
  %v3427 = vmul.f32 %v3426, -0.00019511016
  %v3428 = vadd.f32 %v3427, 0.008332121
  %v3429 = vmul.f32 %v3426, %v3428
  %v3430 = vadd.f32 %v3429, -0.16666654
  %v3431 = vmul.f32 %v3426, %v3430
  %v3432 = vadd.f32 %v3431, 1.0
  %v3433 = vmul.f32 %v3432, %v3417
  %vm3434 = vweird.f32 %v206
  %v3435 = vand.u32 %v3418, 3
  %vm3436 = vcmp.lt.s32.totalorder %v3435, 2
  %vm3437 = vcmp.eq.s32.totalorder %v3435, 0
  %v3438 = vxor.u32 %v3433, 2147483648
  %v3439 = vsel %vm3437, %v3425, %v3438
  %vm3440 = vcmp.eq.s32.totalorder %v3435, 2
  %v3441 = vxor.u32 %v3425, 2147483648
  %v3442 = vsel %vm3440, %v3441, %v3433
  %v3443 = vsel %vm3436, %v3439, %v3442
  %v3444 = vsel %vm3434, nan, %v3443
  %v3445 = vand.u32 2147483647, %v209
  %vm3446 = vcmp.le.f32.partialorder %v3445, 0.7853982
  %vm3447 = vcmp.lt.s32.totalorder %v209, 0
  %v3448 = vand.u32 %v209, 2139095040
  %v3449 = vshrl.u32 %v3448, 23
  %v3450 = vsub.s32 %v3449, 127
  %v3451 = vand.u32 2147483647, %v209
  %v3452 = vand.u32 %v3451, 8388607
  %v3453 = vor.u32 %v3452, 8388608
  %v3454 = vsub.s32 0, %v3453
  %v3455 = vadd.s32 %v3450, 1
  %vm3456 = vcmp.gt.s32.totalorder %v3455, 0
  %v3457 = vsel %vm3456, %v3455, 0
  %v3458 = vshrl.u32 %v3457, 5
  %v3459 = vand.u32 %v3457, 31
  %v3460 = vsub.s32 32, %v3459
  %v3461 = vshrl.u32 683565275, %v3460
  %v3462 = vshll.u32 683565275, %v3459
  %v3463 = vshrl.u32 2475754826, %v3460
  %v3464 = vor.u32 %v3462, %v3463
  %v3465 = vshll.u32 2475754826, %v3459
  %v3466 = vshrl.u32 2131351028, %v3460
  %v3467 = vor.u32 %v3465, %v3466
  %v3468 = vshll.u32 2131351028, %v3459
  %v3469 = vshrl.u32 2102212464, %v3460
  %v3470 = vor.u32 %v3468, %v3469
  %v3471 = vshll.u32 2102212464, %v3459
  %v3472 = vshrl.u32 920167782, %v3460
  %v3473 = vor.u32 %v3471, %v3472
  %v3474 = vshll.u32 920167782, %v3459
  %v3475 = vshrl.u32 1326507024, %v3460
  %v3476 = vor.u32 %v3474, %v3475
  %vm3477 = vcmp.lt.s32.totalorder %v3458, 1
  %vm3478 = vcmp.lt.s32.totalorder %v3458, 2
  %vm3479 = vcmp.lt.s32.totalorder %v3458, 3
  %vm3480 = vcmp.lt.s32.totalorder %v3458, 4
  %v3481 = vsel %vm3477, %v3461, %v3464
  %v3482 = vsel %vm3480, %v3470, 2102212464
  %v3483 = vsel %vm3479, %v3467, %v3482
  %v3484 = vsel %vm3478, %v3481, %v3483
  %v3485 = vsel %vm3477, %v3464, %v3467
  %v3486 = vsel %vm3480, %v3473, 920167782
  %v3487 = vsel %vm3479, %v3470, %v3486
  %v3488 = vsel %vm3478, %v3485, %v3487
  %v3489 = vsel %vm3477, %v3467, %v3470
  %v3490 = vsel %vm3480, %v3476, 1326507024
  %v3491 = vsel %vm3479, %v3473, %v3490
  %v3492 = vsel %vm3478, %v3489, %v3491
  %v3493 = vshll.u32 %v3453, 8
  %v3494 = vand.u32 %v3493, 65535
  %v3495 = vshrl.u32 %v3493, 16
  %v3496 = vand.u32 %v3492, 65535
  %v3497 = vshrl.u32 %v3492, 16
  %v3498 = vmul.u32 %v3494, %v3496
  %v3499 = vmul.u32 %v3494, %v3497
  %v3500 = vmul.u32 %v3495, %v3496
  %v3501 = vmul.u32 %v3495, %v3497
  %v3502 = vshll.u32 %v3499, 16
  %v3503 = vshrl.u32 %v3499, 16
  %v3504 = vshll.u32 %v3500, 16
  %v3505 = vshrl.u32 %v3500, 16
  %vm3506 = vc.u32 %v3498, %v3502
  %v3507 = vsel %vm3506, 1, 0
  %v3508 = vadd.s32 %v3498, %v3502
  %v3509 = vadd.s32 %v3501, %v3507
  %vm3510 = vc.u32 %v3508, %v3504
  %v3511 = vsel %vm3510, 1, 0
  %v3512 = vadd.s32 %v3508, %v3504
  %v3513 = vadd.s32 %v3509, %v3511
  %v3514 = vadd.s32 %v3513, %v3503
  %v3515 = vadd.s32 %v3514, %v3505
  %v3516 = vand.u32 %v3493, 65535
  %v3517 = vshrl.u32 %v3493, 16
  %v3518 = vand.u32 %v3488, 65535
  %v3519 = vshrl.u32 %v3488, 16
  %v3520 = vmul.u32 %v3516, %v3518
  %v3521 = vmul.u32 %v3516, %v3519
  %v3522 = vmul.u32 %v3517, %v3518
  %v3523 = vmul.u32 %v3517, %v3519
  %v3524 = vshll.u32 %v3521, 16
  %v3525 = vshrl.u32 %v3521, 16
  %v3526 = vshll.u32 %v3522, 16
  %v3527 = vshrl.u32 %v3522, 16
  %vm3528 = vc.u32 %v3520, %v3524
  %v3529 = vsel %vm3528, 1, 0
  %v3530 = vadd.s32 %v3520, %v3524
  %v3531 = vadd.s32 %v3523, %v3529
  %vm3532 = vc.u32 %v3530, %v3526
  %v3533 = vsel %vm3532, 1, 0
  %v3534 = vadd.s32 %v3530, %v3526
  %v3535 = vadd.s32 %v3531, %v3533
  %v3536 = vadd.s32 %v3535, %v3525
  %v3537 = vadd.s32 %v3536, %v3527
  %v3538 = vmul.u32 %v3493, %v3484
  %v3539 = vadd.s32 %v3515, %v3534
  %vm3540 = vc.u32 %v3515, %v3534
  %v3541 = vadd.s32 %v3537, 1
  %v3542 = vsel %vm3540, %v3541, %v3537
  %v3543 = vadd.s32 %v3538, %v3542
  %v3544 = vadd.s32 %v3543, 536870912
  %v3545 = vshrl.u32 %v3544, 30
  %v3546 = vshll.u32 %v3545, 30
  %v3547 = vsub.s32 %v3543, %v3546
  %vm3548 = vcmp.lt.s32.totalorder %v3547, 0
  %v3549 = vsub.s32 0, %v3547
  %v3550 = vsel %vm3548, %v3549, %v3547
  %v3551 = vclz %v3550
  %v3552 = vsub.s32 %v3551, 2
  %vm3553 = vcmp.gt.s32.totalorder 0, %v3552
  %v3554 = vsel %vm3553, 0, %v3552
  %v3555 = vsub.s32 32, %v3554
  %v3556 = vshll.u32 %v3547, %v3554
  %v3557 = vshrl.u32 %v3539, %v3555
  %v3558 = vor.u32 %v3556, %v3557
  %v3559 = vsub.s32 4294967266, %v3554
  %v3560 = vadd.s32 %v3559, 127
  %v3561 = vshll.u32 %v3560, 23
  %v3562 = vor.u32 4788187, %v3561
  %v3563 = vand.u32 2147483647, %v3562
  %v3565 = vcvt.s32.f32 %v3558
  %v3566 = vmul.f32 %v3565, %v3563
  %v3567 = vxor.u32 %v3566, 2147483648
  %v3568 = vsel %vm3447, %v3567, %v3566
  %v3569 = vsub.s32 4, %v3545
  %v3570 = vsel %vm3447, %v3569, %v3545
  %v3571 = vsel %vm3446, %v209, %v3568
  %v3572 = vsel %vm3446, 0, %v3570
  %v3573 = vmul.f32 %v3571, %v3571
  %v3574 = vmul.f32 %v3573, -0.001358992
  %v3575 = vadd.f32 %v3574, 0.041655596
  %v3576 = vmul.f32 %v3573, %v3575
  %v3577 = vadd.f32 %v3576, -0.4999988
  %v3578 = vmul.f32 %v3573, %v3577
  %v3579 = vadd.f32 1.0, %v3578
  %v3580 = vmul.f32 %v3571, %v3571
  %v3581 = vmul.f32 %v3580, -0.00019511016
  %v3582 = vadd.f32 %v3581, 0.008332121
  %v3583 = vmul.f32 %v3580, %v3582
  %v3584 = vadd.f32 %v3583, -0.16666654
  %v3585 = vmul.f32 %v3580, %v3584
  %v3586 = vadd.f32 %v3585, 1.0
  %v3587 = vmul.f32 %v3586, %v3571
  %vm3588 = vweird.f32 %v209
  %v3589 = vand.u32 %v3572, 3
  %vm3590 = vcmp.lt.s32.totalorder %v3589, 2
  %vm3591 = vcmp.eq.s32.totalorder %v3589, 0
  %v3592 = vxor.u32 %v3587, 2147483648
  %v3593 = vsel %vm3591, %v3579, %v3592
  %vm3594 = vcmp.eq.s32.totalorder %v3589, 2
  %v3595 = vxor.u32 %v3579, 2147483648
  %v3596 = vsel %vm3594, %v3595, %v3587
  %v3597 = vsel %vm3590, %v3593, %v3596
  %v3598 = vsel %vm3588, nan, %v3597
  %v3599 = vand.u32 2147483647, %v212
  %vm3600 = vcmp.le.f32.partialorder %v3599, 0.7853982
  %vm3601 = vcmp.lt.s32.totalorder %v212, 0
  %v3602 = vand.u32 %v212, 2139095040
  %v3603 = vshrl.u32 %v3602, 23
  %v3604 = vsub.s32 %v3603, 127
  %v3605 = vand.u32 2147483647, %v212
  %v3606 = vand.u32 %v3605, 8388607
  %v3607 = vor.u32 %v3606, 8388608
  %v3608 = vsub.s32 0, %v3607
  %v3609 = vadd.s32 %v3604, 1
  %vm3610 = vcmp.gt.s32.totalorder %v3609, 0
  %v3611 = vsel %vm3610, %v3609, 0
  %v3612 = vshrl.u32 %v3611, 5
  %v3613 = vand.u32 %v3611, 31
  %v3614 = vsub.s32 32, %v3613
  %v3615 = vshrl.u32 683565275, %v3614
  %v3616 = vshll.u32 683565275, %v3613
  %v3617 = vshrl.u32 2475754826, %v3614
  %v3618 = vor.u32 %v3616, %v3617
  %v3619 = vshll.u32 2475754826, %v3613
  %v3620 = vshrl.u32 2131351028, %v3614
  %v3621 = vor.u32 %v3619, %v3620
  %v3622 = vshll.u32 2131351028, %v3613
  %v3623 = vshrl.u32 2102212464, %v3614
  %v3624 = vor.u32 %v3622, %v3623
  %v3625 = vshll.u32 2102212464, %v3613
  %v3626 = vshrl.u32 920167782, %v3614
  %v3627 = vor.u32 %v3625, %v3626
  %v3628 = vshll.u32 920167782, %v3613
  %v3629 = vshrl.u32 1326507024, %v3614
  %v3630 = vor.u32 %v3628, %v3629
  %vm3631 = vcmp.lt.s32.totalorder %v3612, 1
  %vm3632 = vcmp.lt.s32.totalorder %v3612, 2
  %vm3633 = vcmp.lt.s32.totalorder %v3612, 3
  %vm3634 = vcmp.lt.s32.totalorder %v3612, 4
  %v3635 = vsel %vm3631, %v3615, %v3618
  %v3636 = vsel %vm3634, %v3624, 2102212464
  %v3637 = vsel %vm3633, %v3621, %v3636
  %v3638 = vsel %vm3632, %v3635, %v3637
  %v3639 = vsel %vm3631, %v3618, %v3621
  %v3640 = vsel %vm3634, %v3627, 920167782
  %v3641 = vsel %vm3633, %v3624, %v3640
  %v3642 = vsel %vm3632, %v3639, %v3641
  %v3643 = vsel %vm3631, %v3621, %v3624
  %v3644 = vsel %vm3634, %v3630, 1326507024
  %v3645 = vsel %vm3633, %v3627, %v3644
  %v3646 = vsel %vm3632, %v3643, %v3645
  %v3647 = vshll.u32 %v3607, 8
  %v3648 = vand.u32 %v3647, 65535
  %v3649 = vshrl.u32 %v3647, 16
  %v3650 = vand.u32 %v3646, 65535
  %v3651 = vshrl.u32 %v3646, 16
  %v3652 = vmul.u32 %v3648, %v3650
  %v3653 = vmul.u32 %v3648, %v3651
  %v3654 = vmul.u32 %v3649, %v3650
  %v3655 = vmul.u32 %v3649, %v3651
  %v3656 = vshll.u32 %v3653, 16
  %v3657 = vshrl.u32 %v3653, 16
  %v3658 = vshll.u32 %v3654, 16
  %v3659 = vshrl.u32 %v3654, 16
  %vm3660 = vc.u32 %v3652, %v3656
  %v3661 = vsel %vm3660, 1, 0
  %v3662 = vadd.s32 %v3652, %v3656
  %v3663 = vadd.s32 %v3655, %v3661
  %vm3664 = vc.u32 %v3662, %v3658
  %v3665 = vsel %vm3664, 1, 0
  %v3666 = vadd.s32 %v3662, %v3658
  %v3667 = vadd.s32 %v3663, %v3665
  %v3668 = vadd.s32 %v3667, %v3657
  %v3669 = vadd.s32 %v3668, %v3659
  %v3670 = vand.u32 %v3647, 65535
  %v3671 = vshrl.u32 %v3647, 16
  %v3672 = vand.u32 %v3642, 65535
  %v3673 = vshrl.u32 %v3642, 16
  %v3674 = vmul.u32 %v3670, %v3672
  %v3675 = vmul.u32 %v3670, %v3673
  %v3676 = vmul.u32 %v3671, %v3672
  %v3677 = vmul.u32 %v3671, %v3673
  %v3678 = vshll.u32 %v3675, 16
  %v3679 = vshrl.u32 %v3675, 16
  %v3680 = vshll.u32 %v3676, 16
  %v3681 = vshrl.u32 %v3676, 16
  %vm3682 = vc.u32 %v3674, %v3678
  %v3683 = vsel %vm3682, 1, 0
  %v3684 = vadd.s32 %v3674, %v3678
  %v3685 = vadd.s32 %v3677, %v3683
  %vm3686 = vc.u32 %v3684, %v3680
  %v3687 = vsel %vm3686, 1, 0
  %v3688 = vadd.s32 %v3684, %v3680
  %v3689 = vadd.s32 %v3685, %v3687
  %v3690 = vadd.s32 %v3689, %v3679
  %v3691 = vadd.s32 %v3690, %v3681
  %v3692 = vmul.u32 %v3647, %v3638
  %v3693 = vadd.s32 %v3669, %v3688
  %vm3694 = vc.u32 %v3669, %v3688
  %v3695 = vadd.s32 %v3691, 1
  %v3696 = vsel %vm3694, %v3695, %v3691
  %v3697 = vadd.s32 %v3692, %v3696
  %v3698 = vadd.s32 %v3697, 536870912
  %v3699 = vshrl.u32 %v3698, 30
  %v3700 = vshll.u32 %v3699, 30
  %v3701 = vsub.s32 %v3697, %v3700
  %vm3702 = vcmp.lt.s32.totalorder %v3701, 0
  %v3703 = vsub.s32 0, %v3701
  %v3704 = vsel %vm3702, %v3703, %v3701
  %v3705 = vclz %v3704
  %v3706 = vsub.s32 %v3705, 2
  %vm3707 = vcmp.gt.s32.totalorder 0, %v3706
  %v3708 = vsel %vm3707, 0, %v3706
  %v3709 = vsub.s32 32, %v3708
  %v3710 = vshll.u32 %v3701, %v3708
  %v3711 = vshrl.u32 %v3693, %v3709
  %v3712 = vor.u32 %v3710, %v3711
  %v3713 = vsub.s32 4294967266, %v3708
  %v3714 = vadd.s32 %v3713, 127
  %v3715 = vshll.u32 %v3714, 23
  %v3716 = vor.u32 4788187, %v3715
  %v3717 = vand.u32 2147483647, %v3716
  %v3719 = vcvt.s32.f32 %v3712
  %v3720 = vmul.f32 %v3719, %v3717
  %v3721 = vxor.u32 %v3720, 2147483648
  %v3722 = vsel %vm3601, %v3721, %v3720
  %v3723 = vsub.s32 4, %v3699
  %v3724 = vsel %vm3601, %v3723, %v3699
  %v3725 = vsel %vm3600, %v212, %v3722
  %v3726 = vsel %vm3600, 0, %v3724
  %v3727 = vmul.f32 %v3725, %v3725
  %v3728 = vmul.f32 %v3727, -0.001358992
  %v3729 = vadd.f32 %v3728, 0.041655596
  %v3730 = vmul.f32 %v3727, %v3729
  %v3731 = vadd.f32 %v3730, -0.4999988
  %v3732 = vmul.f32 %v3727, %v3731
  %v3733 = vadd.f32 1.0, %v3732
  %v3734 = vmul.f32 %v3725, %v3725
  %v3735 = vmul.f32 %v3734, -0.00019511016
  %v3736 = vadd.f32 %v3735, 0.008332121
  %v3737 = vmul.f32 %v3734, %v3736
  %v3738 = vadd.f32 %v3737, -0.16666654
  %v3739 = vmul.f32 %v3734, %v3738
  %v3740 = vadd.f32 %v3739, 1.0
  %v3741 = vmul.f32 %v3740, %v3725
  %vm3742 = vweird.f32 %v212
  %v3743 = vand.u32 %v3726, 3
  %vm3744 = vcmp.lt.s32.totalorder %v3743, 2
  %vm3745 = vcmp.eq.s32.totalorder %v3743, 0
  %v3746 = vxor.u32 %v3741, 2147483648
  %v3747 = vsel %vm3745, %v3733, %v3746
  %vm3748 = vcmp.eq.s32.totalorder %v3743, 2
  %v3749 = vxor.u32 %v3733, 2147483648
  %v3750 = vsel %vm3748, %v3749, %v3741
  %v3751 = vsel %vm3744, %v3747, %v3750
  %v3752 = vsel %vm3742, nan, %v3751
  %v3753 = vand.u32 2147483647, %v215
  %vm3754 = vcmp.le.f32.partialorder %v3753, 0.7853982
  %vm3755 = vcmp.lt.s32.totalorder %v215, 0
  %v3756 = vand.u32 %v215, 2139095040
  %v3757 = vshrl.u32 %v3756, 23
  %v3758 = vsub.s32 %v3757, 127
  %v3759 = vand.u32 2147483647, %v215
  %v3760 = vand.u32 %v3759, 8388607
  %v3761 = vor.u32 %v3760, 8388608
  %v3762 = vsub.s32 0, %v3761
  %v3763 = vadd.s32 %v3758, 1
  %vm3764 = vcmp.gt.s32.totalorder %v3763, 0
  %v3765 = vsel %vm3764, %v3763, 0
  %v3766 = vshrl.u32 %v3765, 5
  %v3767 = vand.u32 %v3765, 31
  %v3768 = vsub.s32 32, %v3767
  %v3769 = vshrl.u32 683565275, %v3768
  %v3770 = vshll.u32 683565275, %v3767
  %v3771 = vshrl.u32 2475754826, %v3768
  %v3772 = vor.u32 %v3770, %v3771
  %v3773 = vshll.u32 2475754826, %v3767
  %v3774 = vshrl.u32 2131351028, %v3768
  %v3775 = vor.u32 %v3773, %v3774
  %v3776 = vshll.u32 2131351028, %v3767
  %v3777 = vshrl.u32 2102212464, %v3768
  %v3778 = vor.u32 %v3776, %v3777
  %v3779 = vshll.u32 2102212464, %v3767
  %v3780 = vshrl.u32 920167782, %v3768
  %v3781 = vor.u32 %v3779, %v3780
  %v3782 = vshll.u32 920167782, %v3767
  %v3783 = vshrl.u32 1326507024, %v3768
  %v3784 = vor.u32 %v3782, %v3783
  %vm3785 = vcmp.lt.s32.totalorder %v3766, 1
  %vm3786 = vcmp.lt.s32.totalorder %v3766, 2
  %vm3787 = vcmp.lt.s32.totalorder %v3766, 3
  %vm3788 = vcmp.lt.s32.totalorder %v3766, 4
  %v3789 = vsel %vm3785, %v3769, %v3772
  %v3790 = vsel %vm3788, %v3778, 2102212464
  %v3791 = vsel %vm3787, %v3775, %v3790
  %v3792 = vsel %vm3786, %v3789, %v3791
  %v3793 = vsel %vm3785, %v3772, %v3775
  %v3794 = vsel %vm3788, %v3781, 920167782
  %v3795 = vsel %vm3787, %v3778, %v3794
  %v3796 = vsel %vm3786, %v3793, %v3795
  %v3797 = vsel %vm3785, %v3775, %v3778
  %v3798 = vsel %vm3788, %v3784, 1326507024
  %v3799 = vsel %vm3787, %v3781, %v3798
  %v3800 = vsel %vm3786, %v3797, %v3799
  %v3801 = vshll.u32 %v3761, 8
  %v3802 = vand.u32 %v3801, 65535
  %v3803 = vshrl.u32 %v3801, 16
  %v3804 = vand.u32 %v3800, 65535
  %v3805 = vshrl.u32 %v3800, 16
  %v3806 = vmul.u32 %v3802, %v3804
  %v3807 = vmul.u32 %v3802, %v3805
  %v3808 = vmul.u32 %v3803, %v3804
  %v3809 = vmul.u32 %v3803, %v3805
  %v3810 = vshll.u32 %v3807, 16
  %v3811 = vshrl.u32 %v3807, 16
  %v3812 = vshll.u32 %v3808, 16
  %v3813 = vshrl.u32 %v3808, 16
  %vm3814 = vc.u32 %v3806, %v3810
  %v3815 = vsel %vm3814, 1, 0
  %v3816 = vadd.s32 %v3806, %v3810
  %v3817 = vadd.s32 %v3809, %v3815
  %vm3818 = vc.u32 %v3816, %v3812
  %v3819 = vsel %vm3818, 1, 0
  %v3820 = vadd.s32 %v3816, %v3812
  %v3821 = vadd.s32 %v3817, %v3819
  %v3822 = vadd.s32 %v3821, %v3811
  %v3823 = vadd.s32 %v3822, %v3813
  %v3824 = vand.u32 %v3801, 65535
  %v3825 = vshrl.u32 %v3801, 16
  %v3826 = vand.u32 %v3796, 65535
  %v3827 = vshrl.u32 %v3796, 16
  %v3828 = vmul.u32 %v3824, %v3826
  %v3829 = vmul.u32 %v3824, %v3827
  %v3830 = vmul.u32 %v3825, %v3826
  %v3831 = vmul.u32 %v3825, %v3827
  %v3832 = vshll.u32 %v3829, 16
  %v3833 = vshrl.u32 %v3829, 16
  %v3834 = vshll.u32 %v3830, 16
  %v3835 = vshrl.u32 %v3830, 16
  %vm3836 = vc.u32 %v3828, %v3832
  %v3837 = vsel %vm3836, 1, 0
  %v3838 = vadd.s32 %v3828, %v3832
  %v3839 = vadd.s32 %v3831, %v3837
  %vm3840 = vc.u32 %v3838, %v3834
  %v3841 = vsel %vm3840, 1, 0
  %v3842 = vadd.s32 %v3838, %v3834
  %v3843 = vadd.s32 %v3839, %v3841
  %v3844 = vadd.s32 %v3843, %v3833
  %v3845 = vadd.s32 %v3844, %v3835
  %v3846 = vmul.u32 %v3801, %v3792
  %v3847 = vadd.s32 %v3823, %v3842
  %vm3848 = vc.u32 %v3823, %v3842
  %v3849 = vadd.s32 %v3845, 1
  %v3850 = vsel %vm3848, %v3849, %v3845
  %v3851 = vadd.s32 %v3846, %v3850
  %v3852 = vadd.s32 %v3851, 536870912
  %v3853 = vshrl.u32 %v3852, 30
  %v3854 = vshll.u32 %v3853, 30
  %v3855 = vsub.s32 %v3851, %v3854
  %vm3856 = vcmp.lt.s32.totalorder %v3855, 0
  %v3857 = vsub.s32 0, %v3855
  %v3858 = vsel %vm3856, %v3857, %v3855
  %v3859 = vclz %v3858
  %v3860 = vsub.s32 %v3859, 2
  %vm3861 = vcmp.gt.s32.totalorder 0, %v3860
  %v3862 = vsel %vm3861, 0, %v3860
  %v3863 = vsub.s32 32, %v3862
  %v3864 = vshll.u32 %v3855, %v3862
  %v3865 = vshrl.u32 %v3847, %v3863
  %v3866 = vor.u32 %v3864, %v3865
  %v3867 = vsub.s32 4294967266, %v3862
  %v3868 = vadd.s32 %v3867, 127
  %v3869 = vshll.u32 %v3868, 23
  %v3870 = vor.u32 4788187, %v3869
  %v3871 = vand.u32 2147483647, %v3870
  %v3873 = vcvt.s32.f32 %v3866
  %v3874 = vmul.f32 %v3873, %v3871
  %v3875 = vxor.u32 %v3874, 2147483648
  %v3876 = vsel %vm3755, %v3875, %v3874
  %v3877 = vsub.s32 4, %v3853
  %v3878 = vsel %vm3755, %v3877, %v3853
  %v3879 = vsel %vm3754, %v215, %v3876
  %v3880 = vsel %vm3754, 0, %v3878
  %v3881 = vmul.f32 %v3879, %v3879
  %v3882 = vmul.f32 %v3881, -0.001358992
  %v3883 = vadd.f32 %v3882, 0.041655596
  %v3884 = vmul.f32 %v3881, %v3883
  %v3885 = vadd.f32 %v3884, -0.4999988
  %v3886 = vmul.f32 %v3881, %v3885
  %v3887 = vadd.f32 1.0, %v3886
  %v3888 = vmul.f32 %v3879, %v3879
  %v3889 = vmul.f32 %v3888, -0.00019511016
  %v3890 = vadd.f32 %v3889, 0.008332121
  %v3891 = vmul.f32 %v3888, %v3890
  %v3892 = vadd.f32 %v3891, -0.16666654
  %v3893 = vmul.f32 %v3888, %v3892
  %v3894 = vadd.f32 %v3893, 1.0
  %v3895 = vmul.f32 %v3894, %v3879
  %vm3896 = vweird.f32 %v215
  %v3897 = vand.u32 %v3880, 3
  %vm3898 = vcmp.lt.s32.totalorder %v3897, 2
  %vm3899 = vcmp.eq.s32.totalorder %v3897, 0
  %v3900 = vxor.u32 %v3895, 2147483648
  %v3901 = vsel %vm3899, %v3887, %v3900
  %vm3902 = vcmp.eq.s32.totalorder %v3897, 2
  %v3903 = vxor.u32 %v3887, 2147483648
  %v3904 = vsel %vm3902, %v3903, %v3895
  %v3905 = vsel %vm3898, %v3901, %v3904
  %v3906 = vsel %vm3896, nan, %v3905
  %v3907 = vand.u32 2147483647, %v218
  %vm3908 = vcmp.le.f32.partialorder %v3907, 0.7853982
  %vm3909 = vcmp.lt.s32.totalorder %v218, 0
  %v3910 = vand.u32 %v218, 2139095040
  %v3911 = vshrl.u32 %v3910, 23
  %v3912 = vsub.s32 %v3911, 127
  %v3913 = vand.u32 2147483647, %v218
  %v3914 = vand.u32 %v3913, 8388607
  %v3915 = vor.u32 %v3914, 8388608
  %v3916 = vsub.s32 0, %v3915
  %v3917 = vadd.s32 %v3912, 1
  %vm3918 = vcmp.gt.s32.totalorder %v3917, 0
  %v3919 = vsel %vm3918, %v3917, 0
  %v3920 = vshrl.u32 %v3919, 5
  %v3921 = vand.u32 %v3919, 31
  %v3922 = vsub.s32 32, %v3921
  %v3923 = vshrl.u32 683565275, %v3922
  %v3924 = vshll.u32 683565275, %v3921
  %v3925 = vshrl.u32 2475754826, %v3922
  %v3926 = vor.u32 %v3924, %v3925
  %v3927 = vshll.u32 2475754826, %v3921
  %v3928 = vshrl.u32 2131351028, %v3922
  %v3929 = vor.u32 %v3927, %v3928
  %v3930 = vshll.u32 2131351028, %v3921
  %v3931 = vshrl.u32 2102212464, %v3922
  %v3932 = vor.u32 %v3930, %v3931
  %v3933 = vshll.u32 2102212464, %v3921
  %v3934 = vshrl.u32 920167782, %v3922
  %v3935 = vor.u32 %v3933, %v3934
  %v3936 = vshll.u32 920167782, %v3921
  %v3937 = vshrl.u32 1326507024, %v3922
  %v3938 = vor.u32 %v3936, %v3937
  %vm3939 = vcmp.lt.s32.totalorder %v3920, 1
  %vm3940 = vcmp.lt.s32.totalorder %v3920, 2
  %vm3941 = vcmp.lt.s32.totalorder %v3920, 3
  %vm3942 = vcmp.lt.s32.totalorder %v3920, 4
  %v3943 = vsel %vm3939, %v3923, %v3926
  %v3944 = vsel %vm3942, %v3932, 2102212464
  %v3945 = vsel %vm3941, %v3929, %v3944
  %v3946 = vsel %vm3940, %v3943, %v3945
  %v3947 = vsel %vm3939, %v3926, %v3929
  %v3948 = vsel %vm3942, %v3935, 920167782
  %v3949 = vsel %vm3941, %v3932, %v3948
  %v3950 = vsel %vm3940, %v3947, %v3949
  %v3951 = vsel %vm3939, %v3929, %v3932
  %v3952 = vsel %vm3942, %v3938, 1326507024
  %v3953 = vsel %vm3941, %v3935, %v3952
  %v3954 = vsel %vm3940, %v3951, %v3953
  %v3955 = vshll.u32 %v3915, 8
  %v3956 = vand.u32 %v3955, 65535
  %v3957 = vshrl.u32 %v3955, 16
  %v3958 = vand.u32 %v3954, 65535
  %v3959 = vshrl.u32 %v3954, 16
  %v3960 = vmul.u32 %v3956, %v3958
  %v3961 = vmul.u32 %v3956, %v3959
  %v3962 = vmul.u32 %v3957, %v3958
  %v3963 = vmul.u32 %v3957, %v3959
  %v3964 = vshll.u32 %v3961, 16
  %v3965 = vshrl.u32 %v3961, 16
  %v3966 = vshll.u32 %v3962, 16
  %v3967 = vshrl.u32 %v3962, 16
  %vm3968 = vc.u32 %v3960, %v3964
  %v3969 = vsel %vm3968, 1, 0
  %v3970 = vadd.s32 %v3960, %v3964
  %v3971 = vadd.s32 %v3963, %v3969
  %vm3972 = vc.u32 %v3970, %v3966
  %v3973 = vsel %vm3972, 1, 0
  %v3974 = vadd.s32 %v3970, %v3966
  %v3975 = vadd.s32 %v3971, %v3973
  %v3976 = vadd.s32 %v3975, %v3965
  %v3977 = vadd.s32 %v3976, %v3967
  %v3978 = vand.u32 %v3955, 65535
  %v3979 = vshrl.u32 %v3955, 16
  %v3980 = vand.u32 %v3950, 65535
  %v3981 = vshrl.u32 %v3950, 16
  %v3982 = vmul.u32 %v3978, %v3980
  %v3983 = vmul.u32 %v3978, %v3981
  %v3984 = vmul.u32 %v3979, %v3980
  %v3985 = vmul.u32 %v3979, %v3981
  %v3986 = vshll.u32 %v3983, 16
  %v3987 = vshrl.u32 %v3983, 16
  %v3988 = vshll.u32 %v3984, 16
  %v3989 = vshrl.u32 %v3984, 16
  %vm3990 = vc.u32 %v3982, %v3986
  %v3991 = vsel %vm3990, 1, 0
  %v3992 = vadd.s32 %v3982, %v3986
  %v3993 = vadd.s32 %v3985, %v3991
  %vm3994 = vc.u32 %v3992, %v3988
  %v3995 = vsel %vm3994, 1, 0
  %v3996 = vadd.s32 %v3992, %v3988
  %v3997 = vadd.s32 %v3993, %v3995
  %v3998 = vadd.s32 %v3997, %v3987
  %v3999 = vadd.s32 %v3998, %v3989
  %v4000 = vmul.u32 %v3955, %v3946
  %v4001 = vadd.s32 %v3977, %v3996
  %vm4002 = vc.u32 %v3977, %v3996
  %v4003 = vadd.s32 %v3999, 1
  %v4004 = vsel %vm4002, %v4003, %v3999
  %v4005 = vadd.s32 %v4000, %v4004
  %v4006 = vadd.s32 %v4005, 536870912
  %v4007 = vshrl.u32 %v4006, 30
  %v4008 = vshll.u32 %v4007, 30
  %v4009 = vsub.s32 %v4005, %v4008
  %vm4010 = vcmp.lt.s32.totalorder %v4009, 0
  %v4011 = vsub.s32 0, %v4009
  %v4012 = vsel %vm4010, %v4011, %v4009
  %v4013 = vclz %v4012
  %v4014 = vsub.s32 %v4013, 2
  %vm4015 = vcmp.gt.s32.totalorder 0, %v4014
  %v4016 = vsel %vm4015, 0, %v4014
  %v4017 = vsub.s32 32, %v4016
  %v4018 = vshll.u32 %v4009, %v4016
  %v4019 = vshrl.u32 %v4001, %v4017
  %v4020 = vor.u32 %v4018, %v4019
  %v4021 = vsub.s32 4294967266, %v4016
  %v4022 = vadd.s32 %v4021, 127
  %v4023 = vshll.u32 %v4022, 23
  %v4024 = vor.u32 4788187, %v4023
  %v4025 = vand.u32 2147483647, %v4024
  %v4027 = vcvt.s32.f32 %v4020
  %v4028 = vmul.f32 %v4027, %v4025
  %v4029 = vxor.u32 %v4028, 2147483648
  %v4030 = vsel %vm3909, %v4029, %v4028
  %v4031 = vsub.s32 4, %v4007
  %v4032 = vsel %vm3909, %v4031, %v4007
  %v4033 = vsel %vm3908, %v218, %v4030
  %v4034 = vsel %vm3908, 0, %v4032
  %v4035 = vmul.f32 %v4033, %v4033
  %v4036 = vmul.f32 %v4035, -0.001358992
  %v4037 = vadd.f32 %v4036, 0.041655596
  %v4038 = vmul.f32 %v4035, %v4037
  %v4039 = vadd.f32 %v4038, -0.4999988
  %v4040 = vmul.f32 %v4035, %v4039
  %v4041 = vadd.f32 1.0, %v4040
  %v4042 = vmul.f32 %v4033, %v4033
  %v4043 = vmul.f32 %v4042, -0.00019511016
  %v4044 = vadd.f32 %v4043, 0.008332121
  %v4045 = vmul.f32 %v4042, %v4044
  %v4046 = vadd.f32 %v4045, -0.16666654
  %v4047 = vmul.f32 %v4042, %v4046
  %v4048 = vadd.f32 %v4047, 1.0
  %v4049 = vmul.f32 %v4048, %v4033
  %vm4050 = vweird.f32 %v218
  %v4051 = vand.u32 %v4034, 3
  %vm4052 = vcmp.lt.s32.totalorder %v4051, 2
  %vm4053 = vcmp.eq.s32.totalorder %v4051, 0
  %v4054 = vxor.u32 %v4049, 2147483648
  %v4055 = vsel %vm4053, %v4041, %v4054
  %vm4056 = vcmp.eq.s32.totalorder %v4051, 2
  %v4057 = vxor.u32 %v4041, 2147483648
  %v4058 = vsel %vm4056, %v4057, %v4049
  %v4059 = vsel %vm4052, %v4055, %v4058
  %v4060 = vsel %vm4050, nan, %v4059
  %v4061 = vand.u32 2147483647, %v221
  %vm4062 = vcmp.le.f32.partialorder %v4061, 0.7853982
  %vm4063 = vcmp.lt.s32.totalorder %v221, 0
  %v4064 = vand.u32 %v221, 2139095040
  %v4065 = vshrl.u32 %v4064, 23
  %v4066 = vsub.s32 %v4065, 127
  %v4067 = vand.u32 2147483647, %v221
  %v4068 = vand.u32 %v4067, 8388607
  %v4069 = vor.u32 %v4068, 8388608
  %v4070 = vsub.s32 0, %v4069
  %v4071 = vadd.s32 %v4066, 1
  %vm4072 = vcmp.gt.s32.totalorder %v4071, 0
  %v4073 = vsel %vm4072, %v4071, 0
  %v4074 = vshrl.u32 %v4073, 5
  %v4075 = vand.u32 %v4073, 31
  %v4076 = vsub.s32 32, %v4075
  %v4077 = vshrl.u32 683565275, %v4076
  %v4078 = vshll.u32 683565275, %v4075
  %v4079 = vshrl.u32 2475754826, %v4076
  %v4080 = vor.u32 %v4078, %v4079
  %v4081 = vshll.u32 2475754826, %v4075
  %v4082 = vshrl.u32 2131351028, %v4076
  %v4083 = vor.u32 %v4081, %v4082
  %v4084 = vshll.u32 2131351028, %v4075
  %v4085 = vshrl.u32 2102212464, %v4076
  %v4086 = vor.u32 %v4084, %v4085
  %v4087 = vshll.u32 2102212464, %v4075
  %v4088 = vshrl.u32 920167782, %v4076
  %v4089 = vor.u32 %v4087, %v4088
  %v4090 = vshll.u32 920167782, %v4075
  %v4091 = vshrl.u32 1326507024, %v4076
  %v4092 = vor.u32 %v4090, %v4091
  %vm4093 = vcmp.lt.s32.totalorder %v4074, 1
  %vm4094 = vcmp.lt.s32.totalorder %v4074, 2
  %vm4095 = vcmp.lt.s32.totalorder %v4074, 3
  %vm4096 = vcmp.lt.s32.totalorder %v4074, 4
  %v4097 = vsel %vm4093, %v4077, %v4080
  %v4098 = vsel %vm4096, %v4086, 2102212464
  %v4099 = vsel %vm4095, %v4083, %v4098
  %v4100 = vsel %vm4094, %v4097, %v4099
  %v4101 = vsel %vm4093, %v4080, %v4083
  %v4102 = vsel %vm4096, %v4089, 920167782
  %v4103 = vsel %vm4095, %v4086, %v4102
  %v4104 = vsel %vm4094, %v4101, %v4103
  %v4105 = vsel %vm4093, %v4083, %v4086
  %v4106 = vsel %vm4096, %v4092, 1326507024
  %v4107 = vsel %vm4095, %v4089, %v4106
  %v4108 = vsel %vm4094, %v4105, %v4107
  %v4109 = vshll.u32 %v4069, 8
  %v4110 = vand.u32 %v4109, 65535
  %v4111 = vshrl.u32 %v4109, 16
  %v4112 = vand.u32 %v4108, 65535
  %v4113 = vshrl.u32 %v4108, 16
  %v4114 = vmul.u32 %v4110, %v4112
  %v4115 = vmul.u32 %v4110, %v4113
  %v4116 = vmul.u32 %v4111, %v4112
  %v4117 = vmul.u32 %v4111, %v4113
  %v4118 = vshll.u32 %v4115, 16
  %v4119 = vshrl.u32 %v4115, 16
  %v4120 = vshll.u32 %v4116, 16
  %v4121 = vshrl.u32 %v4116, 16
  %vm4122 = vc.u32 %v4114, %v4118
  %v4123 = vsel %vm4122, 1, 0
  %v4124 = vadd.s32 %v4114, %v4118
  %v4125 = vadd.s32 %v4117, %v4123
  %vm4126 = vc.u32 %v4124, %v4120
  %v4127 = vsel %vm4126, 1, 0
  %v4128 = vadd.s32 %v4124, %v4120
  %v4129 = vadd.s32 %v4125, %v4127
  %v4130 = vadd.s32 %v4129, %v4119
  %v4131 = vadd.s32 %v4130, %v4121
  %v4132 = vand.u32 %v4109, 65535
  %v4133 = vshrl.u32 %v4109, 16
  %v4134 = vand.u32 %v4104, 65535
  %v4135 = vshrl.u32 %v4104, 16
  %v4136 = vmul.u32 %v4132, %v4134
  %v4137 = vmul.u32 %v4132, %v4135
  %v4138 = vmul.u32 %v4133, %v4134
  %v4139 = vmul.u32 %v4133, %v4135
  %v4140 = vshll.u32 %v4137, 16
  %v4141 = vshrl.u32 %v4137, 16
  %v4142 = vshll.u32 %v4138, 16
  %v4143 = vshrl.u32 %v4138, 16
  %vm4144 = vc.u32 %v4136, %v4140
  %v4145 = vsel %vm4144, 1, 0
  %v4146 = vadd.s32 %v4136, %v4140
  %v4147 = vadd.s32 %v4139, %v4145
  %vm4148 = vc.u32 %v4146, %v4142
  %v4149 = vsel %vm4148, 1, 0
  %v4150 = vadd.s32 %v4146, %v4142
  %v4151 = vadd.s32 %v4147, %v4149
  %v4152 = vadd.s32 %v4151, %v4141
  %v4153 = vadd.s32 %v4152, %v4143
  %v4154 = vmul.u32 %v4109, %v4100
  %v4155 = vadd.s32 %v4131, %v4150
  %vm4156 = vc.u32 %v4131, %v4150
  %v4157 = vadd.s32 %v4153, 1
  %v4158 = vsel %vm4156, %v4157, %v4153
  %v4159 = vadd.s32 %v4154, %v4158
  %v4160 = vadd.s32 %v4159, 536870912
  %v4161 = vshrl.u32 %v4160, 30
  %v4162 = vshll.u32 %v4161, 30
  %v4163 = vsub.s32 %v4159, %v4162
  %vm4164 = vcmp.lt.s32.totalorder %v4163, 0
  %v4165 = vsub.s32 0, %v4163
  %v4166 = vsel %vm4164, %v4165, %v4163
  %v4167 = vclz %v4166
  %v4168 = vsub.s32 %v4167, 2
  %vm4169 = vcmp.gt.s32.totalorder 0, %v4168
  %v4170 = vsel %vm4169, 0, %v4168
  %v4171 = vsub.s32 32, %v4170
  %v4172 = vshll.u32 %v4163, %v4170
  %v4173 = vshrl.u32 %v4155, %v4171
  %v4174 = vor.u32 %v4172, %v4173
  %v4175 = vsub.s32 4294967266, %v4170
  %v4176 = vadd.s32 %v4175, 127
  %v4177 = vshll.u32 %v4176, 23
  %v4178 = vor.u32 4788187, %v4177
  %v4179 = vand.u32 2147483647, %v4178
  %v4181 = vcvt.s32.f32 %v4174
  %v4182 = vmul.f32 %v4181, %v4179
  %v4183 = vxor.u32 %v4182, 2147483648
  %v4184 = vsel %vm4063, %v4183, %v4182
  %v4185 = vsub.s32 4, %v4161
  %v4186 = vsel %vm4063, %v4185, %v4161
  %v4187 = vsel %vm4062, %v221, %v4184
  %v4188 = vsel %vm4062, 0, %v4186
  %v4189 = vmul.f32 %v4187, %v4187
  %v4190 = vmul.f32 %v4189, -0.001358992
  %v4191 = vadd.f32 %v4190, 0.041655596
  %v4192 = vmul.f32 %v4189, %v4191
  %v4193 = vadd.f32 %v4192, -0.4999988
  %v4194 = vmul.f32 %v4189, %v4193
  %v4195 = vadd.f32 1.0, %v4194
  %v4196 = vmul.f32 %v4187, %v4187
  %v4197 = vmul.f32 %v4196, -0.00019511016
  %v4198 = vadd.f32 %v4197, 0.008332121
  %v4199 = vmul.f32 %v4196, %v4198
  %v4200 = vadd.f32 %v4199, -0.16666654
  %v4201 = vmul.f32 %v4196, %v4200
  %v4202 = vadd.f32 %v4201, 1.0
  %v4203 = vmul.f32 %v4202, %v4187
  %vm4204 = vweird.f32 %v221
  %v4205 = vand.u32 %v4188, 3
  %vm4206 = vcmp.lt.s32.totalorder %v4205, 2
  %vm4207 = vcmp.eq.s32.totalorder %v4205, 0
  %v4208 = vxor.u32 %v4203, 2147483648
  %v4209 = vsel %vm4207, %v4195, %v4208
  %vm4210 = vcmp.eq.s32.totalorder %v4205, 2
  %v4211 = vxor.u32 %v4195, 2147483648
  %v4212 = vsel %vm4210, %v4211, %v4203
  %v4213 = vsel %vm4206, %v4209, %v4212
  %v4214 = vsel %vm4204, nan, %v4213
  %v4215 = vmul.f32 %v316, %v518
  %v4216 = vmul.f32 %v318, %v672
  %v4217 = vmul.f32 %v320, %v826
  %v4218 = vmul.f32 %v322, %v980
  %v4219 = vmul.f32 %v324, %v1134
  %v4220 = vmul.f32 %v326, %v1288
  %v4221 = vmul.f32 %v328, %v1442
  %v4222 = vmul.f32 %v330, %v1596
  %v4223 = vmul.f32 %v332, %v1750
  %v4224 = vmul.f32 %v334, %v1904
  %v4225 = vmul.f32 %v336, %v2058
  %v4226 = vmul.f32 %v338, %v2212
  %v4227 = vmul.f32 %v340, %v2366
  %v4228 = vmul.f32 %v342, %v2520
  %v4229 = vmul.f32 %v344, %v2674
  %v4230 = vmul.f32 %v346, %v2828
  %v4231 = vmul.f32 %v348, %v2982
  %v4232 = vmul.f32 %v350, %v3136
  %v4233 = vmul.f32 %v352, %v3290
  %v4234 = vmul.f32 %v354, %v3444
  %v4235 = vmul.f32 %v356, %v3598
  %v4236 = vmul.f32 %v358, %v3752
  %v4237 = vmul.f32 %v360, %v3906
  %v4238 = vmul.f32 %v362, %v4060
  %v4239 = vmul.f32 %v364, %v4214
  %vm4240 = vcmask 523264
  %4241 = vst.msk [vmem:[%s3] sm:$0xff] %vm4240, %v4215
  %4242 = vst.msk [vmem:[%s3 + $0x8] sm:$0xff] %vm4240, %v4216
  %4243 = vst.msk [vmem:[%s3 + $0x10] sm:$0xff] %vm4240, %v4217
  %4244 = vst.msk [vmem:[%s3 + $0x18] sm:$0xff] %vm4240, %v4218
  %4245 = vst.msk [vmem:[%s3 + $0x20] sm:$0xff] %vm4240, %v4219
  %4246 = vst.msk [vmem:[%s3 + $0x28] sm:$0xff] %vm4240, %v4220
  %4247 = vst.msk [vmem:[%s3 + $0x30] sm:$0xff] %vm4240, %v4221
  %4248 = vst.msk [vmem:[%s3 + $0x38] sm:$0xff] %vm4240, %v4222
  %4249 = vst.msk [vmem:[%s3 + $0x40] sm:$0xff] %vm4240, %v4223
  %4250 = vst.msk [vmem:[%s3 + $0x48] sm:$0xff] %vm4240, %v4224
  %4251 = vst.msk [vmem:[%s3 + $0x50] sm:$0xff] %vm4240, %v4225
  %4252 = vst.msk [vmem:[%s3 + $0x58] sm:$0xff] %vm4240, %v4226
  %4253 = vst.msk [vmem:[%s3 + $0x60] sm:$0xff] %vm4240, %v4227
  %4254 = vst.msk [vmem:[%s3 + $0x68] sm:$0xff] %vm4240, %v4228
  %4255 = vst.msk [vmem:[%s3 + $0x70] sm:$0xff] %vm4240, %v4229
  %4256 = vst.msk [vmem:[%s3 + $0x78] sm:$0xff] %vm4240, %v4230
  %4257 = vst.msk [vmem:[%s3 + $0x80] sm:$0xff] %vm4240, %v4231
  %4258 = vst.msk [vmem:[%s3 + $0x88] sm:$0xff] %vm4240, %v4232
  %4259 = vst.msk [vmem:[%s3 + $0x90] sm:$0xff] %vm4240, %v4233
  %4260 = vst.msk [vmem:[%s3 + $0x98] sm:$0xff] %vm4240, %v4234
  %4261 = vst.msk [vmem:[%s3 + $0xa0] sm:$0xff] %vm4240, %v4235
  %4262 = vst.msk [vmem:[%s3 + $0xa8] sm:$0xff] %vm4240, %v4236
  %4263 = vst.msk [vmem:[%s3 + $0xb0] sm:$0xff] %vm4240, %v4237
  %4264 = vst.msk [vmem:[%s3 + $0xb8] sm:$0xff] %vm4240, %v4238
  %4265 = vst.msk [vmem:[%s3 + $0xc0] sm:$0xff] %vm4240, %v4239
  // Predicated region
  $region14: #{tpu_custom_call.1} parent=0 // pred_check
    _
  $region15: #{tpu_custom_call.1} parent=0 // pred_check_branch
    %4267 = sbr.rel (0) target = $region17
  $region16: #{tpu_custom_call.1} parent=0 // pred_region
    _
  $region17: #{tpu_custom_call.1} parent=0 // pred_fallthru
    _
  // Predicated region
  $region18: #{tpu_custom_call.1} parent=0 // pred_check
    _
  $region19: #{tpu_custom_call.1} parent=0 // pred_check_branch
    %4269 = sbr.rel (0) target = $region21
  $region20: #{tpu_custom_call.1} parent=0 // pred_region
    _
  $region21: #{tpu_custom_call.1} parent=0 // pred_fallthru
    _

</llo_original>
